<compile_context>
chip_gen: v7x
topology: tpu7x:2x2x1
jax: 0.10.0
libtpu: 0.0.40
codegen_flags: <defaults>
</compile_context>

<pallas_src>
import jax
import jax.numpy as jnp
import numpy as np
from jax.experimental import pallas as pl
from jax.experimental.pallas import tpu as pltpu

NEG_SLOPE = 0.01          # F.leaky_relu default negative slope
HIDDEN_DIM = 32
OUTPUT_DIM = 8
NUM_LAYERS = 2

TYPE_ORDER = ["host", "spout", "filter", "join", "aggregation",
              "windowedAggregation", "sink"]
NUM_TYPES = len(TYPE_ORDER)
NODES_PER_TYPE = 8
NUM_NODES = {t: NODES_PER_TYPE for t in TYPE_ORDER}
FEAT_DIMS = {"host": 16, "spout": 8, "filter": 8, "join": 16,
             "aggregation": 8, "windowedAggregation": 16, "sink": 8}
MAX_FEAT = 16

TOTAL_NODES = NUM_TYPES * NODES_PER_TYPE          # 56 real rows
PAD_NODES = 64                                    # padded slab rows (mult of 8)
OFF = {t: i * NODES_PER_TYPE for i, t in enumerate(TYPE_ORDER)}
SINK_OFF = OFF["sink"]
ETYPES = ("placement", "edge")


def _leaky(x):
    return jnp.where(x > 0, x, NEG_SLOPE * x)


# ------------------------------ fused kernel -------------------------------

def sage_fused_kernel(
    feat_ref,                         # (PAD_NODES, MAX_FEAT)  padded features
    w1_ref, b1_ref, w2_ref, b2_ref,   # (T,MAX_FEAT,H) (T,1,H) (T,H,H) (T,1,H)
    a_p_ref, a_e_ref,                 # (PAD, PAD)  block-normalized adjacency / etype
    cnt_p_ref, cnt_e_ref,             # (PAD, 1)    bias replication counts / etype
    wc_p_ref, bc_p_ref,               # (L,H,H) (L,1,H)   hidden-layer 'placement'
    wc_e_ref, bc_e_ref,               # (L,H,H) (L,1,H)   hidden-layer 'edge'
    wf_p_ref, bf_p_ref,               # (H,O)  (1,O)      final-layer 'placement'
    wf_e_ref, bf_e_ref,               # (H,O)  (1,O)      final-layer 'edge'
    out_ref,                          # (NODES_PER_TYPE, O)   sink output
    h_ref,                            # scratch (PAD, H) f32  hidden slab (VMEM)
):
    # --- per-node-type encoders (2-layer MLP) written into the hidden slab ---
    for t in range(NUM_TYPES):
        r = t * NODES_PER_TYPE
        x = feat_ref[pl.ds(r, NODES_PER_TYPE), :]
        z = jnp.dot(x, w1_ref[t], preferred_element_type=jnp.float32) + b1_ref[t]
        z = _leaky(z)
        z = jnp.dot(z, w2_ref[t], preferred_element_type=jnp.float32) + b2_ref[t]
        h_ref[pl.ds(r, NODES_PER_TYPE), :] = z
    # zero the padding rows so A @ h is well-defined (A has zero cols there).
    h_ref[pl.ds(TOTAL_NODES, PAD_NODES - TOTAL_NODES), :] = jnp.zeros(
        (PAD_NODES - TOTAL_NODES, HIDDEN_DIM), jnp.float32)

    a_p = a_p_ref[...]
    a_e = a_e_ref[...]
    cnt_p = cnt_p_ref[...]
    cnt_e = cnt_e_ref[...]

    # --- hidden HeteroGraphConv layers: sum-aggregate + leaky_relu epilogue ---
    for l in range(NUM_LAYERS):
        h = h_ref[...]
        xw_p = jnp.dot(h, wc_p_ref[l], preferred_element_type=jnp.float32)
        xw_e = jnp.dot(h, wc_e_ref[l], preferred_element_type=jnp.float32)
        agg = (jnp.dot(a_p, xw_p, preferred_element_type=jnp.float32)
               + jnp.dot(a_e, xw_e, preferred_element_type=jnp.float32)
               + cnt_p * bc_p_ref[l] + cnt_e * bc_e_ref[l])
        h_ref[...] = _leaky(agg)

    # --- final HeteroGraphConv (hidden -> output); store sink rows only ------
    h = h_ref[...]
    xw_p = jnp.dot(h, wf_p_ref[...], preferred_element_type=jnp.float32)
    xw_e = jnp.dot(h, wf_e_ref[...], preferred_element_type=jnp.float32)
    out_full = (jnp.dot(a_p, xw_p, preferred_element_type=jnp.float32)
                + jnp.dot(a_e, xw_e, preferred_element_type=jnp.float32)
                + cnt_p * bf_p_ref[...] + cnt_e * bf_e_ref[...])
    out_ref[...] = out_full[SINK_OFF:SINK_OFF + NODES_PER_TYPE, :]


_NUM_INPUTS = 17


def _vmem_spec():
    return pl.BlockSpec(memory_space=pltpu.MemorySpace.VMEM)


@jax.jit
def sage_forward_fused(feat_slab, w1, b1, w2, b2, a_p, a_e, cnt_p, cnt_e,
                       wc_p, bc_p, wc_e, bc_e, wf_p, bf_p, wf_e, bf_e):
    return pl.pallas_call(
        sage_fused_kernel,
        in_specs=[_vmem_spec() for _ in range(_NUM_INPUTS)],
        out_specs=_vmem_spec(),
        out_shape=jax.ShapeDtypeStruct((NODES_PER_TYPE, OUTPUT_DIM), jnp.float32),
        scratch_shapes=[pltpu.VMEM((PAD_NODES, HIDDEN_DIM), jnp.float32)],
    )(feat_slab, w1, b1, w2, b2, a_p, a_e, cnt_p, cnt_e,
      wc_p, bc_p, wc_e, bc_e, wf_p, bf_p, wf_e, bf_e)


# --------------------------- graph construction ----------------------------

def _normalize_adj(a):
    # DGL norm='both': D_in^{-1/2} A D_out^{-1/2}; zero-degree norm -> 0.
    out_deg = a.sum(axis=0)   # per source node
    in_deg = a.sum(axis=1)    # per destination node
    dsrc = np.where(out_deg > 0, out_deg, 1.0) ** -0.5
    dsrc = np.where(out_deg > 0, dsrc, 0.0)
    ddst = np.where(in_deg > 0, in_deg, 1.0) ** -0.5
    ddst = np.where(in_deg > 0, ddst, 0.0)
    return (a * ddst[:, None] * dsrc[None, :]).astype(np.float32)


def build_relations():
    """Canonical relations -> per-relation normalized dense adjacency (n_dst, n_src)."""
    def adj(n_dst, n_src, edges):
        a = np.zeros((n_dst, n_src), np.float32)
        for s, d in edges:
            a[d, s] = 1.0
        return _normalize_adj(a)

    rels = []
    op_types = [t for t in TYPE_ORDER if t != "host"]
    # 'placement': host <-> operator
    for t in op_types:
        n = NUM_NODES[t]
        e_fwd = [(i % NUM_NODES["host"], i) for i in range(n)]      # host -> op
        e_rev = [(i, i % NUM_NODES["host"]) for i in range(n)]      # op  -> host
        rels.append((("host", "placement", t), adj(n, NUM_NODES["host"], e_fwd)))
        rels.append(((t, "placement", "host"), adj(NUM_NODES["host"], n, e_rev)))
    # 'edge': streaming dataflow spout -> ... -> sink
    chain = ["spout", "filter", "join", "aggregation", "windowedAggregation", "sink"]
    for src, dst in zip(chain[:-1], chain[1:]):
        ns, nd = NUM_NODES[src], NUM_NODES[dst]
        edges = [(i, i % nd) for i in range(ns)] + [(i, (i + 1) % nd) for i in range(ns)]
        rels.append(((src, "edge", dst), adj(nd, ns, edges)))
    return rels


def build_block_graph(rels):
    """Assemble per-etype block adjacency (PAD, PAD) and bias-count columns (PAD, 1)."""
    A = {e: np.zeros((PAD_NODES, PAD_NODES), np.float32) for e in ETYPES}
    cnt = {e: np.zeros((PAD_NODES, 1), np.float32) for e in ETYPES}
    for (s, e, d), a in rels:
        ro, co = OFF[d], OFF[s]
        A[e][ro:ro + a.shape[0], co:co + a.shape[1]] = a
        cnt[e][ro:ro + a.shape[0], 0] += 1.0
    return A, cnt


# ------------------------------ parameters ---------------------------------

def glorot(key, shape):
    fan_in, fan_out = shape
    lim = float(np.sqrt(6.0 / (fan_in + fan_out)))
    return jax.random.uniform(key, shape, jnp.float32, -lim, lim)


def init_params(key):
    params = {"enc": {}, "convs": [], "final": {}}
    for nt in TYPE_ORDER:
        key, k1, k2 = jax.random.split(key, 3)
        params["enc"][nt] = {
            "w1": glorot(k1, (FEAT_DIMS[nt], HIDDEN_DIM)),
            "b1": jnp.zeros((1, HIDDEN_DIM), jnp.float32),
            "w2": glorot(k2, (HIDDEN_DIM, HIDDEN_DIM)),
            "b2": jnp.zeros((1, HIDDEN_DIM), jnp.float32),
        }
    for _ in range(NUM_LAYERS):
        layer = {}
        for rel in ETYPES:
            key, k = jax.random.split(key)
            layer[rel] = (glorot(k, (HIDDEN_DIM, HIDDEN_DIM)),
                          jnp.zeros((1, HIDDEN_DIM), jnp.float32))
        params["convs"].append(layer)
    for rel in ETYPES:
        key, k = jax.random.split(key)
        params["final"][rel] = (glorot(k, (HIDDEN_DIM, OUTPUT_DIM)),
                                jnp.zeros((1, OUTPUT_DIM), jnp.float32))
    return params


def pack_params(params):
    w1 = np.zeros((NUM_TYPES, MAX_FEAT, HIDDEN_DIM), np.float32)
    b1 = np.zeros((NUM_TYPES, 1, HIDDEN_DIM), np.float32)
    w2 = np.zeros((NUM_TYPES, HIDDEN_DIM, HIDDEN_DIM), np.float32)
    b2 = np.zeros((NUM_TYPES, 1, HIDDEN_DIM), np.float32)
    for i, nt in enumerate(TYPE_ORDER):
        p = params["enc"][nt]
        fd = FEAT_DIMS[nt]
        w1[i, :fd, :] = np.asarray(p["w1"])
        b1[i] = np.asarray(p["b1"])
        w2[i] = np.asarray(p["w2"])
        b2[i] = np.asarray(p["b2"])
    wc_p = np.stack([np.asarray(l["placement"][0]) for l in params["convs"]])
    bc_p = np.stack([np.asarray(l["placement"][1]) for l in params["convs"]])
    wc_e = np.stack([np.asarray(l["edge"][0]) for l in params["convs"]])
    bc_e = np.stack([np.asarray(l["edge"][1]) for l in params["convs"]])
    wf_p, bf_p = (np.asarray(a) for a in params["final"]["placement"])
    wf_e, bf_e = (np.asarray(a) for a in params["final"]["edge"])
    return tuple(jnp.asarray(a) for a in
                 (w1, b1, w2, b2, wc_p, bc_p, wc_e, bc_e, wf_p, bf_p, wf_e, bf_e))


def pack_features(features):
    slab = np.zeros((PAD_NODES, MAX_FEAT), np.float32)
    for nt in TYPE_ORDER:
        slab[OFF[nt]:OFF[nt] + NUM_NODES[nt], :FEAT_DIMS[nt]] = np.asarray(features[nt])
    return jnp.asarray(slab)


# --------------------- pure-JAX reference (for checking) -------------------

def reference_forward(params, rels, features):
    h = {}
    for nt, x in features.items():
        p = params["enc"][nt]
        z = _leaky(x @ p["w1"] + p["b1"])
        h[nt] = z @ p["w2"] + p["b2"]

    def hetero(h, layer):
        out = {}
        for (s, e, d), a in rels:
            if s not in h:
                continue
            w, b = layer[e]
            c = jnp.asarray(a) @ h[s] @ w + b
            out[d] = c if d not in out else out[d] + c
        return out

    for layer in params["convs"]:
        h = hetero(h, layer)
        h = {k: _leaky(v) for k, v in h.items()}
    h = hetero(h, params["final"])
    return h["sink"]


# ---------------------------------- main ------------------------------------

if __name__ == "__main__":
    root = jax.random.PRNGKey(0)
    pkey, fkey = jax.random.split(root)

    params = init_params(pkey)
    rels = build_relations()
    A, cnt = build_block_graph(rels)

    # deterministic example per-node-type input features
    features = {}
    for nt in TYPE_ORDER:
        fkey, k = jax.random.split(fkey)
        features[nt] = jax.random.normal(k, (NUM_NODES[nt], FEAT_DIMS[nt]), jnp.float32)

    (w1, b1, w2, b2, wc_p, bc_p, wc_e, bc_e,
     wf_p, bf_p, wf_e, bf_e) = pack_params(params)
    feat_slab = pack_features(features)
    a_p, a_e = jnp.asarray(A["placement"]), jnp.asarray(A["edge"])
    cnt_p, cnt_e = jnp.asarray(cnt["placement"]), jnp.asarray(cnt["edge"])

    out = sage_forward_fused(feat_slab, w1, b1, w2, b2, a_p, a_e, cnt_p, cnt_e,
                             wc_p, bc_p, wc_e, bc_e, wf_p, bf_p, wf_e, bf_e)
    out = jax.block_until_ready(out)

    assert out.shape == (NUM_NODES["sink"], OUTPUT_DIM)
    assert jnp.all(jnp.isfinite(out))

    # correctness check against an unfused pure-JAX reference
    ref = jax.block_until_ready(reference_forward(params, rels, features))
    np.testing.assert_allclose(np.asarray(out), np.asarray(ref), rtol=1e-3, atol=1e-3)

    print("KERNEL_OK")
</pallas_src>

<mosaic_0001>
module attributes {stable_mosaic.version = 11 : i64} {
  func.func @sage_fused_kernel(%arg0: memref<64x16xf32, #tpu.memory_space<vmem>>, %arg1: memref<7x16x32xf32, #tpu.memory_space<vmem>>, %arg2: memref<7x1x32xf32, #tpu.memory_space<vmem>>, %arg3: memref<7x32x32xf32, #tpu.memory_space<vmem>>, %arg4: memref<7x1x32xf32, #tpu.memory_space<vmem>>, %arg5: memref<64x64xf32, #tpu.memory_space<vmem>>, %arg6: memref<64x64xf32, #tpu.memory_space<vmem>>, %arg7: memref<64x1xf32, #tpu.memory_space<vmem>>, %arg8: memref<64x1xf32, #tpu.memory_space<vmem>>, %arg9: memref<2x32x32xf32, #tpu.memory_space<vmem>>, %arg10: memref<2x1x32xf32, #tpu.memory_space<vmem>>, %arg11: memref<2x32x32xf32, #tpu.memory_space<vmem>>, %arg12: memref<2x1x32xf32, #tpu.memory_space<vmem>>, %arg13: memref<32x8xf32, #tpu.memory_space<vmem>>, %arg14: memref<1x8xf32, #tpu.memory_space<vmem>>, %arg15: memref<32x8xf32, #tpu.memory_space<vmem>>, %arg16: memref<1x8xf32, #tpu.memory_space<vmem>>, %arg17: memref<8x8xf32, #tpu.memory_space<vmem>>, %arg18: memref<64x32xf32, #tpu.memory_space<vmem>>) attributes {dimension_semantics = [], scalar_prefetch = 0 : i64, scratch_operands = 1 : i64, tpu.core_type = #tpu.core_type<tc>} {
    %c0 = arith.constant 0 : index
    %c0_0 = arith.constant 0 : index
    %0 = vector.load %arg0[%c0, %c0_0] : memref<64x16xf32, #tpu.memory_space<vmem>>, vector<8x16xf32>
    %c0_1 = arith.constant 0 : index
    %c0_2 = arith.constant 0 : index
    %c0_3 = arith.constant 0 : index
    %1 = vector.load %arg1[%c0_1, %c0_2, %c0_3] : memref<7x16x32xf32, #tpu.memory_space<vmem>>, vector<1x16x32xf32>
    %2 = vector.shape_cast %1 : vector<1x16x32xf32> to vector<16x32xf32>
    %cst = arith.constant dense<0.000000e+00> : vector<8x32xf32>
    %3 = tpu.matmul %0, %2, %cst {dimension_numbers = #tpu.dot_dimension_numbers<[1], [0], [0], [1], [0, 0, 1, 1], [], []>} : vector<8x16xf32>, vector<16x32xf32>, vector<8x32xf32> -> vector<8x32xf32>
    %c0_4 = arith.constant 0 : index
    %c0_5 = arith.constant 0 : index
    %c0_6 = arith.constant 0 : index
    %4 = vector.load %arg2[%c0_4, %c0_5, %c0_6] : memref<7x1x32xf32, #tpu.memory_space<vmem>>, vector<1x1x32xf32>
    %5 = vector.shape_cast %4 : vector<1x1x32xf32> to vector<1x32xf32>
    %6 = vector.broadcast %5 : vector<1x32xf32> to vector<8x32xf32>
    %7 = arith.addf %3, %6 : vector<8x32xf32>
    %cst_7 = arith.constant 0.000000e+00 : f32
    %8 = vector.broadcast %cst_7 : f32 to vector<8x32xf32>
    %9 = arith.cmpf ogt, %7, %8 : vector<8x32xf32>
    %cst_8 = arith.constant 0.00999999977 : f32
    %10 = vector.broadcast %cst_8 : f32 to vector<8x32xf32>
    %11 = arith.mulf %10, %7 : vector<8x32xf32>
    %12 = arith.select %9, %7, %11 : vector<8x32xi1>, vector<8x32xf32>
    %c0_9 = arith.constant 0 : index
    %c0_10 = arith.constant 0 : index
    %c0_11 = arith.constant 0 : index
    %13 = vector.load %arg3[%c0_9, %c0_10, %c0_11] : memref<7x32x32xf32, #tpu.memory_space<vmem>>, vector<1x32x32xf32>
    %14 = vector.shape_cast %13 : vector<1x32x32xf32> to vector<32x32xf32>
    %cst_12 = arith.constant dense<0.000000e+00> : vector<8x32xf32>
    %15 = tpu.matmul %12, %14, %cst_12 {dimension_numbers = #tpu.dot_dimension_numbers<[1], [0], [0], [1], [0, 0, 1, 1], [], []>} : vector<8x32xf32>, vector<32x32xf32>, vector<8x32xf32> -> vector<8x32xf32>
    %c0_13 = arith.constant 0 : index
    %c0_14 = arith.constant 0 : index
    %c0_15 = arith.constant 0 : index
    %16 = vector.load %arg4[%c0_13, %c0_14, %c0_15] : memref<7x1x32xf32, #tpu.memory_space<vmem>>, vector<1x1x32xf32>
    %17 = vector.shape_cast %16 : vector<1x1x32xf32> to vector<1x32xf32>
    %18 = vector.broadcast %17 : vector<1x32xf32> to vector<8x32xf32>
    %19 = arith.addf %15, %18 : vector<8x32xf32>
    %c0_16 = arith.constant 0 : index
    %c0_17 = arith.constant 0 : index
    %20 = vector.load %arg18[%c0_16, %c0_17] : memref<64x32xf32, #tpu.memory_space<vmem>>, vector<8x32xf32>
    tpu.vector_store %arg18[%c0_16, %c0_17], %19 {strides = array<i32>} : memref<64x32xf32, #tpu.memory_space<vmem>>, vector<8x32xf32>,
    %c8 = arith.constant 8 : index
    %c0_18 = arith.constant 0 : index
    %21 = vector.load %arg0[%c8, %c0_18] : memref<64x16xf32, #tpu.memory_space<vmem>>, vector<8x16xf32>
    %c1 = arith.constant 1 : index
    %c0_19 = arith.constant 0 : index
    %c0_20 = arith.constant 0 : index
    %22 = vector.load %arg1[%c1, %c0_19, %c0_20] : memref<7x16x32xf32, #tpu.memory_space<vmem>>, vector<1x16x32xf32>
    %23 = vector.shape_cast %22 : vector<1x16x32xf32> to vector<16x32xf32>
    %cst_21 = arith.constant dense<0.000000e+00> : vector<8x32xf32>
    %24 = tpu.matmul %21, %23, %cst_21 {dimension_numbers = #tpu.dot_dimension_numbers<[1], [0], [0], [1], [0, 0, 1, 1], [], []>} : vector<8x16xf32>, vector<16x32xf32>, vector<8x32xf32> -> vector<8x32xf32>
    %c1_22 = arith.constant 1 : index
    %c0_23 = arith.constant 0 : index
    %c0_24 = arith.constant 0 : index
    %25 = vector.load %arg2[%c1_22, %c0_23, %c0_24] : memref<7x1x32xf32, #tpu.memory_space<vmem>>, vector<1x1x32xf32>
    %26 = vector.shape_cast %25 : vector<1x1x32xf32> to vector<1x32xf32>
    %27 = vector.broadcast %26 : vector<1x32xf32> to vector<8x32xf32>
    %28 = arith.addf %24, %27 : vector<8x32xf32>
    %cst_25 = arith.constant 0.000000e+00 : f32
    %29 = vector.broadcast %cst_25 : f32 to vector<8x32xf32>
    %30 = arith.cmpf ogt, %28, %29 : vector<8x32xf32>
    %cst_26 = arith.constant 0.00999999977 : f32
    %31 = vector.broadcast %cst_26 : f32 to vector<8x32xf32>
    %32 = arith.mulf %31, %28 : vector<8x32xf32>
    %33 = arith.select %30, %28, %32 : vector<8x32xi1>, vector<8x32xf32>
    %c1_27 = arith.constant 1 : index
    %c0_28 = arith.constant 0 : index
    %c0_29 = arith.constant 0 : index
    %34 = vector.load %arg3[%c1_27, %c0_28, %c0_29] : memref<7x32x32xf32, #tpu.memory_space<vmem>>, vector<1x32x32xf32>
    %35 = vector.shape_cast %34 : vector<1x32x32xf32> to vector<32x32xf32>
    %cst_30 = arith.constant dense<0.000000e+00> : vector<8x32xf32>
    %36 = tpu.matmul %33, %35, %cst_30 {dimension_numbers = #tpu.dot_dimension_numbers<[1], [0], [0], [1], [0, 0, 1, 1], [], []>} : vector<8x32xf32>, vector<32x32xf32>, vector<8x32xf32> -> vector<8x32xf32>
    %c1_31 = arith.constant 1 : index
    %c0_32 = arith.constant 0 : index
    %c0_33 = arith.constant 0 : index
    %37 = vector.load %arg4[%c1_31, %c0_32, %c0_33] : memref<7x1x32xf32, #tpu.memory_space<vmem>>, vector<1x1x32xf32>
    %38 = vector.shape_cast %37 : vector<1x1x32xf32> to vector<1x32xf32>
    %39 = vector.broadcast %38 : vector<1x32xf32> to vector<8x32xf32>
    %40 = arith.addf %36, %39 : vector<8x32xf32>
    %c8_34 = arith.constant 8 : index
    %c0_35 = arith.constant 0 : index
    %41 = vector.load %arg18[%c8_34, %c0_35] : memref<64x32xf32, #tpu.memory_space<vmem>>, vector<8x32xf32>
    tpu.vector_store %arg18[%c8_34, %c0_35], %40 {strides = array<i32>} : memref<64x32xf32, #tpu.memory_space<vmem>>, vector<8x32xf32>,
    %c16 = arith.constant 16 : index
    %c0_36 = arith.constant 0 : index
    %42 = vector.load %arg0[%c16, %c0_36] : memref<64x16xf32, #tpu.memory_space<vmem>>, vector<8x16xf32>
    %c2 = arith.constant 2 : index
    %c0_37 = arith.constant 0 : index
    %c0_38 = arith.constant 0 : index
    %43 = vector.load %arg1[%c2, %c0_37, %c0_38] : memref<7x16x32xf32, #tpu.memory_space<vmem>>, vector<1x16x32xf32>
    %44 = vector.shape_cast %43 : vector<1x16x32xf32> to vector<16x32xf32>
    %cst_39 = arith.constant dense<0.000000e+00> : vector<8x32xf32>
    %45 = tpu.matmul %42, %44, %cst_39 {dimension_numbers = #tpu.dot_dimension_numbers<[1], [0], [0], [1], [0, 0, 1, 1], [], []>} : vector<8x16xf32>, vector<16x32xf32>, vector<8x32xf32> -> vector<8x32xf32>
    %c2_40 = arith.constant 2 : index
    %c0_41 = arith.constant 0 : index
    %c0_42 = arith.constant 0 : index
    %46 = vector.load %arg2[%c2_40, %c0_41, %c0_42] : memref<7x1x32xf32, #tpu.memory_space<vmem>>, vector<1x1x32xf32>
    %47 = vector.shape_cast %46 : vector<1x1x32xf32> to vector<1x32xf32>
    %48 = vector.broadcast %47 : vector<1x32xf32> to vector<8x32xf32>
    %49 = arith.addf %45, %48 : vector<8x32xf32>
    %cst_43 = arith.constant 0.000000e+00 : f32
    %50 = vector.broadcast %cst_43 : f32 to vector<8x32xf32>
    %51 = arith.cmpf ogt, %49, %50 : vector<8x32xf32>
    %cst_44 = arith.constant 0.00999999977 : f32
    %52 = vector.broadcast %cst_44 : f32 to vector<8x32xf32>
    %53 = arith.mulf %52, %49 : vector<8x32xf32>
    %54 = arith.select %51, %49, %53 : vector<8x32xi1>, vector<8x32xf32>
    %c2_45 = arith.constant 2 : index
    %c0_46 = arith.constant 0 : index
    %c0_47 = arith.constant 0 : index
    %55 = vector.load %arg3[%c2_45, %c0_46, %c0_47] : memref<7x32x32xf32, #tpu.memory_space<vmem>>, vector<1x32x32xf32>
    %56 = vector.shape_cast %55 : vector<1x32x32xf32> to vector<32x32xf32>
    %cst_48 = arith.constant dense<0.000000e+00> : vector<8x32xf32>
    %57 = tpu.matmul %54, %56, %cst_48 {dimension_numbers = #tpu.dot_dimension_numbers<[1], [0], [0], [1], [0, 0, 1, 1], [], []>} : vector<8x32xf32>, vector<32x32xf32>, vector<8x32xf32> -> vector<8x32xf32>
    %c2_49 = arith.constant 2 : index
    %c0_50 = arith.constant 0 : index
    %c0_51 = arith.constant 0 : index
    %58 = vector.load %arg4[%c2_49, %c0_50, %c0_51] : memref<7x1x32xf32, #tpu.memory_space<vmem>>, vector<1x1x32xf32>
    %59 = vector.shape_cast %58 : vector<1x1x32xf32> to vector<1x32xf32>
    %60 = vector.broadcast %59 : vector<1x32xf32> to vector<8x32xf32>
    %61 = arith.addf %57, %60 : vector<8x32xf32>
    %c16_52 = arith.constant 16 : index
    %c0_53 = arith.constant 0 : index
    %62 = vector.load %arg18[%c16_52, %c0_53] : memref<64x32xf32, #tpu.memory_space<vmem>>, vector<8x32xf32>
    tpu.vector_store %arg18[%c16_52, %c0_53], %61 {strides = array<i32>} : memref<64x32xf32, #tpu.memory_space<vmem>>, vector<8x32xf32>,
    %c24 = arith.constant 24 : index
    %c0_54 = arith.constant 0 : index
    %63 = vector.load %arg0[%c24, %c0_54] : memref<64x16xf32, #tpu.memory_space<vmem>>, vector<8x16xf32>
    %c3 = arith.constant 3 : index
    %c0_55 = arith.constant 0 : index
    %c0_56 = arith.constant 0 : index
    %64 = vector.load %arg1[%c3, %c0_55, %c0_56] : memref<7x16x32xf32, #tpu.memory_space<vmem>>, vector<1x16x32xf32>
    %65 = vector.shape_cast %64 : vector<1x16x32xf32> to vector<16x32xf32>
    %cst_57 = arith.constant dense<0.000000e+00> : vector<8x32xf32>
    %66 = tpu.matmul %63, %65, %cst_57 {dimension_numbers = #tpu.dot_dimension_numbers<[1], [0], [0], [1], [0, 0, 1, 1], [], []>} : vector<8x16xf32>, vector<16x32xf32>, vector<8x32xf32> -> vector<8x32xf32>
    %c3_58 = arith.constant 3 : index
    %c0_59 = arith.constant 0 : index
    %c0_60 = arith.constant 0 : index
    %67 = vector.load %arg2[%c3_58, %c0_59, %c0_60] : memref<7x1x32xf32, #tpu.memory_space<vmem>>, vector<1x1x32xf32>
    %68 = vector.shape_cast %67 : vector<1x1x32xf32> to vector<1x32xf32>
    %69 = vector.broadcast %68 : vector<1x32xf32> to vector<8x32xf32>
    %70 = arith.addf %66, %69 : vector<8x32xf32>
    %cst_61 = arith.constant 0.000000e+00 : f32
    %71 = vector.broadcast %cst_61 : f32 to vector<8x32xf32>
    %72 = arith.cmpf ogt, %70, %71 : vector<8x32xf32>
    %cst_62 = arith.constant 0.00999999977 : f32
    %73 = vector.broadcast %cst_62 : f32 to vector<8x32xf32>
    %74 = arith.mulf %73, %70 : vector<8x32xf32>
    %75 = arith.select %72, %70, %74 : vector<8x32xi1>, vector<8x32xf32>
    %c3_63 = arith.constant 3 : index
    %c0_64 = arith.constant 0 : index
    %c0_65 = arith.constant 0 : index
    %76 = vector.load %arg3[%c3_63, %c0_64, %c0_65] : memref<7x32x32xf32, #tpu.memory_space<vmem>>, vector<1x32x32xf32>
    %77 = vector.shape_cast %76 : vector<1x32x32xf32> to vector<32x32xf32>
    %cst_66 = arith.constant dense<0.000000e+00> : vector<8x32xf32>
    %78 = tpu.matmul %75, %77, %cst_66 {dimension_numbers = #tpu.dot_dimension_numbers<[1], [0], [0], [1], [0, 0, 1, 1], [], []>} : vector<8x32xf32>, vector<32x32xf32>, vector<8x32xf32> -> vector<8x32xf32>
    %c3_67 = arith.constant 3 : index
    %c0_68 = arith.constant 0 : index
    %c0_69 = arith.constant 0 : index
    %79 = vector.load %arg4[%c3_67, %c0_68, %c0_69] : memref<7x1x32xf32, #tpu.memory_space<vmem>>, vector<1x1x32xf32>
    %80 = vector.shape_cast %79 : vector<1x1x32xf32> to vector<1x32xf32>
    %81 = vector.broadcast %80 : vector<1x32xf32> to vector<8x32xf32>
    %82 = arith.addf %78, %81 : vector<8x32xf32>
    %c24_70 = arith.constant 24 : index
    %c0_71 = arith.constant 0 : index
    %83 = vector.load %arg18[%c24_70, %c0_71] : memref<64x32xf32, #tpu.memory_space<vmem>>, vector<8x32xf32>
    tpu.vector_store %arg18[%c24_70, %c0_71], %82 {strides = array<i32>} : memref<64x32xf32, #tpu.memory_space<vmem>>, vector<8x32xf32>,
    %c32 = arith.constant 32 : index
    %c0_72 = arith.constant 0 : index
    %84 = vector.load %arg0[%c32, %c0_72] : memref<64x16xf32, #tpu.memory_space<vmem>>, vector<8x16xf32>
    %c4 = arith.constant 4 : index
    %c0_73 = arith.constant 0 : index
    %c0_74 = arith.constant 0 : index
    %85 = vector.load %arg1[%c4, %c0_73, %c0_74] : memref<7x16x32xf32, #tpu.memory_space<vmem>>, vector<1x16x32xf32>
    %86 = vector.shape_cast %85 : vector<1x16x32xf32> to vector<16x32xf32>
    %cst_75 = arith.constant dense<0.000000e+00> : vector<8x32xf32>
    %87 = tpu.matmul %84, %86, %cst_75 {dimension_numbers = #tpu.dot_dimension_numbers<[1], [0], [0], [1], [0, 0, 1, 1], [], []>} : vector<8x16xf32>, vector<16x32xf32>, vector<8x32xf32> -> vector<8x32xf32>
    %c4_76 = arith.constant 4 : index
    %c0_77 = arith.constant 0 : index
    %c0_78 = arith.constant 0 : index
    %88 = vector.load %arg2[%c4_76, %c0_77, %c0_78] : memref<7x1x32xf32, #tpu.memory_space<vmem>>, vector<1x1x32xf32>
    %89 = vector.shape_cast %88 : vector<1x1x32xf32> to vector<1x32xf32>
    %90 = vector.broadcast %89 : vector<1x32xf32> to vector<8x32xf32>
    %91 = arith.addf %87, %90 : vector<8x32xf32>
    %cst_79 = arith.constant 0.000000e+00 : f32
    %92 = vector.broadcast %cst_79 : f32 to vector<8x32xf32>
    %93 = arith.cmpf ogt, %91, %92 : vector<8x32xf32>
    %cst_80 = arith.constant 0.00999999977 : f32
    %94 = vector.broadcast %cst_80 : f32 to vector<8x32xf32>
    %95 = arith.mulf %94, %91 : vector<8x32xf32>
    %96 = arith.select %93, %91, %95 : vector<8x32xi1>, vector<8x32xf32>
    %c4_81 = arith.constant 4 : index
    %c0_82 = arith.constant 0 : index
    %c0_83 = arith.constant 0 : index
    %97 = vector.load %arg3[%c4_81, %c0_82, %c0_83] : memref<7x32x32xf32, #tpu.memory_space<vmem>>, vector<1x32x32xf32>
    %98 = vector.shape_cast %97 : vector<1x32x32xf32> to vector<32x32xf32>
    %cst_84 = arith.constant dense<0.000000e+00> : vector<8x32xf32>
    %99 = tpu.matmul %96, %98, %cst_84 {dimension_numbers = #tpu.dot_dimension_numbers<[1], [0], [0], [1], [0, 0, 1, 1], [], []>} : vector<8x32xf32>, vector<32x32xf32>, vector<8x32xf32> -> vector<8x32xf32>
    %c4_85 = arith.constant 4 : index
    %c0_86 = arith.constant 0 : index
    %c0_87 = arith.constant 0 : index
    %100 = vector.load %arg4[%c4_85, %c0_86, %c0_87] : memref<7x1x32xf32, #tpu.memory_space<vmem>>, vector<1x1x32xf32>
    %101 = vector.shape_cast %100 : vector<1x1x32xf32> to vector<1x32xf32>
    %102 = vector.broadcast %101 : vector<1x32xf32> to vector<8x32xf32>
    %103 = arith.addf %99, %102 : vector<8x32xf32>
    %c32_88 = arith.constant 32 : index
    %c0_89 = arith.constant 0 : index
    %104 = vector.load %arg18[%c32_88, %c0_89] : memref<64x32xf32, #tpu.memory_space<vmem>>, vector<8x32xf32>
    tpu.vector_store %arg18[%c32_88, %c0_89], %103 {strides = array<i32>} : memref<64x32xf32, #tpu.memory_space<vmem>>, vector<8x32xf32>,
    %c40 = arith.constant 40 : index
    %c0_90 = arith.constant 0 : index
    %105 = vector.load %arg0[%c40, %c0_90] : memref<64x16xf32, #tpu.memory_space<vmem>>, vector<8x16xf32>
    %c5 = arith.constant 5 : index
    %c0_91 = arith.constant 0 : index
    %c0_92 = arith.constant 0 : index
    %106 = vector.load %arg1[%c5, %c0_91, %c0_92] : memref<7x16x32xf32, #tpu.memory_space<vmem>>, vector<1x16x32xf32>
    %107 = vector.shape_cast %106 : vector<1x16x32xf32> to vector<16x32xf32>
    %cst_93 = arith.constant dense<0.000000e+00> : vector<8x32xf32>
    %108 = tpu.matmul %105, %107, %cst_93 {dimension_numbers = #tpu.dot_dimension_numbers<[1], [0], [0], [1], [0, 0, 1, 1], [], []>} : vector<8x16xf32>, vector<16x32xf32>, vector<8x32xf32> -> vector<8x32xf32>
    %c5_94 = arith.constant 5 : index
    %c0_95 = arith.constant 0 : index
    %c0_96 = arith.constant 0 : index
    %109 = vector.load %arg2[%c5_94, %c0_95, %c0_96] : memref<7x1x32xf32, #tpu.memory_space<vmem>>, vector<1x1x32xf32>
    %110 = vector.shape_cast %109 : vector<1x1x32xf32> to vector<1x32xf32>
    %111 = vector.broadcast %110 : vector<1x32xf32> to vector<8x32xf32>
    %112 = arith.addf %108, %111 : vector<8x32xf32>
    %cst_97 = arith.constant 0.000000e+00 : f32
    %113 = vector.broadcast %cst_97 : f32 to vector<8x32xf32>
    %114 = arith.cmpf ogt, %112, %113 : vector<8x32xf32>
    %cst_98 = arith.constant 0.00999999977 : f32
    %115 = vector.broadcast %cst_98 : f32 to vector<8x32xf32>
    %116 = arith.mulf %115, %112 : vector<8x32xf32>
    %117 = arith.select %114, %112, %116 : vector<8x32xi1>, vector<8x32xf32>
    %c5_99 = arith.constant 5 : index
    %c0_100 = arith.constant 0 : index
    %c0_101 = arith.constant 0 : index
    %118 = vector.load %arg3[%c5_99, %c0_100, %c0_101] : memref<7x32x32xf32, #tpu.memory_space<vmem>>, vector<1x32x32xf32>
    %119 = vector.shape_cast %118 : vector<1x32x32xf32> to vector<32x32xf32>
    %cst_102 = arith.constant dense<0.000000e+00> : vector<8x32xf32>
    %120 = tpu.matmul %117, %119, %cst_102 {dimension_numbers = #tpu.dot_dimension_numbers<[1], [0], [0], [1], [0, 0, 1, 1], [], []>} : vector<8x32xf32>, vector<32x32xf32>, vector<8x32xf32> -> vector<8x32xf32>
    %c5_103 = arith.constant 5 : index
    %c0_104 = arith.constant 0 : index
    %c0_105 = arith.constant 0 : index
    %121 = vector.load %arg4[%c5_103, %c0_104, %c0_105] : memref<7x1x32xf32, #tpu.memory_space<vmem>>, vector<1x1x32xf32>
    %122 = vector.shape_cast %121 : vector<1x1x32xf32> to vector<1x32xf32>
    %123 = vector.broadcast %122 : vector<1x32xf32> to vector<8x32xf32>
    %124 = arith.addf %120, %123 : vector<8x32xf32>
    %c40_106 = arith.constant 40 : index
    %c0_107 = arith.constant 0 : index
    %125 = vector.load %arg18[%c40_106, %c0_107] : memref<64x32xf32, #tpu.memory_space<vmem>>, vector<8x32xf32>
    tpu.vector_store %arg18[%c40_106, %c0_107], %124 {strides = array<i32>} : memref<64x32xf32, #tpu.memory_space<vmem>>, vector<8x32xf32>,
    %c48 = arith.constant 48 : index
    %c0_108 = arith.constant 0 : index
    %126 = vector.load %arg0[%c48, %c0_108] : memref<64x16xf32, #tpu.memory_space<vmem>>, vector<8x16xf32>
    %c6 = arith.constant 6 : index
    %c0_109 = arith.constant 0 : index
    %c0_110 = arith.constant 0 : index
    %127 = vector.load %arg1[%c6, %c0_109, %c0_110] : memref<7x16x32xf32, #tpu.memory_space<vmem>>, vector<1x16x32xf32>
    %128 = vector.shape_cast %127 : vector<1x16x32xf32> to vector<16x32xf32>
    %cst_111 = arith.constant dense<0.000000e+00> : vector<8x32xf32>
    %129 = tpu.matmul %126, %128, %cst_111 {dimension_numbers = #tpu.dot_dimension_numbers<[1], [0], [0], [1], [0, 0, 1, 1], [], []>} : vector<8x16xf32>, vector<16x32xf32>, vector<8x32xf32> -> vector<8x32xf32>
    %c6_112 = arith.constant 6 : index
    %c0_113 = arith.constant 0 : index
    %c0_114 = arith.constant 0 : index
    %130 = vector.load %arg2[%c6_112, %c0_113, %c0_114] : memref<7x1x32xf32, #tpu.memory_space<vmem>>, vector<1x1x32xf32>
    %131 = vector.shape_cast %130 : vector<1x1x32xf32> to vector<1x32xf32>
    %132 = vector.broadcast %131 : vector<1x32xf32> to vector<8x32xf32>
    %133 = arith.addf %129, %132 : vector<8x32xf32>
    %cst_115 = arith.constant 0.000000e+00 : f32
    %134 = vector.broadcast %cst_115 : f32 to vector<8x32xf32>
    %135 = arith.cmpf ogt, %133, %134 : vector<8x32xf32>
    %cst_116 = arith.constant 0.00999999977 : f32
    %136 = vector.broadcast %cst_116 : f32 to vector<8x32xf32>
    %137 = arith.mulf %136, %133 : vector<8x32xf32>
    %138 = arith.select %135, %133, %137 : vector<8x32xi1>, vector<8x32xf32>
    %c6_117 = arith.constant 6 : index
    %c0_118 = arith.constant 0 : index
    %c0_119 = arith.constant 0 : index
    %139 = vector.load %arg3[%c6_117, %c0_118, %c0_119] : memref<7x32x32xf32, #tpu.memory_space<vmem>>, vector<1x32x32xf32>
    %140 = vector.shape_cast %139 : vector<1x32x32xf32> to vector<32x32xf32>
    %cst_120 = arith.constant dense<0.000000e+00> : vector<8x32xf32>
    %141 = tpu.matmul %138, %140, %cst_120 {dimension_numbers = #tpu.dot_dimension_numbers<[1], [0], [0], [1], [0, 0, 1, 1], [], []>} : vector<8x32xf32>, vector<32x32xf32>, vector<8x32xf32> -> vector<8x32xf32>
    %c6_121 = arith.constant 6 : index
    %c0_122 = arith.constant 0 : index
    %c0_123 = arith.constant 0 : index
    %142 = vector.load %arg4[%c6_121, %c0_122, %c0_123] : memref<7x1x32xf32, #tpu.memory_space<vmem>>, vector<1x1x32xf32>
    %143 = vector.shape_cast %142 : vector<1x1x32xf32> to vector<1x32xf32>
    %144 = vector.broadcast %143 : vector<1x32xf32> to vector<8x32xf32>
    %145 = arith.addf %141, %144 : vector<8x32xf32>
    %c48_124 = arith.constant 48 : index
    %c0_125 = arith.constant 0 : index
    %146 = vector.load %arg18[%c48_124, %c0_125] : memref<64x32xf32, #tpu.memory_space<vmem>>, vector<8x32xf32>
    tpu.vector_store %arg18[%c48_124, %c0_125], %145 {strides = array<i32>} : memref<64x32xf32, #tpu.memory_space<vmem>>, vector<8x32xf32>,
    %cst_126 = arith.constant 0.000000e+00 : f32
    %147 = vector.broadcast %cst_126 : f32 to vector<8x32xf32>
    %c56 = arith.constant 56 : index
    %c0_127 = arith.constant 0 : index
    %148 = vector.load %arg18[%c56, %c0_127] : memref<64x32xf32, #tpu.memory_space<vmem>>, vector<8x32xf32>
    tpu.vector_store %arg18[%c56, %c0_127], %147 {strides = array<i32>} : memref<64x32xf32, #tpu.memory_space<vmem>>, vector<8x32xf32>,
    %c0_128 = arith.constant 0 : index
    %c0_129 = arith.constant 0 : index
    %149 = vector.load %arg5[%c0_128, %c0_129] : memref<64x64xf32, #tpu.memory_space<vmem>>, vector<64x64xf32>
    %c0_130 = arith.constant 0 : index
    %c0_131 = arith.constant 0 : index
    %150 = vector.load %arg6[%c0_130, %c0_131] : memref<64x64xf32, #tpu.memory_space<vmem>>, vector<64x64xf32>
    %c0_132 = arith.constant 0 : index
    %c0_133 = arith.constant 0 : index
    %151 = vector.load %arg7[%c0_132, %c0_133] : memref<64x1xf32, #tpu.memory_space<vmem>>, vector<64x1xf32>
    %c0_134 = arith.constant 0 : index
    %c0_135 = arith.constant 0 : index
    %152 = vector.load %arg8[%c0_134, %c0_135] : memref<64x1xf32, #tpu.memory_space<vmem>>, vector<64x1xf32>
    %c0_136 = arith.constant 0 : index
    %c0_137 = arith.constant 0 : index
    %153 = vector.load %arg18[%c0_136, %c0_137] : memref<64x32xf32, #tpu.memory_space<vmem>>, vector<64x32xf32>
    %c0_138 = arith.constant 0 : index
    %c0_139 = arith.constant 0 : index
    %c0_140 = arith.constant 0 : index
    %154 = vector.load %arg9[%c0_138, %c0_139, %c0_140] : memref<2x32x32xf32, #tpu.memory_space<vmem>>, vector<1x32x32xf32>
    %155 = vector.shape_cast %154 : vector<1x32x32xf32> to vector<32x32xf32>
    %cst_141 = arith.constant dense<0.000000e+00> : vector<64x32xf32>
    %156 = tpu.matmul %153, %155, %cst_141 {dimension_numbers = #tpu.dot_dimension_numbers<[1], [0], [0], [1], [0, 0, 1, 1], [], []>} : vector<64x32xf32>, vector<32x32xf32>, vector<64x32xf32> -> vector<64x32xf32>
    %c0_142 = arith.constant 0 : index
    %c0_143 = arith.constant 0 : index
    %c0_144 = arith.constant 0 : index
    %157 = vector.load %arg11[%c0_142, %c0_143, %c0_144] : memref<2x32x32xf32, #tpu.memory_space<vmem>>, vector<1x32x32xf32>
    %158 = vector.shape_cast %157 : vector<1x32x32xf32> to vector<32x32xf32>
    %cst_145 = arith.constant dense<0.000000e+00> : vector<64x32xf32>
    %159 = tpu.matmul %153, %158, %cst_145 {dimension_numbers = #tpu.dot_dimension_numbers<[1], [0], [0], [1], [0, 0, 1, 1], [], []>} : vector<64x32xf32>, vector<32x32xf32>, vector<64x32xf32> -> vector<64x32xf32>
    %cst_146 = arith.constant dense<0.000000e+00> : vector<64x32xf32>
    %160 = tpu.matmul %149, %156, %cst_146 {dimension_numbers = #tpu.dot_dimension_numbers<[1], [0], [0], [1], [0, 0, 1, 1], [], []>} : vector<64x64xf32>, vector<64x32xf32>, vector<64x32xf32> -> vector<64x32xf32>
    %cst_147 = arith.constant dense<0.000000e+00> : vector<64x32xf32>
    %161 = tpu.matmul %150, %159, %cst_147 {dimension_numbers = #tpu.dot_dimension_numbers<[1], [0], [0], [1], [0, 0, 1, 1], [], []>} : vector<64x64xf32>, vector<64x32xf32>, vector<64x32xf32> -> vector<64x32xf32>
    %162 = arith.addf %160, %161 : vector<64x32xf32>
    %c0_148 = arith.constant 0 : index
    %c0_149 = arith.constant 0 : index
    %c0_150 = arith.constant 0 : index
    %163 = vector.load %arg10[%c0_148, %c0_149, %c0_150] : memref<2x1x32xf32, #tpu.memory_space<vmem>>, vector<1x1x32xf32>
    %164 = vector.shape_cast %163 : vector<1x1x32xf32> to vector<1x32xf32>
    %165 = vector.broadcast %151 : vector<64x1xf32> to vector<64x32xf32>
    %166 = vector.broadcast %164 : vector<1x32xf32> to vector<64x32xf32>
    %167 = arith.mulf %165, %166 : vector<64x32xf32>
    %168 = arith.addf %162, %167 : vector<64x32xf32>
    %c0_151 = arith.constant 0 : index
    %c0_152 = arith.constant 0 : index
    %c0_153 = arith.constant 0 : index
    %169 = vector.load %arg12[%c0_151, %c0_152, %c0_153] : memref<2x1x32xf32, #tpu.memory_space<vmem>>, vector<1x1x32xf32>
    %170 = vector.shape_cast %169 : vector<1x1x32xf32> to vector<1x32xf32>
    %171 = vector.broadcast %152 : vector<64x1xf32> to vector<64x32xf32>
    %172 = vector.broadcast %170 : vector<1x32xf32> to vector<64x32xf32>
    %173 = arith.mulf %171, %172 : vector<64x32xf32>
    %174 = arith.addf %168, %173 : vector<64x32xf32>
    %cst_154 = arith.constant 0.000000e+00 : f32
    %175 = vector.broadcast %cst_154 : f32 to vector<64x32xf32>
    %176 = arith.cmpf ogt, %174, %175 : vector<64x32xf32>
    %cst_155 = arith.constant 0.00999999977 : f32
    %177 = vector.broadcast %cst_155 : f32 to vector<64x32xf32>
    %178 = arith.mulf %177, %174 : vector<64x32xf32>
    %179 = arith.select %176, %174, %178 : vector<64x32xi1>, vector<64x32xf32>
    %c0_156 = arith.constant 0 : index
    %c0_157 = arith.constant 0 : index
    %180 = vector.load %arg18[%c0_156, %c0_157] : memref<64x32xf32, #tpu.memory_space<vmem>>, vector<64x32xf32>
    tpu.vector_store %arg18[%c0_156, %c0_157], %179 {strides = array<i32>} : memref<64x32xf32, #tpu.memory_space<vmem>>, vector<64x32xf32>,
    %c0_158 = arith.constant 0 : index
    %c0_159 = arith.constant 0 : index
    %181 = vector.load %arg18[%c0_158, %c0_159] : memref<64x32xf32, #tpu.memory_space<vmem>>, vector<64x32xf32>
    %c1_160 = arith.constant 1 : index
    %c0_161 = arith.constant 0 : index
    %c0_162 = arith.constant 0 : index
    %182 = vector.load %arg9[%c1_160, %c0_161, %c0_162] : memref<2x32x32xf32, #tpu.memory_space<vmem>>, vector<1x32x32xf32>
    %183 = vector.shape_cast %182 : vector<1x32x32xf32> to vector<32x32xf32>
    %cst_163 = arith.constant dense<0.000000e+00> : vector<64x32xf32>
    %184 = tpu.matmul %181, %183, %cst_163 {dimension_numbers = #tpu.dot_dimension_numbers<[1], [0], [0], [1], [0, 0, 1, 1], [], []>} : vector<64x32xf32>, vector<32x32xf32>, vector<64x32xf32> -> vector<64x32xf32>
    %c1_164 = arith.constant 1 : index
    %c0_165 = arith.constant 0 : index
    %c0_166 = arith.constant 0 : index
    %185 = vector.load %arg11[%c1_164, %c0_165, %c0_166] : memref<2x32x32xf32, #tpu.memory_space<vmem>>, vector<1x32x32xf32>
    %186 = vector.shape_cast %185 : vector<1x32x32xf32> to vector<32x32xf32>
    %cst_167 = arith.constant dense<0.000000e+00> : vector<64x32xf32>
    %187 = tpu.matmul %181, %186, %cst_167 {dimension_numbers = #tpu.dot_dimension_numbers<[1], [0], [0], [1], [0, 0, 1, 1], [], []>} : vector<64x32xf32>, vector<32x32xf32>, vector<64x32xf32> -> vector<64x32xf32>
    %cst_168 = arith.constant dense<0.000000e+00> : vector<64x32xf32>
    %188 = tpu.matmul %149, %184, %cst_168 {dimension_numbers = #tpu.dot_dimension_numbers<[1], [0], [0], [1], [0, 0, 1, 1], [], []>} : vector<64x64xf32>, vector<64x32xf32>, vector<64x32xf32> -> vector<64x32xf32>
    %cst_169 = arith.constant dense<0.000000e+00> : vector<64x32xf32>
    %189 = tpu.matmul %150, %187, %cst_169 {dimension_numbers = #tpu.dot_dimension_numbers<[1], [0], [0], [1], [0, 0, 1, 1], [], []>} : vector<64x64xf32>, vector<64x32xf32>, vector<64x32xf32> -> vector<64x32xf32>
    %190 = arith.addf %188, %189 : vector<64x32xf32>
    %c1_170 = arith.constant 1 : index
    %c0_171 = arith.constant 0 : index
    %c0_172 = arith.constant 0 : index
    %191 = vector.load %arg10[%c1_170, %c0_171, %c0_172] : memref<2x1x32xf32, #tpu.memory_space<vmem>>, vector<1x1x32xf32>
    %192 = vector.shape_cast %191 : vector<1x1x32xf32> to vector<1x32xf32>
    %193 = vector.broadcast %151 : vector<64x1xf32> to vector<64x32xf32>
    %194 = vector.broadcast %192 : vector<1x32xf32> to vector<64x32xf32>
    %195 = arith.mulf %193, %194 : vector<64x32xf32>
    %196 = arith.addf %190, %195 : vector<64x32xf32>
    %c1_173 = arith.constant 1 : index
    %c0_174 = arith.constant 0 : index
    %c0_175 = arith.constant 0 : index
    %197 = vector.load %arg12[%c1_173, %c0_174, %c0_175] : memref<2x1x32xf32, #tpu.memory_space<vmem>>, vector<1x1x32xf32>
    %198 = vector.shape_cast %197 : vector<1x1x32xf32> to vector<1x32xf32>
    %199 = vector.broadcast %152 : vector<64x1xf32> to vector<64x32xf32>
    %200 = vector.broadcast %198 : vector<1x32xf32> to vector<64x32xf32>
    %201 = arith.mulf %199, %200 : vector<64x32xf32>
    %202 = arith.addf %196, %201 : vector<64x32xf32>
    %cst_176 = arith.constant 0.000000e+00 : f32
    %203 = vector.broadcast %cst_176 : f32 to vector<64x32xf32>
    %204 = arith.cmpf ogt, %202, %203 : vector<64x32xf32>
    %cst_177 = arith.constant 0.00999999977 : f32
    %205 = vector.broadcast %cst_177 : f32 to vector<64x32xf32>
    %206 = arith.mulf %205, %202 : vector<64x32xf32>
    %207 = arith.select %204, %202, %206 : vector<64x32xi1>, vector<64x32xf32>
    %c0_178 = arith.constant 0 : index
    %c0_179 = arith.constant 0 : index
    %208 = vector.load %arg18[%c0_178, %c0_179] : memref<64x32xf32, #tpu.memory_space<vmem>>, vector<64x32xf32>
    tpu.vector_store %arg18[%c0_178, %c0_179], %207 {strides = array<i32>} : memref<64x32xf32, #tpu.memory_space<vmem>>, vector<64x32xf32>,
    %c0_180 = arith.constant 0 : index
    %c0_181 = arith.constant 0 : index
    %209 = vector.load %arg18[%c0_180, %c0_181] : memref<64x32xf32, #tpu.memory_space<vmem>>, vector<64x32xf32>
    %c0_182 = arith.constant 0 : index
    %c0_183 = arith.constant 0 : index
    %210 = vector.load %arg13[%c0_182, %c0_183] : memref<32x8xf32, #tpu.memory_space<vmem>>, vector<32x8xf32>
    %cst_184 = arith.constant dense<0.000000e+00> : vector<64x8xf32>
    %211 = tpu.matmul %209, %210, %cst_184 {dimension_numbers = #tpu.dot_dimension_numbers<[1], [0], [0], [1], [0, 0, 1, 1], [], []>} : vector<64x32xf32>, vector<32x8xf32>, vector<64x8xf32> -> vector<64x8xf32>
    %c0_185 = arith.constant 0 : index
    %c0_186 = arith.constant 0 : index
    %212 = vector.load %arg15[%c0_185, %c0_186] : memref<32x8xf32, #tpu.memory_space<vmem>>, vector<32x8xf32>
    %cst_187 = arith.constant dense<0.000000e+00> : vector<64x8xf32>
    %213 = tpu.matmul %209, %212, %cst_187 {dimension_numbers = #tpu.dot_dimension_numbers<[1], [0], [0], [1], [0, 0, 1, 1], [], []>} : vector<64x32xf32>, vector<32x8xf32>, vector<64x8xf32> -> vector<64x8xf32>
    %cst_188 = arith.constant dense<0.000000e+00> : vector<64x8xf32>
    %214 = tpu.matmul %149, %211, %cst_188 {dimension_numbers = #tpu.dot_dimension_numbers<[1], [0], [0], [1], [0, 0, 1, 1], [], []>} : vector<64x64xf32>, vector<64x8xf32>, vector<64x8xf32> -> vector<64x8xf32>
    %cst_189 = arith.constant dense<0.000000e+00> : vector<64x8xf32>
    %215 = tpu.matmul %150, %213, %cst_189 {dimension_numbers = #tpu.dot_dimension_numbers<[1], [0], [0], [1], [0, 0, 1, 1], [], []>} : vector<64x64xf32>, vector<64x8xf32>, vector<64x8xf32> -> vector<64x8xf32>
    %216 = arith.addf %214, %215 : vector<64x8xf32>
    %c0_190 = arith.constant 0 : index
    %c0_191 = arith.constant 0 : index
    %217 = vector.load %arg14[%c0_190, %c0_191] : memref<1x8xf32, #tpu.memory_space<vmem>>, vector<1x8xf32>
    %218 = vector.broadcast %151 : vector<64x1xf32> to vector<64x8xf32>
    %219 = vector.broadcast %217 : vector<1x8xf32> to vector<64x8xf32>
    %220 = arith.mulf %218, %219 : vector<64x8xf32>
    %221 = arith.addf %216, %220 : vector<64x8xf32>
    %c0_192 = arith.constant 0 : index
    %c0_193 = arith.constant 0 : index
    %222 = vector.load %arg16[%c0_192, %c0_193] : memref<1x8xf32, #tpu.memory_space<vmem>>, vector<1x8xf32>
    %223 = vector.broadcast %152 : vector<64x1xf32> to vector<64x8xf32>
    %224 = vector.broadcast %222 : vector<1x8xf32> to vector<64x8xf32>
    %225 = arith.mulf %223, %224 : vector<64x8xf32>
    %226 = arith.addf %221, %225 : vector<64x8xf32>
    %227 = vector.extract_strided_slice %226 {offsets = [48, 0], sizes = [8, 8], strides = [1, 1]} : vector<64x8xf32> to vector<8x8xf32>
    %c0_194 = arith.constant 0 : index
    %c0_195 = arith.constant 0 : index
    %228 = vector.load %arg17[%c0_194, %c0_195] : memref<8x8xf32, #tpu.memory_space<vmem>>, vector<8x8xf32>
    tpu.vector_store %arg17[%c0_194, %c0_195], %227 {strides = array<i32>} : memref<8x8xf32, #tpu.memory_space<vmem>>, vector<8x8xf32>,
    return
  }
}

</mosaic_0001>

<llo_original>
// kernel: sage_forward_fused.1
$region0: #{sage_forward_fused.1}
  #allocation0 [shape = 'u32[]', space=smem, size = 0x4, offset = 0x4, fixed_abs, tag = 'smem constant byte address 0x4 - core index']
  #allocation1 [shape = 'u32[144,128]{1,0:T(1,128)}', space=vmem, size = 0x12000, scoped, tag = 'internal scratch']
  #allocation2 [shape = 'f32[64,32]{1,0:T(8,128)}', space=vmem, size = 0x8000, scoped, tag = 'scratch operand']
  %s0 = inlined_call_operand.vmem [shape: f32[64,16], index: 0, kind: input, shape index: {}]
  %s1 = inlined_call_operand.hbm [shape: f32[7,16,32], index: 1, kind: input, shape index: {}]
  %s2 = inlined_call_operand.hbm [shape: f32[7,1,32], index: 2, kind: input, shape index: {}]
  %s3 = inlined_call_operand.vmem [shape: f32[7,32,32], index: 3, kind: input, shape index: {}]
  %s4 = inlined_call_operand.hbm [shape: f32[7,1,32], index: 4, kind: input, shape index: {}]
  %s5 = inlined_call_operand.vmem [shape: f32[64,64], index: 5, kind: input, shape index: {}]
  %s6 = inlined_call_operand.hbm [shape: f32[64,64], index: 6, kind: input, shape index: {}]
  %s7 = inlined_call_operand.vmem [shape: f32[64,1], index: 7, kind: input, shape index: {}]
  %s8 = inlined_call_operand.vmem [shape: f32[64,1], index: 8, kind: input, shape index: {}]
  %s9 = inlined_call_operand.hbm [shape: f32[2,32,32], index: 9, kind: input, shape index: {}]
  %s10 = inlined_call_operand.vmem [shape: f32[2,1,32], index: 10, kind: input, shape index: {}]
  %s11 = inlined_call_operand.hbm [shape: f32[2,32,32], index: 11, kind: input, shape index: {}]
  %s12 = inlined_call_operand.vmem [shape: f32[2,1,32], index: 12, kind: input, shape index: {}]
  %s13 = inlined_call_operand.vmem [shape: f32[32,8], index: 13, kind: input, shape index: {}]
  %s14 = inlined_call_operand.vmem [shape: f32[1,8], index: 14, kind: input, shape index: {}]
  %s15 = inlined_call_operand.vmem [shape: f32[32,8], index: 15, kind: input, shape index: {}]
  %s16 = inlined_call_operand.vmem [shape: f32[1,8], index: 16, kind: input, shape index: {}]
  %s17 = inlined_call_operand.hbm [shape: f32[8,8], index: 17, kind: output, shape index: {}]
  %s18 = sld [smem:[#allocation0]]
  $region102: #{sage_forward_fused.1} parent=0
    _
  %s20 = ssub.s32 1, %s18
  %s21 = scalar_select 0, %s20, %s18
  $region1: #{sage_forward_fused.1} parent=0
    #allocation3 [shape = 'u8[57344]{0}', space=vmem, size = 0xe000, scoped, tag = 'input window, operand 1, single buffered']
    #allocation4 [shape = 's32[1]{0}', space=sflag, size = 0x4, scoped, tag = 'scoped memory for sage_forward_fused.1']
    #allocation5 [shape = 's32[1]{0}', space=sflag, size = 0x4, scoped, tag = 'scoped memory for sage_forward_fused.1']
    #allocation6 [shape = 'u8[3584]{0}', space=vmem, size = 0x1000, scoped, tag = 'input window, operand 2, single buffered']
    #allocation7 [shape = 's32[1]{0}', space=sflag, size = 0x4, scoped, tag = 'scoped memory for sage_forward_fused.1']
    #allocation8 [shape = 'u8[3584]{0}', space=vmem, size = 0x1000, scoped, tag = 'input window, operand 4, single buffered']
    #allocation9 [shape = 'u8[32768]{0}', space=vmem, size = 0x8000, scoped, tag = 'input window, operand 6, single buffered']
    #allocation10 [shape = 's32[1]{0}', space=sflag, size = 0x4, scoped, tag = 'scoped memory for sage_forward_fused.1']
    #allocation11 [shape = 'u8[32768]{0}', space=vmem, size = 0x8000, scoped, tag = 'input window, operand 9, single buffered']
    #allocation12 [shape = 'u8[32768]{0}', space=vmem, size = 0x8000, scoped, tag = 'input window, operand 11, single buffered']
    #allocation13 [shape = 's32[1]{0}', space=sflag, size = 0x4, scoped, tag = 'scoped memory for sage_forward_fused.1']
    #allocation14 [shape = 'u8[4096]{0}', space=vmem, size = 0x1000, scoped, tag = 'output window, operand 0, single buffered']
    %22 = vsyncpa [#allocation4], 0
    %23 = vsyncpa [#allocation7], 0
    %24 = vsyncpa [#allocation10], 0
    %25 = vsyncpa [#allocation13], 0
    %26 = vsyncpa [#allocation5], 0
    // Predicated region
    $region2: #{sage_forward_fused.1} parent=1 // pred_check
      _
    $region3: #{sage_forward_fused.1} parent=1 // pred_check_branch
      %28 = sbr.rel (0) target = $region5
    $region4: #{sage_forward_fused.1} parent=1 // pred_region
      _
    $region5: #{sage_forward_fused.1} parent=1 // pred_fallthru
      _
    // Predicated region
    $region6: #{sage_forward_fused.1} parent=1 // pred_check
      _
    $region7: #{sage_forward_fused.1} parent=1 // pred_check_branch
      %30 = sbr.rel (0) target = $region9
    $region8: #{sage_forward_fused.1} parent=1 // pred_region
      %s32 = ssub.s32 1792, 1792
      %33 = vsyncadd [#allocation4], %s32
      %s34 = sshll.u32 [#allocation3], 4
      %s35 = int_to_ptr.vmem [resolvable:$true] %s34
      %40 = dma.hbm_to_vmem [thread:$0]  %s1, 1792, %s35, [#allocation4], 128, 128, 8
    $region9: #{sage_forward_fused.1} parent=1 // pred_fallthru
      _
    // Predicated region
    $region10: #{sage_forward_fused.1} parent=1 // pred_check
      _
    $region11: #{sage_forward_fused.1} parent=1 // pred_check_branch
      %42 = sbr.rel (0) target = $region13
    $region12: #{sage_forward_fused.1} parent=1 // pred_region
      %s44 = ssub.s32 112, 112
      %45 = vsyncadd [#allocation7], %s44
      %s46 = sshll.u32 [#allocation6], 4
      %s47 = int_to_ptr.vmem [resolvable:$true] %s46
      %52 = dma.hbm_to_vmem [thread:$0]  %s2, 112, %s47, [#allocation7], 16, 16, 1
    $region13: #{sage_forward_fused.1} parent=1 // pred_fallthru
      _
    // Predicated region
    $region14: #{sage_forward_fused.1} parent=1 // pred_check
      _
    $region15: #{sage_forward_fused.1} parent=1 // pred_check_branch
      %54 = sbr.rel (0) target = $region17
    $region16: #{sage_forward_fused.1} parent=1 // pred_region
      _
    $region17: #{sage_forward_fused.1} parent=1 // pred_fallthru
      _
    // Predicated region
    $region18: #{sage_forward_fused.1} parent=1 // pred_check
      _
    $region19: #{sage_forward_fused.1} parent=1 // pred_check_branch
      %56 = sbr.rel (0) target = $region21
    $region20: #{sage_forward_fused.1} parent=1 // pred_region
      %s58 = ssub.s32 112, 112
      %59 = vsyncadd [#allocation7], %s58
      %s60 = sshll.u32 [#allocation8], 4
      %s61 = int_to_ptr.vmem [resolvable:$true] %s60
      %66 = dma.hbm_to_vmem [thread:$0]  %s4, 112, %s61, [#allocation7], 16, 16, 1
    $region21: #{sage_forward_fused.1} parent=1 // pred_fallthru
      _
    // Predicated region
    $region22: #{sage_forward_fused.1} parent=1 // pred_check
      _
    $region23: #{sage_forward_fused.1} parent=1 // pred_check_branch
      %68 = sbr.rel (0) target = $region25
    $region24: #{sage_forward_fused.1} parent=1 // pred_region
      _
    $region25: #{sage_forward_fused.1} parent=1 // pred_fallthru
      _
    // Predicated region
    $region26: #{sage_forward_fused.1} parent=1 // pred_check
      _
    $region27: #{sage_forward_fused.1} parent=1 // pred_check_branch
      %70 = sbr.rel (0) target = $region29
    $region28: #{sage_forward_fused.1} parent=1 // pred_region
      %s72 = ssub.s32 1024, 1024
      %73 = vsyncadd [#allocation10], %s72
      %s74 = sshll.u32 [#allocation9], 4
      %s75 = int_to_ptr.vmem [resolvable:$true] %s74
      %80 = dma.hbm_to_vmem [thread:$0]  %s6, 1024, %s75, [#allocation10], 128, 128, 8
    $region29: #{sage_forward_fused.1} parent=1 // pred_fallthru
      _
    // Predicated region
    $region30: #{sage_forward_fused.1} parent=1 // pred_check
      _
    $region31: #{sage_forward_fused.1} parent=1 // pred_check_branch
      %82 = sbr.rel (0) target = $region33
    $region32: #{sage_forward_fused.1} parent=1 // pred_region
      _
    $region33: #{sage_forward_fused.1} parent=1 // pred_fallthru
      _
    // Predicated region
    $region34: #{sage_forward_fused.1} parent=1 // pred_check
      _
    $region35: #{sage_forward_fused.1} parent=1 // pred_check_branch
      %84 = sbr.rel (0) target = $region37
    $region36: #{sage_forward_fused.1} parent=1 // pred_region
      _
    $region37: #{sage_forward_fused.1} parent=1 // pred_fallthru
      _
    // Predicated region
    $region38: #{sage_forward_fused.1} parent=1 // pred_check
      _
    $region39: #{sage_forward_fused.1} parent=1 // pred_check_branch
      %86 = sbr.rel (0) target = $region41
    $region40: #{sage_forward_fused.1} parent=1 // pred_region
      %s88 = ssub.s32 1024, 1024
      %89 = vsyncadd [#allocation10], %s88
      %s90 = sshll.u32 [#allocation11], 4
      %s91 = int_to_ptr.vmem [resolvable:$true] %s90
      %96 = dma.hbm_to_vmem [thread:$0]  %s9, 1024, %s91, [#allocation10], 128, 128, 8
    $region41: #{sage_forward_fused.1} parent=1 // pred_fallthru
      _
    // Predicated region
    $region42: #{sage_forward_fused.1} parent=1 // pred_check
      _
    $region43: #{sage_forward_fused.1} parent=1 // pred_check_branch
      %98 = sbr.rel (0) target = $region45
    $region44: #{sage_forward_fused.1} parent=1 // pred_region
      _
    $region45: #{sage_forward_fused.1} parent=1 // pred_fallthru
      _
    // Predicated region
    $region46: #{sage_forward_fused.1} parent=1 // pred_check
      _
    $region47: #{sage_forward_fused.1} parent=1 // pred_check_branch
      %100 = sbr.rel (0) target = $region49
    $region48: #{sage_forward_fused.1} parent=1 // pred_region
      %s102 = ssub.s32 1024, 1024
      %103 = vsyncadd [#allocation13], %s102
      %s104 = sshll.u32 [#allocation12], 4
      %s105 = int_to_ptr.vmem [resolvable:$true] %s104
      %110 = dma.hbm_to_vmem [thread:$0]  %s11, 1024, %s105, [#allocation13], 128, 128, 8
    $region49: #{sage_forward_fused.1} parent=1 // pred_fallthru
      _
    // Predicated region
    $region50: #{sage_forward_fused.1} parent=1 // pred_check
      _
    $region51: #{sage_forward_fused.1} parent=1 // pred_check_branch
      %112 = sbr.rel (0) target = $region53
    $region52: #{sage_forward_fused.1} parent=1 // pred_region
      _
    $region53: #{sage_forward_fused.1} parent=1 // pred_fallthru
      _
    // Predicated region
    $region54: #{sage_forward_fused.1} parent=1 // pred_check
      _
    $region55: #{sage_forward_fused.1} parent=1 // pred_check_branch
      %114 = sbr.rel (0) target = $region57
    $region56: #{sage_forward_fused.1} parent=1 // pred_region
      _
    $region57: #{sage_forward_fused.1} parent=1 // pred_fallthru
      _
    // Predicated region
    $region58: #{sage_forward_fused.1} parent=1 // pred_check
      _
    $region59: #{sage_forward_fused.1} parent=1 // pred_check_branch
      %116 = sbr.rel (0) target = $region61
    $region60: #{sage_forward_fused.1} parent=1 // pred_region
      _
    $region61: #{sage_forward_fused.1} parent=1 // pred_fallthru
      _
    // Predicated region
    $region62: #{sage_forward_fused.1} parent=1 // pred_check
      _
    $region63: #{sage_forward_fused.1} parent=1 // pred_check_branch
      %118 = sbr.rel (0) target = $region65
    $region64: #{sage_forward_fused.1} parent=1 // pred_region
      _
    $region65: #{sage_forward_fused.1} parent=1 // pred_fallthru
      _
    // Predicated region
    $region66: #{sage_forward_fused.1} parent=1 // pred_check
      _
    $region67: #{sage_forward_fused.1} parent=1 // pred_check_branch
      %120 = sbr.rel (0) target = $region69
    $region68: #{sage_forward_fused.1} parent=1 // pred_region
      _
    $region69: #{sage_forward_fused.1} parent=1 // pred_fallthru
      _
    // Predicated region
    $region70: #{sage_forward_fused.1} parent=1 // pred_check
      _
    $region71: #{sage_forward_fused.1} parent=1 // pred_check_branch
      %122 = sbr.rel (0) target = $region73
    $region72: #{sage_forward_fused.1} parent=1 // pred_region
      %123 = dma.done [#allocation4], 1792
    $region73: #{sage_forward_fused.1} parent=1 // pred_fallthru
      _
    // Predicated region
    $region74: #{sage_forward_fused.1} parent=1 // pred_check
      _
    $region75: #{sage_forward_fused.1} parent=1 // pred_check_branch
      %125 = sbr.rel (0) target = $region77
    $region76: #{sage_forward_fused.1} parent=1 // pred_region
      %126 = dma.done [#allocation7], 112
    $region77: #{sage_forward_fused.1} parent=1 // pred_fallthru
      _
    // Predicated region
    $region78: #{sage_forward_fused.1} parent=1 // pred_check
      _
    $region79: #{sage_forward_fused.1} parent=1 // pred_check_branch
      %128 = sbr.rel (0) target = $region81
    $region80: #{sage_forward_fused.1} parent=1 // pred_region
      %129 = dma.done [#allocation7], 112
    $region81: #{sage_forward_fused.1} parent=1 // pred_fallthru
      _
    // Predicated region
    $region82: #{sage_forward_fused.1} parent=1 // pred_check
      _
    $region83: #{sage_forward_fused.1} parent=1 // pred_check_branch
      %131 = sbr.rel (0) target = $region85
    $region84: #{sage_forward_fused.1} parent=1 // pred_region
      %132 = dma.done [#allocation10], 1024
    $region85: #{sage_forward_fused.1} parent=1 // pred_fallthru
      _
    // Predicated region
    $region86: #{sage_forward_fused.1} parent=1 // pred_check
      _
    $region87: #{sage_forward_fused.1} parent=1 // pred_check_branch
      %134 = sbr.rel (0) target = $region89
    $region88: #{sage_forward_fused.1} parent=1 // pred_region
      %135 = dma.done [#allocation10], 1024
    $region89: #{sage_forward_fused.1} parent=1 // pred_fallthru
      _
    // Predicated region
    $region90: #{sage_forward_fused.1} parent=1 // pred_check
      _
    $region91: #{sage_forward_fused.1} parent=1 // pred_check_branch
      %137 = sbr.rel (0) target = $region93
    $region92: #{sage_forward_fused.1} parent=1 // pred_region
      %138 = dma.done [#allocation13], 1024
    $region93: #{sage_forward_fused.1} parent=1 // pred_fallthru
      _
    %v139 = vld [vmem:[%s0] sm:$0xff]
    %v140 = vld [vmem:[#allocation3] sm:$0xff]
    %v141 = vld [vmem:[#allocation3 + $0x8] sm:$0xff]
    %v142 = vld [vmem:[#allocation6] sm:$0x1]
    %v144 = vlaneseq
    %v145 = vshrl.u32 %v144, 7
    %v146 = vsub.s32 0, %v145
    %v147 = vrot.slane %v142, %v146
    %vm149 = vcmask 130048
    %v151 = vsel %vm149, %v139, 0
    %153 = vmatprep.subr.mxu0 0.0
    %154 = vmatpush1.msra.mxu0 %v140
    %155 = vmatprep.subr.mxu0 0.0
    %156 = vmatpush1.msra.mxu0 %v141
    %157 = vmatprep.subr.mxu0 0.0
    %158 = vmatpush1.msra.mxu0 0.0
    %159 = vmatprep.subr.mxu0 0.0
    %160 = vmatpush1.msra.mxu0 0.0
    %161 = vmatprep.subr.mxu0 0.0
    %162 = vmatpush1.msra.mxu0 0.0
    %163 = vmatprep.subr.mxu0 0.0
    %164 = vmatpush1.msra.mxu0 0.0
    %165 = vmatprep.subr.mxu0 0.0
    %166 = vmatpush1.msra.mxu0 0.0
    %167 = vmatprep.subr.mxu0 0.0
    %168 = vmatpush1.msra.mxu0 0.0
    %169 = vmatprep.subr.mxu0 0.0
    %170 = vmatpush1.msra.mxu0 0.0
    %171 = vmatprep.subr.mxu0 0.0
    %172 = vmatpush1.msra.mxu0 0.0
    %173 = vmatprep.subr.mxu0 0.0
    %174 = vmatpush1.msra.mxu0 0.0
    %175 = vmatprep.subr.mxu0 0.0
    %176 = vmatpush1.msra.mxu0 0.0
    %177 = vmatprep.subr.mxu0 0.0
    %178 = vmatpush1.msra.mxu0 0.0
    %179 = vmatprep.subr.mxu0 0.0
    %180 = vmatpush1.msra.mxu0 0.0
    %181 = vmatprep.subr.mxu0 0.0
    %182 = vmatpush1.msra.mxu0 0.0
    %183 = vmatprep.subr.mxu0 0.0
    %184 = vmatpush1.msra.mxu0 0.0
    %185 = vmatprep.subr.mxu0 0.0
    %186 = vmatpush1.msra.mxu0 0.0
    %187 = vmatprep.subr.mxu0 0.0
    %188 = vmatpush1.msra.mxu0 0.0
    %189 = vmatprep.subr.mxu0 0.0
    %190 = vmatpush1.msra.mxu0 0.0
    %191 = vmatprep.subr.mxu0 0.0
    %192 = vmatpush1.msra.mxu0 0.0
    %193 = vmatprep.subr.mxu0 0.0
    %194 = vmatpush1.msra.mxu0 0.0
    %195 = vmatprep.subr.mxu0 0.0
    %196 = vmatpush1.msra.mxu0 0.0
    %197 = vmatprep.subr.mxu0 0.0
    %198 = vmatpush1.msra.mxu0 0.0
    %199 = vmatprep.subr.mxu0 0.0
    %200 = vmatpush1.msra.mxu0 0.0
    %201 = vmatprep.subr.mxu0 0.0
    %202 = vmatpush1.msra.mxu0 0.0
    %203 = vmatprep.subr.mxu0 0.0
    %204 = vmatpush1.msra.mxu0 0.0
    %205 = vmatprep.subr.mxu0 0.0
    %206 = vmatpush1.msra.mxu0 0.0
    %207 = vmatprep.subr.mxu0 0.0
    %208 = vmatpush1.msra.mxu0 0.0
    %209 = vmatprep.subr.mxu0 0.0
    %210 = vmatpush1.msra.mxu0 0.0
    %211 = vmatprep.subr.mxu0 0.0
    %212 = vmatpush1.msra.mxu0 0.0
    %213 = vmatprep.subr.mxu0 0.0
    %214 = vmatpush1.msra.mxu0 0.0
    %215 = vmatprep.subr.mxu0 0.0
    %216 = vmatpush1.msra.mxu0 0.0
    %217 = vmatprep.mubr.f32.mxu0 0.0
    %218 = vmatmul.mubr.f32.gmra.mrb[0].mxu0 %v151
    %v219 = vpop.f32.mrb[0].mxu0
    %v220 = vadd.f32 %v147, %v219
    %v221 = vpop.f32.mrb[0].mxu0
    %222 = vdwg.mxu0
    %vm223 = vcmp.gt.f32.partialorder %v220, 0.0
    %v224 = vmul.f32 %v220, 0.01
    %v225 = vsel %vm223, %v220, %v224
    %v226 = vld [vmem:[%s3] sm:$0xff]
    %v227 = vld [vmem:[%s3 + $0x8] sm:$0xff]
    %v228 = vld [vmem:[%s3 + $0x10] sm:$0xff]
    %v229 = vld [vmem:[%s3 + $0x18] sm:$0xff]
    %v230 = vld [vmem:[#allocation8] sm:$0x1]
    %v232 = vlaneseq
    %v233 = vshrl.u32 %v232, 7
    %v234 = vsub.s32 0, %v233
    %v235 = vrot.slane %v230, %v234
    %vm237 = vcmask 261120
    %v239 = vsel %vm237, %v225, 0
    %241 = vmatprep.subr.mxu0 0.0
    %242 = vmatpush1.msra.mxu0 %v226
    %243 = vmatprep.subr.mxu0 0.0
    %244 = vmatpush1.msra.mxu0 %v227
    %245 = vmatprep.subr.mxu0 0.0
    %246 = vmatpush1.msra.mxu0 %v228
    %247 = vmatprep.subr.mxu0 0.0
    %248 = vmatpush1.msra.mxu0 %v229
    %249 = vmatprep.subr.mxu0 0.0
    %250 = vmatpush1.msra.mxu0 0.0
    %251 = vmatprep.subr.mxu0 0.0
    %252 = vmatpush1.msra.mxu0 0.0
    %253 = vmatprep.subr.mxu0 0.0
    %254 = vmatpush1.msra.mxu0 0.0
    %255 = vmatprep.subr.mxu0 0.0
    %256 = vmatpush1.msra.mxu0 0.0
    %257 = vmatprep.subr.mxu0 0.0
    %258 = vmatpush1.msra.mxu0 0.0
    %259 = vmatprep.subr.mxu0 0.0
    %260 = vmatpush1.msra.mxu0 0.0
    %261 = vmatprep.subr.mxu0 0.0
    %262 = vmatpush1.msra.mxu0 0.0
    %263 = vmatprep.subr.mxu0 0.0
    %264 = vmatpush1.msra.mxu0 0.0
    %265 = vmatprep.subr.mxu0 0.0
    %266 = vmatpush1.msra.mxu0 0.0
    %267 = vmatprep.subr.mxu0 0.0
    %268 = vmatpush1.msra.mxu0 0.0
    %269 = vmatprep.subr.mxu0 0.0
    %270 = vmatpush1.msra.mxu0 0.0
    %271 = vmatprep.subr.mxu0 0.0
    %272 = vmatpush1.msra.mxu0 0.0
    %273 = vmatprep.subr.mxu0 0.0
    %274 = vmatpush1.msra.mxu0 0.0
    %275 = vmatprep.subr.mxu0 0.0
    %276 = vmatpush1.msra.mxu0 0.0
    %277 = vmatprep.subr.mxu0 0.0
    %278 = vmatpush1.msra.mxu0 0.0
    %279 = vmatprep.subr.mxu0 0.0
    %280 = vmatpush1.msra.mxu0 0.0
    %281 = vmatprep.subr.mxu0 0.0
    %282 = vmatpush1.msra.mxu0 0.0
    %283 = vmatprep.subr.mxu0 0.0
    %284 = vmatpush1.msra.mxu0 0.0
    %285 = vmatprep.subr.mxu0 0.0
    %286 = vmatpush1.msra.mxu0 0.0
    %287 = vmatprep.subr.mxu0 0.0
    %288 = vmatpush1.msra.mxu0 0.0
    %289 = vmatprep.subr.mxu0 0.0
    %290 = vmatpush1.msra.mxu0 0.0
    %291 = vmatprep.subr.mxu0 0.0
    %292 = vmatpush1.msra.mxu0 0.0
    %293 = vmatprep.subr.mxu0 0.0
    %294 = vmatpush1.msra.mxu0 0.0
    %295 = vmatprep.subr.mxu0 0.0
    %296 = vmatpush1.msra.mxu0 0.0
    %297 = vmatprep.subr.mxu0 0.0
    %298 = vmatpush1.msra.mxu0 0.0
    %299 = vmatprep.subr.mxu0 0.0
    %300 = vmatpush1.msra.mxu0 0.0
    %301 = vmatprep.subr.mxu0 0.0
    %302 = vmatpush1.msra.mxu0 0.0
    %303 = vmatprep.subr.mxu0 0.0
    %304 = vmatpush1.msra.mxu0 0.0
    %305 = vmatprep.mubr.f32.mxu0 0.0
    %306 = vmatmul.mubr.f32.gmra.mrb[0].mxu0 %v239
    %v307 = vpop.f32.mrb[0].mxu0
    %v308 = vadd.f32 %v235, %v307
    %v309 = vpop.f32.mrb[0].mxu0
    %310 = vdwg.mxu0
    %311 = vst.msk [vmem:[#allocation2] sm:$0xff] %vm237, %v308
    %v312 = vld [vmem:[%s0 + $0x8] sm:$0xff]
    %s313 = scalar_lea.vmem [#allocation3], 16
    %v314 = vld [vmem:[%s313] sm:$0xff]
    %v315 = vld [vmem:[%s313 + $0x8] sm:$0xff]
    %s316 = scalar_lea.vmem [#allocation6], 1
    %v317 = vld [vmem:[%s316] sm:$0x1]
    %v319 = vlaneseq
    %v320 = vshrl.u32 %v319, 7
    %v321 = vsub.s32 0, %v320
    %v322 = vrot.slane %v317, %v321
    %v325 = vsel %vm149, %v312, 0
    %327 = vmatprep.subr.mxu0 0.0
    %328 = vmatpush1.msra.mxu0 %v314
    %329 = vmatprep.subr.mxu0 0.0
    %330 = vmatpush1.msra.mxu0 %v315
    %331 = vmatprep.subr.mxu0 0.0
    %332 = vmatpush1.msra.mxu0 0.0
    %333 = vmatprep.subr.mxu0 0.0
    %334 = vmatpush1.msra.mxu0 0.0
    %335 = vmatprep.subr.mxu0 0.0
    %336 = vmatpush1.msra.mxu0 0.0
    %337 = vmatprep.subr.mxu0 0.0
    %338 = vmatpush1.msra.mxu0 0.0
    %339 = vmatprep.subr.mxu0 0.0
    %340 = vmatpush1.msra.mxu0 0.0
    %341 = vmatprep.subr.mxu0 0.0
    %342 = vmatpush1.msra.mxu0 0.0
    %343 = vmatprep.subr.mxu0 0.0
    %344 = vmatpush1.msra.mxu0 0.0
    %345 = vmatprep.subr.mxu0 0.0
    %346 = vmatpush1.msra.mxu0 0.0
    %347 = vmatprep.subr.mxu0 0.0
    %348 = vmatpush1.msra.mxu0 0.0
    %349 = vmatprep.subr.mxu0 0.0
    %350 = vmatpush1.msra.mxu0 0.0
    %351 = vmatprep.subr.mxu0 0.0
    %352 = vmatpush1.msra.mxu0 0.0
    %353 = vmatprep.subr.mxu0 0.0
    %354 = vmatpush1.msra.mxu0 0.0
    %355 = vmatprep.subr.mxu0 0.0
    %356 = vmatpush1.msra.mxu0 0.0
    %357 = vmatprep.subr.mxu0 0.0
    %358 = vmatpush1.msra.mxu0 0.0
    %359 = vmatprep.subr.mxu0 0.0
    %360 = vmatpush1.msra.mxu0 0.0
    %361 = vmatprep.subr.mxu0 0.0
    %362 = vmatpush1.msra.mxu0 0.0
    %363 = vmatprep.subr.mxu0 0.0
    %364 = vmatpush1.msra.mxu0 0.0
    %365 = vmatprep.subr.mxu0 0.0
    %366 = vmatpush1.msra.mxu0 0.0
    %367 = vmatprep.subr.mxu0 0.0
    %368 = vmatpush1.msra.mxu0 0.0
    %369 = vmatprep.subr.mxu0 0.0
    %370 = vmatpush1.msra.mxu0 0.0
    %371 = vmatprep.subr.mxu0 0.0
    %372 = vmatpush1.msra.mxu0 0.0
    %373 = vmatprep.subr.mxu0 0.0
    %374 = vmatpush1.msra.mxu0 0.0
    %375 = vmatprep.subr.mxu0 0.0
    %376 = vmatpush1.msra.mxu0 0.0
    %377 = vmatprep.subr.mxu0 0.0
    %378 = vmatpush1.msra.mxu0 0.0
    %379 = vmatprep.subr.mxu0 0.0
    %380 = vmatpush1.msra.mxu0 0.0
    %381 = vmatprep.subr.mxu0 0.0
    %382 = vmatpush1.msra.mxu0 0.0
    %383 = vmatprep.subr.mxu0 0.0
    %384 = vmatpush1.msra.mxu0 0.0
    %385 = vmatprep.subr.mxu0 0.0
    %386 = vmatpush1.msra.mxu0 0.0
    %387 = vmatprep.subr.mxu0 0.0
    %388 = vmatpush1.msra.mxu0 0.0
    %389 = vmatprep.subr.mxu0 0.0
    %390 = vmatpush1.msra.mxu0 0.0
    %391 = vmatprep.mubr.f32.mxu0 0.0
    %392 = vmatmul.mubr.f32.gmra.mrb[0].mxu0 %v325
    %v393 = vpop.f32.mrb[0].mxu0
    %v394 = vadd.f32 %v322, %v393
    %v395 = vpop.f32.mrb[0].mxu0
    %396 = vdwg.mxu0
    %vm397 = vcmp.gt.f32.partialorder %v394, 0.0
    %v398 = vmul.f32 %v394, 0.01
    %v399 = vsel %vm397, %v394, %v398
    %s400 = scalar_lea.vmem %s3, 32
    %v401 = vld [vmem:[%s400] sm:$0xff]
    %v402 = vld [vmem:[%s400 + $0x8] sm:$0xff]
    %v403 = vld [vmem:[%s400 + $0x10] sm:$0xff]
    %v404 = vld [vmem:[%s400 + $0x18] sm:$0xff]
    %s405 = scalar_lea.vmem [#allocation8], 1
    %v406 = vld [vmem:[%s405] sm:$0x1]
    %v408 = vlaneseq
    %v409 = vshrl.u32 %v408, 7
    %v410 = vsub.s32 0, %v409
    %v411 = vrot.slane %v406, %v410
    %v414 = vsel %vm237, %v399, 0
    %416 = vmatprep.subr.mxu0 0.0
    %417 = vmatpush1.msra.mxu0 %v401
    %418 = vmatprep.subr.mxu0 0.0
    %419 = vmatpush1.msra.mxu0 %v402
    %420 = vmatprep.subr.mxu0 0.0
    %421 = vmatpush1.msra.mxu0 %v403
    %422 = vmatprep.subr.mxu0 0.0
    %423 = vmatpush1.msra.mxu0 %v404
    %424 = vmatprep.subr.mxu0 0.0
    %425 = vmatpush1.msra.mxu0 0.0
    %426 = vmatprep.subr.mxu0 0.0
    %427 = vmatpush1.msra.mxu0 0.0
    %428 = vmatprep.subr.mxu0 0.0
    %429 = vmatpush1.msra.mxu0 0.0
    %430 = vmatprep.subr.mxu0 0.0
    %431 = vmatpush1.msra.mxu0 0.0
    %432 = vmatprep.subr.mxu0 0.0
    %433 = vmatpush1.msra.mxu0 0.0
    %434 = vmatprep.subr.mxu0 0.0
    %435 = vmatpush1.msra.mxu0 0.0
    %436 = vmatprep.subr.mxu0 0.0
    %437 = vmatpush1.msra.mxu0 0.0
    %438 = vmatprep.subr.mxu0 0.0
    %439 = vmatpush1.msra.mxu0 0.0
    %440 = vmatprep.subr.mxu0 0.0
    %441 = vmatpush1.msra.mxu0 0.0
    %442 = vmatprep.subr.mxu0 0.0
    %443 = vmatpush1.msra.mxu0 0.0
    %444 = vmatprep.subr.mxu0 0.0
    %445 = vmatpush1.msra.mxu0 0.0
    %446 = vmatprep.subr.mxu0 0.0
    %447 = vmatpush1.msra.mxu0 0.0
    %448 = vmatprep.subr.mxu0 0.0
    %449 = vmatpush1.msra.mxu0 0.0
    %450 = vmatprep.subr.mxu0 0.0
    %451 = vmatpush1.msra.mxu0 0.0
    %452 = vmatprep.subr.mxu0 0.0
    %453 = vmatpush1.msra.mxu0 0.0
    %454 = vmatprep.subr.mxu0 0.0
    %455 = vmatpush1.msra.mxu0 0.0
    %456 = vmatprep.subr.mxu0 0.0
    %457 = vmatpush1.msra.mxu0 0.0
    %458 = vmatprep.subr.mxu0 0.0
    %459 = vmatpush1.msra.mxu0 0.0
    %460 = vmatprep.subr.mxu0 0.0
    %461 = vmatpush1.msra.mxu0 0.0
    %462 = vmatprep.subr.mxu0 0.0
    %463 = vmatpush1.msra.mxu0 0.0
    %464 = vmatprep.subr.mxu0 0.0
    %465 = vmatpush1.msra.mxu0 0.0
    %466 = vmatprep.subr.mxu0 0.0
    %467 = vmatpush1.msra.mxu0 0.0
    %468 = vmatprep.subr.mxu0 0.0
    %469 = vmatpush1.msra.mxu0 0.0
    %470 = vmatprep.subr.mxu0 0.0
    %471 = vmatpush1.msra.mxu0 0.0
    %472 = vmatprep.subr.mxu0 0.0
    %473 = vmatpush1.msra.mxu0 0.0
    %474 = vmatprep.subr.mxu0 0.0
    %475 = vmatpush1.msra.mxu0 0.0
    %476 = vmatprep.subr.mxu0 0.0
    %477 = vmatpush1.msra.mxu0 0.0
    %478 = vmatprep.subr.mxu0 0.0
    %479 = vmatpush1.msra.mxu0 0.0
    %480 = vmatprep.mubr.f32.mxu0 0.0
    %481 = vmatmul.mubr.f32.gmra.mrb[0].mxu0 %v414
    %v482 = vpop.f32.mrb[0].mxu0
    %v483 = vadd.f32 %v411, %v482
    %v484 = vpop.f32.mrb[0].mxu0
    %485 = vdwg.mxu0
    %486 = vst.msk [vmem:[#allocation2 + $0x8] sm:$0xff] %vm237, %v483
    %v487 = vld [vmem:[%s0 + $0x10] sm:$0xff]
    %s488 = scalar_lea.vmem [#allocation3], 32
    %v489 = vld [vmem:[%s488] sm:$0xff]
    %v490 = vld [vmem:[%s488 + $0x8] sm:$0xff]
    %s491 = scalar_lea.vmem [#allocation6], 2
    %v492 = vld [vmem:[%s491] sm:$0x1]
    %v494 = vlaneseq
    %v495 = vshrl.u32 %v494, 7
    %v496 = vsub.s32 0, %v495
    %v497 = vrot.slane %v492, %v496
    %v500 = vsel %vm149, %v487, 0
    %502 = vmatprep.subr.mxu0 0.0
    %503 = vmatpush1.msra.mxu0 %v489
    %504 = vmatprep.subr.mxu0 0.0
    %505 = vmatpush1.msra.mxu0 %v490
    %506 = vmatprep.subr.mxu0 0.0
    %507 = vmatpush1.msra.mxu0 0.0
    %508 = vmatprep.subr.mxu0 0.0
    %509 = vmatpush1.msra.mxu0 0.0
    %510 = vmatprep.subr.mxu0 0.0
    %511 = vmatpush1.msra.mxu0 0.0
    %512 = vmatprep.subr.mxu0 0.0
    %513 = vmatpush1.msra.mxu0 0.0
    %514 = vmatprep.subr.mxu0 0.0
    %515 = vmatpush1.msra.mxu0 0.0
    %516 = vmatprep.subr.mxu0 0.0
    %517 = vmatpush1.msra.mxu0 0.0
    %518 = vmatprep.subr.mxu0 0.0
    %519 = vmatpush1.msra.mxu0 0.0
    %520 = vmatprep.subr.mxu0 0.0
    %521 = vmatpush1.msra.mxu0 0.0
    %522 = vmatprep.subr.mxu0 0.0
    %523 = vmatpush1.msra.mxu0 0.0
    %524 = vmatprep.subr.mxu0 0.0
    %525 = vmatpush1.msra.mxu0 0.0
    %526 = vmatprep.subr.mxu0 0.0
    %527 = vmatpush1.msra.mxu0 0.0
    %528 = vmatprep.subr.mxu0 0.0
    %529 = vmatpush1.msra.mxu0 0.0
    %530 = vmatprep.subr.mxu0 0.0
    %531 = vmatpush1.msra.mxu0 0.0
    %532 = vmatprep.subr.mxu0 0.0
    %533 = vmatpush1.msra.mxu0 0.0
    %534 = vmatprep.subr.mxu0 0.0
    %535 = vmatpush1.msra.mxu0 0.0
    %536 = vmatprep.subr.mxu0 0.0
    %537 = vmatpush1.msra.mxu0 0.0
    %538 = vmatprep.subr.mxu0 0.0
    %539 = vmatpush1.msra.mxu0 0.0
    %540 = vmatprep.subr.mxu0 0.0
    %541 = vmatpush1.msra.mxu0 0.0
    %542 = vmatprep.subr.mxu0 0.0
    %543 = vmatpush1.msra.mxu0 0.0
    %544 = vmatprep.subr.mxu0 0.0
    %545 = vmatpush1.msra.mxu0 0.0
    %546 = vmatprep.subr.mxu0 0.0
    %547 = vmatpush1.msra.mxu0 0.0
    %548 = vmatprep.subr.mxu0 0.0
    %549 = vmatpush1.msra.mxu0 0.0
    %550 = vmatprep.subr.mxu0 0.0
    %551 = vmatpush1.msra.mxu0 0.0
    %552 = vmatprep.subr.mxu0 0.0
    %553 = vmatpush1.msra.mxu0 0.0
    %554 = vmatprep.subr.mxu0 0.0
    %555 = vmatpush1.msra.mxu0 0.0
    %556 = vmatprep.subr.mxu0 0.0
    %557 = vmatpush1.msra.mxu0 0.0
    %558 = vmatprep.subr.mxu0 0.0
    %559 = vmatpush1.msra.mxu0 0.0
    %560 = vmatprep.subr.mxu0 0.0
    %561 = vmatpush1.msra.mxu0 0.0
    %562 = vmatprep.subr.mxu0 0.0
    %563 = vmatpush1.msra.mxu0 0.0
    %564 = vmatprep.subr.mxu0 0.0
    %565 = vmatpush1.msra.mxu0 0.0
    %566 = vmatprep.mubr.f32.mxu0 0.0
    %567 = vmatmul.mubr.f32.gmra.mrb[0].mxu0 %v500
    %v568 = vpop.f32.mrb[0].mxu0
    %v569 = vadd.f32 %v497, %v568
    %v570 = vpop.f32.mrb[0].mxu0
    %571 = vdwg.mxu0
    %vm572 = vcmp.gt.f32.partialorder %v569, 0.0
    %v573 = vmul.f32 %v569, 0.01
    %v574 = vsel %vm572, %v569, %v573
    %s575 = scalar_lea.vmem %s3, 64
    %v576 = vld [vmem:[%s575] sm:$0xff]
    %v577 = vld [vmem:[%s575 + $0x8] sm:$0xff]
    %v578 = vld [vmem:[%s575 + $0x10] sm:$0xff]
    %v579 = vld [vmem:[%s575 + $0x18] sm:$0xff]
    %s580 = scalar_lea.vmem [#allocation8], 2
    %v581 = vld [vmem:[%s580] sm:$0x1]
    %v583 = vlaneseq
    %v584 = vshrl.u32 %v583, 7
    %v585 = vsub.s32 0, %v584
    %v586 = vrot.slane %v581, %v585
    %v589 = vsel %vm237, %v574, 0
    %591 = vmatprep.subr.mxu0 0.0
    %592 = vmatpush1.msra.mxu0 %v576
    %593 = vmatprep.subr.mxu0 0.0
    %594 = vmatpush1.msra.mxu0 %v577
    %595 = vmatprep.subr.mxu0 0.0
    %596 = vmatpush1.msra.mxu0 %v578
    %597 = vmatprep.subr.mxu0 0.0
    %598 = vmatpush1.msra.mxu0 %v579
    %599 = vmatprep.subr.mxu0 0.0
    %600 = vmatpush1.msra.mxu0 0.0
    %601 = vmatprep.subr.mxu0 0.0
    %602 = vmatpush1.msra.mxu0 0.0
    %603 = vmatprep.subr.mxu0 0.0
    %604 = vmatpush1.msra.mxu0 0.0
    %605 = vmatprep.subr.mxu0 0.0
    %606 = vmatpush1.msra.mxu0 0.0
    %607 = vmatprep.subr.mxu0 0.0
    %608 = vmatpush1.msra.mxu0 0.0
    %609 = vmatprep.subr.mxu0 0.0
    %610 = vmatpush1.msra.mxu0 0.0
    %611 = vmatprep.subr.mxu0 0.0
    %612 = vmatpush1.msra.mxu0 0.0
    %613 = vmatprep.subr.mxu0 0.0
    %614 = vmatpush1.msra.mxu0 0.0
    %615 = vmatprep.subr.mxu0 0.0
    %616 = vmatpush1.msra.mxu0 0.0
    %617 = vmatprep.subr.mxu0 0.0
    %618 = vmatpush1.msra.mxu0 0.0
    %619 = vmatprep.subr.mxu0 0.0
    %620 = vmatpush1.msra.mxu0 0.0
    %621 = vmatprep.subr.mxu0 0.0
    %622 = vmatpush1.msra.mxu0 0.0
    %623 = vmatprep.subr.mxu0 0.0
    %624 = vmatpush1.msra.mxu0 0.0
    %625 = vmatprep.subr.mxu0 0.0
    %626 = vmatpush1.msra.mxu0 0.0
    %627 = vmatprep.subr.mxu0 0.0
    %628 = vmatpush1.msra.mxu0 0.0
    %629 = vmatprep.subr.mxu0 0.0
    %630 = vmatpush1.msra.mxu0 0.0
    %631 = vmatprep.subr.mxu0 0.0
    %632 = vmatpush1.msra.mxu0 0.0
    %633 = vmatprep.subr.mxu0 0.0
    %634 = vmatpush1.msra.mxu0 0.0
    %635 = vmatprep.subr.mxu0 0.0
    %636 = vmatpush1.msra.mxu0 0.0
    %637 = vmatprep.subr.mxu0 0.0
    %638 = vmatpush1.msra.mxu0 0.0
    %639 = vmatprep.subr.mxu0 0.0
    %640 = vmatpush1.msra.mxu0 0.0
    %641 = vmatprep.subr.mxu0 0.0
    %642 = vmatpush1.msra.mxu0 0.0
    %643 = vmatprep.subr.mxu0 0.0
    %644 = vmatpush1.msra.mxu0 0.0
    %645 = vmatprep.subr.mxu0 0.0
    %646 = vmatpush1.msra.mxu0 0.0
    %647 = vmatprep.subr.mxu0 0.0
    %648 = vmatpush1.msra.mxu0 0.0
    %649 = vmatprep.subr.mxu0 0.0
    %650 = vmatpush1.msra.mxu0 0.0
    %651 = vmatprep.subr.mxu0 0.0
    %652 = vmatpush1.msra.mxu0 0.0
    %653 = vmatprep.subr.mxu0 0.0
    %654 = vmatpush1.msra.mxu0 0.0
    %655 = vmatprep.mubr.f32.mxu0 0.0
    %656 = vmatmul.mubr.f32.gmra.mrb[0].mxu0 %v589
    %v657 = vpop.f32.mrb[0].mxu0
    %v658 = vadd.f32 %v586, %v657
    %v659 = vpop.f32.mrb[0].mxu0
    %660 = vdwg.mxu0
    %661 = vst.msk [vmem:[#allocation2 + $0x10] sm:$0xff] %vm237, %v658
    %v662 = vld [vmem:[%s0 + $0x18] sm:$0xff]
    %s663 = scalar_lea.vmem [#allocation3], 48
    %v664 = vld [vmem:[%s663] sm:$0xff]
    %v665 = vld [vmem:[%s663 + $0x8] sm:$0xff]
    %s666 = scalar_lea.vmem [#allocation6], 3
    %v667 = vld [vmem:[%s666] sm:$0x1]
    %v669 = vlaneseq
    %v670 = vshrl.u32 %v669, 7
    %v671 = vsub.s32 0, %v670
    %v672 = vrot.slane %v667, %v671
    %v675 = vsel %vm149, %v662, 0
    %677 = vmatprep.subr.mxu0 0.0
    %678 = vmatpush1.msra.mxu0 %v664
    %679 = vmatprep.subr.mxu0 0.0
    %680 = vmatpush1.msra.mxu0 %v665
    %681 = vmatprep.subr.mxu0 0.0
    %682 = vmatpush1.msra.mxu0 0.0
    %683 = vmatprep.subr.mxu0 0.0
    %684 = vmatpush1.msra.mxu0 0.0
    %685 = vmatprep.subr.mxu0 0.0
    %686 = vmatpush1.msra.mxu0 0.0
    %687 = vmatprep.subr.mxu0 0.0
    %688 = vmatpush1.msra.mxu0 0.0
    %689 = vmatprep.subr.mxu0 0.0
    %690 = vmatpush1.msra.mxu0 0.0
    %691 = vmatprep.subr.mxu0 0.0
    %692 = vmatpush1.msra.mxu0 0.0
    %693 = vmatprep.subr.mxu0 0.0
    %694 = vmatpush1.msra.mxu0 0.0
    %695 = vmatprep.subr.mxu0 0.0
    %696 = vmatpush1.msra.mxu0 0.0
    %697 = vmatprep.subr.mxu0 0.0
    %698 = vmatpush1.msra.mxu0 0.0
    %699 = vmatprep.subr.mxu0 0.0
    %700 = vmatpush1.msra.mxu0 0.0
    %701 = vmatprep.subr.mxu0 0.0
    %702 = vmatpush1.msra.mxu0 0.0
    %703 = vmatprep.subr.mxu0 0.0
    %704 = vmatpush1.msra.mxu0 0.0
    %705 = vmatprep.subr.mxu0 0.0
    %706 = vmatpush1.msra.mxu0 0.0
    %707 = vmatprep.subr.mxu0 0.0
    %708 = vmatpush1.msra.mxu0 0.0
    %709 = vmatprep.subr.mxu0 0.0
    %710 = vmatpush1.msra.mxu0 0.0
    %711 = vmatprep.subr.mxu0 0.0
    %712 = vmatpush1.msra.mxu0 0.0
    %713 = vmatprep.subr.mxu0 0.0
    %714 = vmatpush1.msra.mxu0 0.0
    %715 = vmatprep.subr.mxu0 0.0
    %716 = vmatpush1.msra.mxu0 0.0
    %717 = vmatprep.subr.mxu0 0.0
    %718 = vmatpush1.msra.mxu0 0.0
    %719 = vmatprep.subr.mxu0 0.0
    %720 = vmatpush1.msra.mxu0 0.0
    %721 = vmatprep.subr.mxu0 0.0
    %722 = vmatpush1.msra.mxu0 0.0
    %723 = vmatprep.subr.mxu0 0.0
    %724 = vmatpush1.msra.mxu0 0.0
    %725 = vmatprep.subr.mxu0 0.0
    %726 = vmatpush1.msra.mxu0 0.0
    %727 = vmatprep.subr.mxu0 0.0
    %728 = vmatpush1.msra.mxu0 0.0
    %729 = vmatprep.subr.mxu0 0.0
    %730 = vmatpush1.msra.mxu0 0.0
    %731 = vmatprep.subr.mxu0 0.0
    %732 = vmatpush1.msra.mxu0 0.0
    %733 = vmatprep.subr.mxu0 0.0
    %734 = vmatpush1.msra.mxu0 0.0
    %735 = vmatprep.subr.mxu0 0.0
    %736 = vmatpush1.msra.mxu0 0.0
    %737 = vmatprep.subr.mxu0 0.0
    %738 = vmatpush1.msra.mxu0 0.0
    %739 = vmatprep.subr.mxu0 0.0
    %740 = vmatpush1.msra.mxu0 0.0
    %741 = vmatprep.mubr.f32.mxu0 0.0
    %742 = vmatmul.mubr.f32.gmra.mrb[0].mxu0 %v675
    %v743 = vpop.f32.mrb[0].mxu0
    %v744 = vadd.f32 %v672, %v743
    %v745 = vpop.f32.mrb[0].mxu0
    %746 = vdwg.mxu0
    %vm747 = vcmp.gt.f32.partialorder %v744, 0.0
    %v748 = vmul.f32 %v744, 0.01
    %v749 = vsel %vm747, %v744, %v748
    %s750 = scalar_lea.vmem %s3, 96
    %v751 = vld [vmem:[%s750] sm:$0xff]
    %v752 = vld [vmem:[%s750 + $0x8] sm:$0xff]
    %v753 = vld [vmem:[%s750 + $0x10] sm:$0xff]
    %v754 = vld [vmem:[%s750 + $0x18] sm:$0xff]
    %s755 = scalar_lea.vmem [#allocation8], 3
    %v756 = vld [vmem:[%s755] sm:$0x1]
    %v758 = vlaneseq
    %v759 = vshrl.u32 %v758, 7
    %v760 = vsub.s32 0, %v759
    %v761 = vrot.slane %v756, %v760
    %v764 = vsel %vm237, %v749, 0
    %766 = vmatprep.subr.mxu0 0.0
    %767 = vmatpush1.msra.mxu0 %v751
    %768 = vmatprep.subr.mxu0 0.0
    %769 = vmatpush1.msra.mxu0 %v752
    %770 = vmatprep.subr.mxu0 0.0
    %771 = vmatpush1.msra.mxu0 %v753
    %772 = vmatprep.subr.mxu0 0.0
    %773 = vmatpush1.msra.mxu0 %v754
    %774 = vmatprep.subr.mxu0 0.0
    %775 = vmatpush1.msra.mxu0 0.0
    %776 = vmatprep.subr.mxu0 0.0
    %777 = vmatpush1.msra.mxu0 0.0
    %778 = vmatprep.subr.mxu0 0.0
    %779 = vmatpush1.msra.mxu0 0.0
    %780 = vmatprep.subr.mxu0 0.0
    %781 = vmatpush1.msra.mxu0 0.0
    %782 = vmatprep.subr.mxu0 0.0
    %783 = vmatpush1.msra.mxu0 0.0
    %784 = vmatprep.subr.mxu0 0.0
    %785 = vmatpush1.msra.mxu0 0.0
    %786 = vmatprep.subr.mxu0 0.0
    %787 = vmatpush1.msra.mxu0 0.0
    %788 = vmatprep.subr.mxu0 0.0
    %789 = vmatpush1.msra.mxu0 0.0
    %790 = vmatprep.subr.mxu0 0.0
    %791 = vmatpush1.msra.mxu0 0.0
    %792 = vmatprep.subr.mxu0 0.0
    %793 = vmatpush1.msra.mxu0 0.0
    %794 = vmatprep.subr.mxu0 0.0
    %795 = vmatpush1.msra.mxu0 0.0
    %796 = vmatprep.subr.mxu0 0.0
    %797 = vmatpush1.msra.mxu0 0.0
    %798 = vmatprep.subr.mxu0 0.0
    %799 = vmatpush1.msra.mxu0 0.0
    %800 = vmatprep.subr.mxu0 0.0
    %801 = vmatpush1.msra.mxu0 0.0
    %802 = vmatprep.subr.mxu0 0.0
    %803 = vmatpush1.msra.mxu0 0.0
    %804 = vmatprep.subr.mxu0 0.0
    %805 = vmatpush1.msra.mxu0 0.0
    %806 = vmatprep.subr.mxu0 0.0
    %807 = vmatpush1.msra.mxu0 0.0
    %808 = vmatprep.subr.mxu0 0.0
    %809 = vmatpush1.msra.mxu0 0.0
    %810 = vmatprep.subr.mxu0 0.0
    %811 = vmatpush1.msra.mxu0 0.0
    %812 = vmatprep.subr.mxu0 0.0
    %813 = vmatpush1.msra.mxu0 0.0
    %814 = vmatprep.subr.mxu0 0.0
    %815 = vmatpush1.msra.mxu0 0.0
    %816 = vmatprep.subr.mxu0 0.0
    %817 = vmatpush1.msra.mxu0 0.0
    %818 = vmatprep.subr.mxu0 0.0
    %819 = vmatpush1.msra.mxu0 0.0
    %820 = vmatprep.subr.mxu0 0.0
    %821 = vmatpush1.msra.mxu0 0.0
    %822 = vmatprep.subr.mxu0 0.0
    %823 = vmatpush1.msra.mxu0 0.0
    %824 = vmatprep.subr.mxu0 0.0
    %825 = vmatpush1.msra.mxu0 0.0
    %826 = vmatprep.subr.mxu0 0.0
    %827 = vmatpush1.msra.mxu0 0.0
    %828 = vmatprep.subr.mxu0 0.0
    %829 = vmatpush1.msra.mxu0 0.0
    %830 = vmatprep.mubr.f32.mxu0 0.0
    %831 = vmatmul.mubr.f32.gmra.mrb[0].mxu0 %v764
    %v832 = vpop.f32.mrb[0].mxu0
    %v833 = vadd.f32 %v761, %v832
    %v834 = vpop.f32.mrb[0].mxu0
    %835 = vdwg.mxu0
    %836 = vst.msk [vmem:[#allocation2 + $0x18] sm:$0xff] %vm237, %v833
    %v837 = vld [vmem:[%s0 + $0x20] sm:$0xff]
    %s838 = scalar_lea.vmem [#allocation3], 64
    %v839 = vld [vmem:[%s838] sm:$0xff]
    %v840 = vld [vmem:[%s838 + $0x8] sm:$0xff]
    %s841 = scalar_lea.vmem [#allocation6], 4
    %v842 = vld [vmem:[%s841] sm:$0x1]
    %v844 = vlaneseq
    %v845 = vshrl.u32 %v844, 7
    %v846 = vsub.s32 0, %v845
    %v847 = vrot.slane %v842, %v846
    %v850 = vsel %vm149, %v837, 0
    %852 = vmatprep.subr.mxu0 0.0
    %853 = vmatpush1.msra.mxu0 %v839
    %854 = vmatprep.subr.mxu0 0.0
    %855 = vmatpush1.msra.mxu0 %v840
    %856 = vmatprep.subr.mxu0 0.0
    %857 = vmatpush1.msra.mxu0 0.0
    %858 = vmatprep.subr.mxu0 0.0
    %859 = vmatpush1.msra.mxu0 0.0
    %860 = vmatprep.subr.mxu0 0.0
    %861 = vmatpush1.msra.mxu0 0.0
    %862 = vmatprep.subr.mxu0 0.0
    %863 = vmatpush1.msra.mxu0 0.0
    %864 = vmatprep.subr.mxu0 0.0
    %865 = vmatpush1.msra.mxu0 0.0
    %866 = vmatprep.subr.mxu0 0.0
    %867 = vmatpush1.msra.mxu0 0.0
    %868 = vmatprep.subr.mxu0 0.0
    %869 = vmatpush1.msra.mxu0 0.0
    %870 = vmatprep.subr.mxu0 0.0
    %871 = vmatpush1.msra.mxu0 0.0
    %872 = vmatprep.subr.mxu0 0.0
    %873 = vmatpush1.msra.mxu0 0.0
    %874 = vmatprep.subr.mxu0 0.0
    %875 = vmatpush1.msra.mxu0 0.0
    %876 = vmatprep.subr.mxu0 0.0
    %877 = vmatpush1.msra.mxu0 0.0
    %878 = vmatprep.subr.mxu0 0.0
    %879 = vmatpush1.msra.mxu0 0.0
    %880 = vmatprep.subr.mxu0 0.0
    %881 = vmatpush1.msra.mxu0 0.0
    %882 = vmatprep.subr.mxu0 0.0
    %883 = vmatpush1.msra.mxu0 0.0
    %884 = vmatprep.subr.mxu0 0.0
    %885 = vmatpush1.msra.mxu0 0.0
    %886 = vmatprep.subr.mxu0 0.0
    %887 = vmatpush1.msra.mxu0 0.0
    %888 = vmatprep.subr.mxu0 0.0
    %889 = vmatpush1.msra.mxu0 0.0
    %890 = vmatprep.subr.mxu0 0.0
    %891 = vmatpush1.msra.mxu0 0.0
    %892 = vmatprep.subr.mxu0 0.0
    %893 = vmatpush1.msra.mxu0 0.0
    %894 = vmatprep.subr.mxu0 0.0
    %895 = vmatpush1.msra.mxu0 0.0
    %896 = vmatprep.subr.mxu0 0.0
    %897 = vmatpush1.msra.mxu0 0.0
    %898 = vmatprep.subr.mxu0 0.0
    %899 = vmatpush1.msra.mxu0 0.0
    %900 = vmatprep.subr.mxu0 0.0
    %901 = vmatpush1.msra.mxu0 0.0
    %902 = vmatprep.subr.mxu0 0.0
    %903 = vmatpush1.msra.mxu0 0.0
    %904 = vmatprep.subr.mxu0 0.0
    %905 = vmatpush1.msra.mxu0 0.0
    %906 = vmatprep.subr.mxu0 0.0
    %907 = vmatpush1.msra.mxu0 0.0
    %908 = vmatprep.subr.mxu0 0.0
    %909 = vmatpush1.msra.mxu0 0.0
    %910 = vmatprep.subr.mxu0 0.0
    %911 = vmatpush1.msra.mxu0 0.0
    %912 = vmatprep.subr.mxu0 0.0
    %913 = vmatpush1.msra.mxu0 0.0
    %914 = vmatprep.subr.mxu0 0.0
    %915 = vmatpush1.msra.mxu0 0.0
    %916 = vmatprep.mubr.f32.mxu0 0.0
    %917 = vmatmul.mubr.f32.gmra.mrb[0].mxu0 %v850
    %v918 = vpop.f32.mrb[0].mxu0
    %v919 = vadd.f32 %v847, %v918
    %v920 = vpop.f32.mrb[0].mxu0
    %921 = vdwg.mxu0
    %vm922 = vcmp.gt.f32.partialorder %v919, 0.0
    %v923 = vmul.f32 %v919, 0.01
    %v924 = vsel %vm922, %v919, %v923
    %s925 = scalar_lea.vmem %s3, 128
    %v926 = vld [vmem:[%s925] sm:$0xff]
    %v927 = vld [vmem:[%s925 + $0x8] sm:$0xff]
    %v928 = vld [vmem:[%s925 + $0x10] sm:$0xff]
    %v929 = vld [vmem:[%s925 + $0x18] sm:$0xff]
    %s930 = scalar_lea.vmem [#allocation8], 4
    %v931 = vld [vmem:[%s930] sm:$0x1]
    %v933 = vlaneseq
    %v934 = vshrl.u32 %v933, 7
    %v935 = vsub.s32 0, %v934
    %v936 = vrot.slane %v931, %v935
    %v939 = vsel %vm237, %v924, 0
    %941 = vmatprep.subr.mxu0 0.0
    %942 = vmatpush1.msra.mxu0 %v926
    %943 = vmatprep.subr.mxu0 0.0
    %944 = vmatpush1.msra.mxu0 %v927
    %945 = vmatprep.subr.mxu0 0.0
    %946 = vmatpush1.msra.mxu0 %v928
    %947 = vmatprep.subr.mxu0 0.0
    %948 = vmatpush1.msra.mxu0 %v929
    %949 = vmatprep.subr.mxu0 0.0
    %950 = vmatpush1.msra.mxu0 0.0
    %951 = vmatprep.subr.mxu0 0.0
    %952 = vmatpush1.msra.mxu0 0.0
    %953 = vmatprep.subr.mxu0 0.0
    %954 = vmatpush1.msra.mxu0 0.0
    %955 = vmatprep.subr.mxu0 0.0
    %956 = vmatpush1.msra.mxu0 0.0
    %957 = vmatprep.subr.mxu0 0.0
    %958 = vmatpush1.msra.mxu0 0.0
    %959 = vmatprep.subr.mxu0 0.0
    %960 = vmatpush1.msra.mxu0 0.0
    %961 = vmatprep.subr.mxu0 0.0
    %962 = vmatpush1.msra.mxu0 0.0
    %963 = vmatprep.subr.mxu0 0.0
    %964 = vmatpush1.msra.mxu0 0.0
    %965 = vmatprep.subr.mxu0 0.0
    %966 = vmatpush1.msra.mxu0 0.0
    %967 = vmatprep.subr.mxu0 0.0
    %968 = vmatpush1.msra.mxu0 0.0
    %969 = vmatprep.subr.mxu0 0.0
    %970 = vmatpush1.msra.mxu0 0.0
    %971 = vmatprep.subr.mxu0 0.0
    %972 = vmatpush1.msra.mxu0 0.0
    %973 = vmatprep.subr.mxu0 0.0
    %974 = vmatpush1.msra.mxu0 0.0
    %975 = vmatprep.subr.mxu0 0.0
    %976 = vmatpush1.msra.mxu0 0.0
    %977 = vmatprep.subr.mxu0 0.0
    %978 = vmatpush1.msra.mxu0 0.0
    %979 = vmatprep.subr.mxu0 0.0
    %980 = vmatpush1.msra.mxu0 0.0
    %981 = vmatprep.subr.mxu0 0.0
    %982 = vmatpush1.msra.mxu0 0.0
    %983 = vmatprep.subr.mxu0 0.0
    %984 = vmatpush1.msra.mxu0 0.0
    %985 = vmatprep.subr.mxu0 0.0
    %986 = vmatpush1.msra.mxu0 0.0
    %987 = vmatprep.subr.mxu0 0.0
    %988 = vmatpush1.msra.mxu0 0.0
    %989 = vmatprep.subr.mxu0 0.0
    %990 = vmatpush1.msra.mxu0 0.0
    %991 = vmatprep.subr.mxu0 0.0
    %992 = vmatpush1.msra.mxu0 0.0
    %993 = vmatprep.subr.mxu0 0.0
    %994 = vmatpush1.msra.mxu0 0.0
    %995 = vmatprep.subr.mxu0 0.0
    %996 = vmatpush1.msra.mxu0 0.0
    %997 = vmatprep.subr.mxu0 0.0
    %998 = vmatpush1.msra.mxu0 0.0
    %999 = vmatprep.subr.mxu0 0.0
    %1000 = vmatpush1.msra.mxu0 0.0
    %1001 = vmatprep.subr.mxu0 0.0
    %1002 = vmatpush1.msra.mxu0 0.0
    %1003 = vmatprep.subr.mxu0 0.0
    %1004 = vmatpush1.msra.mxu0 0.0
    %1005 = vmatprep.mubr.f32.mxu0 0.0
    %1006 = vmatmul.mubr.f32.gmra.mrb[0].mxu0 %v939
    %v1007 = vpop.f32.mrb[0].mxu0
    %v1008 = vadd.f32 %v936, %v1007
    %v1009 = vpop.f32.mrb[0].mxu0
    %1010 = vdwg.mxu0
    %1011 = vst.msk [vmem:[#allocation2 + $0x20] sm:$0xff] %vm237, %v1008
    %v1012 = vld [vmem:[%s0 + $0x28] sm:$0xff]
    %s1013 = scalar_lea.vmem [#allocation3], 80
    %v1014 = vld [vmem:[%s1013] sm:$0xff]
    %v1015 = vld [vmem:[%s1013 + $0x8] sm:$0xff]
    %s1016 = scalar_lea.vmem [#allocation6], 5
    %v1017 = vld [vmem:[%s1016] sm:$0x1]
    %v1019 = vlaneseq
    %v1020 = vshrl.u32 %v1019, 7
    %v1021 = vsub.s32 0, %v1020
    %v1022 = vrot.slane %v1017, %v1021
    %v1025 = vsel %vm149, %v1012, 0
    %1027 = vmatprep.subr.mxu0 0.0
    %1028 = vmatpush1.msra.mxu0 %v1014
    %1029 = vmatprep.subr.mxu0 0.0
    %1030 = vmatpush1.msra.mxu0 %v1015
    %1031 = vmatprep.subr.mxu0 0.0
    %1032 = vmatpush1.msra.mxu0 0.0
    %1033 = vmatprep.subr.mxu0 0.0
    %1034 = vmatpush1.msra.mxu0 0.0
    %1035 = vmatprep.subr.mxu0 0.0
    %1036 = vmatpush1.msra.mxu0 0.0
    %1037 = vmatprep.subr.mxu0 0.0
    %1038 = vmatpush1.msra.mxu0 0.0
    %1039 = vmatprep.subr.mxu0 0.0
    %1040 = vmatpush1.msra.mxu0 0.0
    %1041 = vmatprep.subr.mxu0 0.0
    %1042 = vmatpush1.msra.mxu0 0.0
    %1043 = vmatprep.subr.mxu0 0.0
    %1044 = vmatpush1.msra.mxu0 0.0
    %1045 = vmatprep.subr.mxu0 0.0
    %1046 = vmatpush1.msra.mxu0 0.0
    %1047 = vmatprep.subr.mxu0 0.0
    %1048 = vmatpush1.msra.mxu0 0.0
    %1049 = vmatprep.subr.mxu0 0.0
    %1050 = vmatpush1.msra.mxu0 0.0
    %1051 = vmatprep.subr.mxu0 0.0
    %1052 = vmatpush1.msra.mxu0 0.0
    %1053 = vmatprep.subr.mxu0 0.0
    %1054 = vmatpush1.msra.mxu0 0.0
    %1055 = vmatprep.subr.mxu0 0.0
    %1056 = vmatpush1.msra.mxu0 0.0
    %1057 = vmatprep.subr.mxu0 0.0
    %1058 = vmatpush1.msra.mxu0 0.0
    %1059 = vmatprep.subr.mxu0 0.0
    %1060 = vmatpush1.msra.mxu0 0.0
    %1061 = vmatprep.subr.mxu0 0.0
    %1062 = vmatpush1.msra.mxu0 0.0
    %1063 = vmatprep.subr.mxu0 0.0
    %1064 = vmatpush1.msra.mxu0 0.0
    %1065 = vmatprep.subr.mxu0 0.0
    %1066 = vmatpush1.msra.mxu0 0.0
    %1067 = vmatprep.subr.mxu0 0.0
    %1068 = vmatpush1.msra.mxu0 0.0
    %1069 = vmatprep.subr.mxu0 0.0
    %1070 = vmatpush1.msra.mxu0 0.0
    %1071 = vmatprep.subr.mxu0 0.0
    %1072 = vmatpush1.msra.mxu0 0.0
    %1073 = vmatprep.subr.mxu0 0.0
    %1074 = vmatpush1.msra.mxu0 0.0
    %1075 = vmatprep.subr.mxu0 0.0
    %1076 = vmatpush1.msra.mxu0 0.0
    %1077 = vmatprep.subr.mxu0 0.0
    %1078 = vmatpush1.msra.mxu0 0.0
    %1079 = vmatprep.subr.mxu0 0.0
    %1080 = vmatpush1.msra.mxu0 0.0
    %1081 = vmatprep.subr.mxu0 0.0
    %1082 = vmatpush1.msra.mxu0 0.0
    %1083 = vmatprep.subr.mxu0 0.0
    %1084 = vmatpush1.msra.mxu0 0.0
    %1085 = vmatprep.subr.mxu0 0.0
    %1086 = vmatpush1.msra.mxu0 0.0
    %1087 = vmatprep.subr.mxu0 0.0
    %1088 = vmatpush1.msra.mxu0 0.0
    %1089 = vmatprep.subr.mxu0 0.0
    %1090 = vmatpush1.msra.mxu0 0.0
    %1091 = vmatprep.mubr.f32.mxu0 0.0
    %1092 = vmatmul.mubr.f32.gmra.mrb[0].mxu0 %v1025
    %v1093 = vpop.f32.mrb[0].mxu0
    %v1094 = vadd.f32 %v1022, %v1093
    %v1095 = vpop.f32.mrb[0].mxu0
    %1096 = vdwg.mxu0
    %vm1097 = vcmp.gt.f32.partialorder %v1094, 0.0
    %v1098 = vmul.f32 %v1094, 0.01
    %v1099 = vsel %vm1097, %v1094, %v1098
    %s1100 = scalar_lea.vmem %s3, 160
    %v1101 = vld [vmem:[%s1100] sm:$0xff]
    %v1102 = vld [vmem:[%s1100 + $0x8] sm:$0xff]
    %v1103 = vld [vmem:[%s1100 + $0x10] sm:$0xff]
    %v1104 = vld [vmem:[%s1100 + $0x18] sm:$0xff]
    %s1105 = scalar_lea.vmem [#allocation8], 5
    %v1106 = vld [vmem:[%s1105] sm:$0x1]
    %v1108 = vlaneseq
    %v1109 = vshrl.u32 %v1108, 7
    %v1110 = vsub.s32 0, %v1109
    %v1111 = vrot.slane %v1106, %v1110
    %v1114 = vsel %vm237, %v1099, 0
    %1116 = vmatprep.subr.mxu0 0.0
    %1117 = vmatpush1.msra.mxu0 %v1101
    %1118 = vmatprep.subr.mxu0 0.0
    %1119 = vmatpush1.msra.mxu0 %v1102
    %1120 = vmatprep.subr.mxu0 0.0
    %1121 = vmatpush1.msra.mxu0 %v1103
    %1122 = vmatprep.subr.mxu0 0.0
    %1123 = vmatpush1.msra.mxu0 %v1104
    %1124 = vmatprep.subr.mxu0 0.0
    %1125 = vmatpush1.msra.mxu0 0.0
    %1126 = vmatprep.subr.mxu0 0.0
    %1127 = vmatpush1.msra.mxu0 0.0
    %1128 = vmatprep.subr.mxu0 0.0
    %1129 = vmatpush1.msra.mxu0 0.0
    %1130 = vmatprep.subr.mxu0 0.0
    %1131 = vmatpush1.msra.mxu0 0.0
    %1132 = vmatprep.subr.mxu0 0.0
    %1133 = vmatpush1.msra.mxu0 0.0
    %1134 = vmatprep.subr.mxu0 0.0
    %1135 = vmatpush1.msra.mxu0 0.0
    %1136 = vmatprep.subr.mxu0 0.0
    %1137 = vmatpush1.msra.mxu0 0.0
    %1138 = vmatprep.subr.mxu0 0.0
    %1139 = vmatpush1.msra.mxu0 0.0
    %1140 = vmatprep.subr.mxu0 0.0
    %1141 = vmatpush1.msra.mxu0 0.0
    %1142 = vmatprep.subr.mxu0 0.0
    %1143 = vmatpush1.msra.mxu0 0.0
    %1144 = vmatprep.subr.mxu0 0.0
    %1145 = vmatpush1.msra.mxu0 0.0
    %1146 = vmatprep.subr.mxu0 0.0
    %1147 = vmatpush1.msra.mxu0 0.0
    %1148 = vmatprep.subr.mxu0 0.0
    %1149 = vmatpush1.msra.mxu0 0.0
    %1150 = vmatprep.subr.mxu0 0.0
    %1151 = vmatpush1.msra.mxu0 0.0
    %1152 = vmatprep.subr.mxu0 0.0
    %1153 = vmatpush1.msra.mxu0 0.0
    %1154 = vmatprep.subr.mxu0 0.0
    %1155 = vmatpush1.msra.mxu0 0.0
    %1156 = vmatprep.subr.mxu0 0.0
    %1157 = vmatpush1.msra.mxu0 0.0
    %1158 = vmatprep.subr.mxu0 0.0
    %1159 = vmatpush1.msra.mxu0 0.0
    %1160 = vmatprep.subr.mxu0 0.0
    %1161 = vmatpush1.msra.mxu0 0.0
    %1162 = vmatprep.subr.mxu0 0.0
    %1163 = vmatpush1.msra.mxu0 0.0
    %1164 = vmatprep.subr.mxu0 0.0
    %1165 = vmatpush1.msra.mxu0 0.0
    %1166 = vmatprep.subr.mxu0 0.0
    %1167 = vmatpush1.msra.mxu0 0.0
    %1168 = vmatprep.subr.mxu0 0.0
    %1169 = vmatpush1.msra.mxu0 0.0
    %1170 = vmatprep.subr.mxu0 0.0
    %1171 = vmatpush1.msra.mxu0 0.0
    %1172 = vmatprep.subr.mxu0 0.0
    %1173 = vmatpush1.msra.mxu0 0.0
    %1174 = vmatprep.subr.mxu0 0.0
    %1175 = vmatpush1.msra.mxu0 0.0
    %1176 = vmatprep.subr.mxu0 0.0
    %1177 = vmatpush1.msra.mxu0 0.0
    %1178 = vmatprep.subr.mxu0 0.0
    %1179 = vmatpush1.msra.mxu0 0.0
    %1180 = vmatprep.mubr.f32.mxu0 0.0
    %1181 = vmatmul.mubr.f32.gmra.mrb[0].mxu0 %v1114
    %v1182 = vpop.f32.mrb[0].mxu0
    %v1183 = vadd.f32 %v1111, %v1182
    %v1184 = vpop.f32.mrb[0].mxu0
    %1185 = vdwg.mxu0
    %1186 = vst.msk [vmem:[#allocation2 + $0x28] sm:$0xff] %vm237, %v1183
    %v1187 = vld [vmem:[%s0 + $0x30] sm:$0xff]
    %s1188 = scalar_lea.vmem [#allocation3], 96
    %v1189 = vld [vmem:[%s1188] sm:$0xff]
    %v1190 = vld [vmem:[%s1188 + $0x8] sm:$0xff]
    %s1191 = scalar_lea.vmem [#allocation6], 6
    %v1192 = vld [vmem:[%s1191] sm:$0x1]
    %v1194 = vlaneseq
    %v1195 = vshrl.u32 %v1194, 7
    %v1196 = vsub.s32 0, %v1195
    %v1197 = vrot.slane %v1192, %v1196
    %v1200 = vsel %vm149, %v1187, 0
    %1202 = vmatprep.subr.mxu0 0.0
    %1203 = vmatpush1.msra.mxu0 %v1189
    %1204 = vmatprep.subr.mxu0 0.0
    %1205 = vmatpush1.msra.mxu0 %v1190
    %1206 = vmatprep.subr.mxu0 0.0
    %1207 = vmatpush1.msra.mxu0 0.0
    %1208 = vmatprep.subr.mxu0 0.0
    %1209 = vmatpush1.msra.mxu0 0.0
    %1210 = vmatprep.subr.mxu0 0.0
    %1211 = vmatpush1.msra.mxu0 0.0
    %1212 = vmatprep.subr.mxu0 0.0
    %1213 = vmatpush1.msra.mxu0 0.0
    %1214 = vmatprep.subr.mxu0 0.0
    %1215 = vmatpush1.msra.mxu0 0.0
    %1216 = vmatprep.subr.mxu0 0.0
    %1217 = vmatpush1.msra.mxu0 0.0
    %1218 = vmatprep.subr.mxu0 0.0
    %1219 = vmatpush1.msra.mxu0 0.0
    %1220 = vmatprep.subr.mxu0 0.0
    %1221 = vmatpush1.msra.mxu0 0.0
    %1222 = vmatprep.subr.mxu0 0.0
    %1223 = vmatpush1.msra.mxu0 0.0
    %1224 = vmatprep.subr.mxu0 0.0
    %1225 = vmatpush1.msra.mxu0 0.0
    %1226 = vmatprep.subr.mxu0 0.0
    %1227 = vmatpush1.msra.mxu0 0.0
    %1228 = vmatprep.subr.mxu0 0.0
    %1229 = vmatpush1.msra.mxu0 0.0
    %1230 = vmatprep.subr.mxu0 0.0
    %1231 = vmatpush1.msra.mxu0 0.0
    %1232 = vmatprep.subr.mxu0 0.0
    %1233 = vmatpush1.msra.mxu0 0.0
    %1234 = vmatprep.subr.mxu0 0.0
    %1235 = vmatpush1.msra.mxu0 0.0
    %1236 = vmatprep.subr.mxu0 0.0
    %1237 = vmatpush1.msra.mxu0 0.0
    %1238 = vmatprep.subr.mxu0 0.0
    %1239 = vmatpush1.msra.mxu0 0.0
    %1240 = vmatprep.subr.mxu0 0.0
    %1241 = vmatpush1.msra.mxu0 0.0
    %1242 = vmatprep.subr.mxu0 0.0
    %1243 = vmatpush1.msra.mxu0 0.0
    %1244 = vmatprep.subr.mxu0 0.0
    %1245 = vmatpush1.msra.mxu0 0.0
    %1246 = vmatprep.subr.mxu0 0.0
    %1247 = vmatpush1.msra.mxu0 0.0
    %1248 = vmatprep.subr.mxu0 0.0
    %1249 = vmatpush1.msra.mxu0 0.0
    %1250 = vmatprep.subr.mxu0 0.0
    %1251 = vmatpush1.msra.mxu0 0.0
    %1252 = vmatprep.subr.mxu0 0.0
    %1253 = vmatpush1.msra.mxu0 0.0
    %1254 = vmatprep.subr.mxu0 0.0
    %1255 = vmatpush1.msra.mxu0 0.0
    %1256 = vmatprep.subr.mxu0 0.0
    %1257 = vmatpush1.msra.mxu0 0.0
    %1258 = vmatprep.subr.mxu0 0.0
    %1259 = vmatpush1.msra.mxu0 0.0
    %1260 = vmatprep.subr.mxu0 0.0
    %1261 = vmatpush1.msra.mxu0 0.0
    %1262 = vmatprep.subr.mxu0 0.0
    %1263 = vmatpush1.msra.mxu0 0.0
    %1264 = vmatprep.subr.mxu0 0.0
    %1265 = vmatpush1.msra.mxu0 0.0
    %1266 = vmatprep.mubr.f32.mxu0 0.0
    %1267 = vmatmul.mubr.f32.gmra.mrb[0].mxu0 %v1200
    %v1268 = vpop.f32.mrb[0].mxu0
    %v1269 = vadd.f32 %v1197, %v1268
    %v1270 = vpop.f32.mrb[0].mxu0
    %1271 = vdwg.mxu0
    %vm1272 = vcmp.gt.f32.partialorder %v1269, 0.0
    %v1273 = vmul.f32 %v1269, 0.01
    %v1274 = vsel %vm1272, %v1269, %v1273
    %s1275 = scalar_lea.vmem %s3, 192
    %v1276 = vld [vmem:[%s1275] sm:$0xff]
    %v1277 = vld [vmem:[%s1275 + $0x8] sm:$0xff]
    %v1278 = vld [vmem:[%s1275 + $0x10] sm:$0xff]
    %v1279 = vld [vmem:[%s1275 + $0x18] sm:$0xff]
    %s1280 = scalar_lea.vmem [#allocation8], 6
    %v1281 = vld [vmem:[%s1280] sm:$0x1]
    %v1283 = vlaneseq
    %v1284 = vshrl.u32 %v1283, 7
    %v1285 = vsub.s32 0, %v1284
    %v1286 = vrot.slane %v1281, %v1285
    %v1289 = vsel %vm237, %v1274, 0
    %1291 = vmatprep.subr.mxu0 0.0
    %1292 = vmatpush1.msra.mxu0 %v1276
    %1293 = vmatprep.subr.mxu0 0.0
    %1294 = vmatpush1.msra.mxu0 %v1277
    %1295 = vmatprep.subr.mxu0 0.0
    %1296 = vmatpush1.msra.mxu0 %v1278
    %1297 = vmatprep.subr.mxu0 0.0
    %1298 = vmatpush1.msra.mxu0 %v1279
    %1299 = vmatprep.subr.mxu0 0.0
    %1300 = vmatpush1.msra.mxu0 0.0
    %1301 = vmatprep.subr.mxu0 0.0
    %1302 = vmatpush1.msra.mxu0 0.0
    %1303 = vmatprep.subr.mxu0 0.0
    %1304 = vmatpush1.msra.mxu0 0.0
    %1305 = vmatprep.subr.mxu0 0.0
    %1306 = vmatpush1.msra.mxu0 0.0
    %1307 = vmatprep.subr.mxu0 0.0
    %1308 = vmatpush1.msra.mxu0 0.0
    %1309 = vmatprep.subr.mxu0 0.0
    %1310 = vmatpush1.msra.mxu0 0.0
    %1311 = vmatprep.subr.mxu0 0.0
    %1312 = vmatpush1.msra.mxu0 0.0
    %1313 = vmatprep.subr.mxu0 0.0
    %1314 = vmatpush1.msra.mxu0 0.0
    %1315 = vmatprep.subr.mxu0 0.0
    %1316 = vmatpush1.msra.mxu0 0.0
    %1317 = vmatprep.subr.mxu0 0.0
    %1318 = vmatpush1.msra.mxu0 0.0
    %1319 = vmatprep.subr.mxu0 0.0
    %1320 = vmatpush1.msra.mxu0 0.0
    %1321 = vmatprep.subr.mxu0 0.0
    %1322 = vmatpush1.msra.mxu0 0.0
    %1323 = vmatprep.subr.mxu0 0.0
    %1324 = vmatpush1.msra.mxu0 0.0
    %1325 = vmatprep.subr.mxu0 0.0
    %1326 = vmatpush1.msra.mxu0 0.0
    %1327 = vmatprep.subr.mxu0 0.0
    %1328 = vmatpush1.msra.mxu0 0.0
    %1329 = vmatprep.subr.mxu0 0.0
    %1330 = vmatpush1.msra.mxu0 0.0
    %1331 = vmatprep.subr.mxu0 0.0
    %1332 = vmatpush1.msra.mxu0 0.0
    %1333 = vmatprep.subr.mxu0 0.0
    %1334 = vmatpush1.msra.mxu0 0.0
    %1335 = vmatprep.subr.mxu0 0.0
    %1336 = vmatpush1.msra.mxu0 0.0
    %1337 = vmatprep.subr.mxu0 0.0
    %1338 = vmatpush1.msra.mxu0 0.0
    %1339 = vmatprep.subr.mxu0 0.0
    %1340 = vmatpush1.msra.mxu0 0.0
    %1341 = vmatprep.subr.mxu0 0.0
    %1342 = vmatpush1.msra.mxu0 0.0
    %1343 = vmatprep.subr.mxu0 0.0
    %1344 = vmatpush1.msra.mxu0 0.0
    %1345 = vmatprep.subr.mxu0 0.0
    %1346 = vmatpush1.msra.mxu0 0.0
    %1347 = vmatprep.subr.mxu0 0.0
    %1348 = vmatpush1.msra.mxu0 0.0
    %1349 = vmatprep.subr.mxu0 0.0
    %1350 = vmatpush1.msra.mxu0 0.0
    %1351 = vmatprep.subr.mxu0 0.0
    %1352 = vmatpush1.msra.mxu0 0.0
    %1353 = vmatprep.subr.mxu0 0.0
    %1354 = vmatpush1.msra.mxu0 0.0
    %1355 = vmatprep.mubr.f32.mxu0 0.0
    %1356 = vmatmul.mubr.f32.gmra.mrb[0].mxu0 %v1289
    %v1357 = vpop.f32.mrb[0].mxu0
    %v1358 = vadd.f32 %v1286, %v1357
    %v1359 = vpop.f32.mrb[0].mxu0
    %1360 = vdwg.mxu0
    %1361 = vst.msk [vmem:[#allocation2 + $0x30] sm:$0xff] %vm237, %v1358
    %1362 = vst.msk [vmem:[#allocation2 + $0x38] sm:$0xff] %vm237, 0.0
    %v1363 = vld [vmem:[%s5] sm:$0xff]
    %v1364 = vld [vmem:[%s5 + $0x8] sm:$0xff]
    %v1365 = vld [vmem:[%s5 + $0x10] sm:$0xff]
    %v1366 = vld [vmem:[%s5 + $0x18] sm:$0xff]
    %v1367 = vld [vmem:[%s5 + $0x20] sm:$0xff]
    %v1368 = vld [vmem:[%s5 + $0x28] sm:$0xff]
    %v1369 = vld [vmem:[%s5 + $0x30] sm:$0xff]
    %v1370 = vld [vmem:[%s5 + $0x38] sm:$0xff]
    %v1371 = vld [vmem:[#allocation9] sm:$0xff]
    %v1372 = vld [vmem:[#allocation9 + $0x8] sm:$0xff]
    %v1373 = vld [vmem:[#allocation9 + $0x10] sm:$0xff]
    %v1374 = vld [vmem:[#allocation9 + $0x18] sm:$0xff]
    %v1375 = vld [vmem:[#allocation9 + $0x20] sm:$0xff]
    %v1376 = vld [vmem:[#allocation9 + $0x28] sm:$0xff]
    %v1377 = vld [vmem:[#allocation9 + $0x30] sm:$0xff]
    %v1378 = vld [vmem:[#allocation9 + $0x38] sm:$0xff]
    %v1379 = vld [vmem:[%s7] sm:$0xff]
    %v1380 = vld [vmem:[%s7 + $0x8] sm:$0xff]
    %v1381 = vld [vmem:[%s7 + $0x10] sm:$0xff]
    %v1382 = vld [vmem:[%s7 + $0x18] sm:$0xff]
    %v1383 = vld [vmem:[%s7 + $0x20] sm:$0xff]
    %v1384 = vld [vmem:[%s7 + $0x28] sm:$0xff]
    %v1385 = vld [vmem:[%s7 + $0x30] sm:$0xff]
    %v1386 = vld [vmem:[%s7 + $0x38] sm:$0xff]
    %v1387 = vld [vmem:[%s8] sm:$0xff]
    %v1388 = vld [vmem:[%s8 + $0x8] sm:$0xff]
    %v1389 = vld [vmem:[%s8 + $0x10] sm:$0xff]
    %v1390 = vld [vmem:[%s8 + $0x18] sm:$0xff]
    %v1391 = vld [vmem:[%s8 + $0x20] sm:$0xff]
    %v1392 = vld [vmem:[%s8 + $0x28] sm:$0xff]
    %v1393 = vld [vmem:[%s8 + $0x30] sm:$0xff]
    %v1394 = vld [vmem:[%s8 + $0x38] sm:$0xff]
    %v1395 = vld [vmem:[#allocation2] sm:$0xff]
    %v1396 = vld [vmem:[#allocation2 + $0x8] sm:$0xff]
    %v1397 = vld [vmem:[#allocation2 + $0x10] sm:$0xff]
    %v1398 = vld [vmem:[#allocation2 + $0x18] sm:$0xff]
    %v1399 = vld [vmem:[#allocation2 + $0x20] sm:$0xff]
    %v1400 = vld [vmem:[#allocation2 + $0x28] sm:$0xff]
    %v1401 = vld [vmem:[#allocation2 + $0x30] sm:$0xff]
    %v1402 = vld [vmem:[#allocation2 + $0x38] sm:$0xff]
    %v1403 = vld [vmem:[#allocation11] sm:$0xff]
    %v1404 = vld [vmem:[#allocation11 + $0x8] sm:$0xff]
    %v1405 = vld [vmem:[#allocation11 + $0x10] sm:$0xff]
    %v1406 = vld [vmem:[#allocation11 + $0x18] sm:$0xff]
    %v1408 = vsel %vm237, %v1395, 0
    %v1411 = vsel %vm237, %v1396, 0
    %v1414 = vsel %vm237, %v1397, 0
    %v1417 = vsel %vm237, %v1398, 0
    %v1420 = vsel %vm237, %v1399, 0
    %v1423 = vsel %vm237, %v1400, 0
    %v1426 = vsel %vm237, %v1401, 0
    %v1429 = vsel %vm237, %v1402, 0
    %1431 = vmatprep.subr.mxu0 0.0
    %1432 = vmatpush1.msra.mxu0 %v1403
    %1433 = vmatprep.subr.mxu0 0.0
    %1434 = vmatpush1.msra.mxu0 %v1404
    %1435 = vmatprep.subr.mxu0 0.0
    %1436 = vmatpush1.msra.mxu0 %v1405
    %1437 = vmatprep.subr.mxu0 0.0
    %1438 = vmatpush1.msra.mxu0 %v1406
    %1439 = vmatprep.subr.mxu0 0.0
    %1440 = vmatpush1.msra.mxu0 0.0
    %1441 = vmatprep.subr.mxu0 0.0
    %1442 = vmatpush1.msra.mxu0 0.0
    %1443 = vmatprep.subr.mxu0 0.0
    %1444 = vmatpush1.msra.mxu0 0.0
    %1445 = vmatprep.subr.mxu0 0.0
    %1446 = vmatpush1.msra.mxu0 0.0
    %1447 = vmatprep.subr.mxu0 0.0
    %1448 = vmatpush1.msra.mxu0 0.0
    %1449 = vmatprep.subr.mxu0 0.0
    %1450 = vmatpush1.msra.mxu0 0.0
    %1451 = vmatprep.subr.mxu0 0.0
    %1452 = vmatpush1.msra.mxu0 0.0
    %1453 = vmatprep.subr.mxu0 0.0
    %1454 = vmatpush1.msra.mxu0 0.0
    %1455 = vmatprep.subr.mxu0 0.0
    %1456 = vmatpush1.msra.mxu0 0.0
    %1457 = vmatprep.subr.mxu0 0.0
    %1458 = vmatpush1.msra.mxu0 0.0
    %1459 = vmatprep.subr.mxu0 0.0
    %1460 = vmatpush1.msra.mxu0 0.0
    %1461 = vmatprep.subr.mxu0 0.0
    %1462 = vmatpush1.msra.mxu0 0.0
    %1463 = vmatprep.subr.mxu0 0.0
    %1464 = vmatpush1.msra.mxu0 0.0
    %1465 = vmatprep.subr.mxu0 0.0
    %1466 = vmatpush1.msra.mxu0 0.0
    %1467 = vmatprep.subr.mxu0 0.0
    %1468 = vmatpush1.msra.mxu0 0.0
    %1469 = vmatprep.subr.mxu0 0.0
    %1470 = vmatpush1.msra.mxu0 0.0
    %1471 = vmatprep.subr.mxu0 0.0
    %1472 = vmatpush1.msra.mxu0 0.0
    %1473 = vmatprep.subr.mxu0 0.0
    %1474 = vmatpush1.msra.mxu0 0.0
    %1475 = vmatprep.subr.mxu0 0.0
    %1476 = vmatpush1.msra.mxu0 0.0
    %1477 = vmatprep.subr.mxu0 0.0
    %1478 = vmatpush1.msra.mxu0 0.0
    %1479 = vmatprep.subr.mxu0 0.0
    %1480 = vmatpush1.msra.mxu0 0.0
    %1481 = vmatprep.subr.mxu0 0.0
    %1482 = vmatpush1.msra.mxu0 0.0
    %1483 = vmatprep.subr.mxu0 0.0
    %1484 = vmatpush1.msra.mxu0 0.0
    %1485 = vmatprep.subr.mxu0 0.0
    %1486 = vmatpush1.msra.mxu0 0.0
    %1487 = vmatprep.subr.mxu0 0.0
    %1488 = vmatpush1.msra.mxu0 0.0
    %1489 = vmatprep.subr.mxu0 0.0
    %1490 = vmatpush1.msra.mxu0 0.0
    %1491 = vmatprep.subr.mxu0 0.0
    %1492 = vmatpush1.msra.mxu0 0.0
    %1493 = vmatprep.subr.mxu0 0.0
    %1494 = vmatpush1.msra.mxu0 0.0
    %1495 = vmatprep.mubr.f32.mxu0 0.0
    %1496 = vmatmul.mubr.f32.gmra.mrb[0].mxu0 %v1408
    %v1497 = vpop.f32.mrb[0].mxu0
    %v1498 = vadd.f32 0.0, %v1497
    %v1499 = vpop.f32.mrb[0].mxu0
    %1500 = vmatprep.mubr.f32.mxu0 0.0
    %1501 = vmatmul.mubr.f32.gmra.mrb[0].mxu0 %v1411
    %v1502 = vpop.f32.mrb[0].mxu0
    %v1503 = vadd.f32 0.0, %v1502
    %v1504 = vpop.f32.mrb[0].mxu0
    %1505 = vmatprep.mubr.f32.mxu0 0.0
    %1506 = vmatmul.mubr.f32.gmra.mrb[0].mxu0 %v1414
    %v1507 = vpop.f32.mrb[0].mxu0
    %v1508 = vadd.f32 0.0, %v1507
    %v1509 = vpop.f32.mrb[0].mxu0
    %1510 = vmatprep.mubr.f32.mxu0 0.0
    %1511 = vmatmul.mubr.f32.gmra.mrb[0].mxu0 %v1417
    %v1512 = vpop.f32.mrb[0].mxu0
    %v1513 = vadd.f32 0.0, %v1512
    %v1514 = vpop.f32.mrb[0].mxu0
    %1515 = vmatprep.mubr.f32.mxu0 0.0
    %1516 = vmatmul.mubr.f32.gmra.mrb[0].mxu0 %v1420
    %v1517 = vpop.f32.mrb[0].mxu0
    %v1518 = vadd.f32 0.0, %v1517
    %v1519 = vpop.f32.mrb[0].mxu0
    %1520 = vmatprep.mubr.f32.mxu0 0.0
    %1521 = vmatmul.mubr.f32.gmra.mrb[0].mxu0 %v1423
    %v1522 = vpop.f32.mrb[0].mxu0
    %v1523 = vadd.f32 0.0, %v1522
    %v1524 = vpop.f32.mrb[0].mxu0
    %1525 = vmatprep.mubr.f32.mxu0 0.0
    %1526 = vmatmul.mubr.f32.gmra.mrb[0].mxu0 %v1426
    %v1527 = vpop.f32.mrb[0].mxu0
    %v1528 = vadd.f32 0.0, %v1527
    %v1529 = vpop.f32.mrb[0].mxu0
    %1530 = vmatprep.mubr.f32.mxu0 0.0
    %1531 = vmatmul.mubr.f32.gmra.mrb[0].mxu0 %v1429
    %v1532 = vpop.f32.mrb[0].mxu0
    %v1533 = vadd.f32 0.0, %v1532
    %v1534 = vpop.f32.mrb[0].mxu0
    %1535 = vdwg.mxu0
    %v1536 = vld [vmem:[#allocation12] sm:$0xff]
    %v1537 = vld [vmem:[#allocation12 + $0x8] sm:$0xff]
    %v1538 = vld [vmem:[#allocation12 + $0x10] sm:$0xff]
    %v1539 = vld [vmem:[#allocation12 + $0x18] sm:$0xff]
    %1540 = vmatprep.subr.mxu0 0.0
    %1541 = vmatpush1.msra.mxu0 %v1536
    %1542 = vmatprep.subr.mxu0 0.0
    %1543 = vmatpush1.msra.mxu0 %v1537
    %1544 = vmatprep.subr.mxu0 0.0
    %1545 = vmatpush1.msra.mxu0 %v1538
    %1546 = vmatprep.subr.mxu0 0.0
    %1547 = vmatpush1.msra.mxu0 %v1539
    %1548 = vmatprep.subr.mxu0 0.0
    %1549 = vmatpush1.msra.mxu0 0.0
    %1550 = vmatprep.subr.mxu0 0.0
    %1551 = vmatpush1.msra.mxu0 0.0
    %1552 = vmatprep.subr.mxu0 0.0
    %1553 = vmatpush1.msra.mxu0 0.0
    %1554 = vmatprep.subr.mxu0 0.0
    %1555 = vmatpush1.msra.mxu0 0.0
    %1556 = vmatprep.subr.mxu0 0.0
    %1557 = vmatpush1.msra.mxu0 0.0
    %1558 = vmatprep.subr.mxu0 0.0
    %1559 = vmatpush1.msra.mxu0 0.0
    %1560 = vmatprep.subr.mxu0 0.0
    %1561 = vmatpush1.msra.mxu0 0.0
    %1562 = vmatprep.subr.mxu0 0.0
    %1563 = vmatpush1.msra.mxu0 0.0
    %1564 = vmatprep.subr.mxu0 0.0
    %1565 = vmatpush1.msra.mxu0 0.0
    %1566 = vmatprep.subr.mxu0 0.0
    %1567 = vmatpush1.msra.mxu0 0.0
    %1568 = vmatprep.subr.mxu0 0.0
    %1569 = vmatpush1.msra.mxu0 0.0
    %1570 = vmatprep.subr.mxu0 0.0
    %1571 = vmatpush1.msra.mxu0 0.0
    %1572 = vmatprep.subr.mxu0 0.0
    %1573 = vmatpush1.msra.mxu0 0.0
    %1574 = vmatprep.subr.mxu0 0.0
    %1575 = vmatpush1.msra.mxu0 0.0
    %1576 = vmatprep.subr.mxu0 0.0
    %1577 = vmatpush1.msra.mxu0 0.0
    %1578 = vmatprep.subr.mxu0 0.0
    %1579 = vmatpush1.msra.mxu0 0.0
    %1580 = vmatprep.subr.mxu0 0.0
    %1581 = vmatpush1.msra.mxu0 0.0
    %1582 = vmatprep.subr.mxu0 0.0
    %1583 = vmatpush1.msra.mxu0 0.0
    %1584 = vmatprep.subr.mxu0 0.0
    %1585 = vmatpush1.msra.mxu0 0.0
    %1586 = vmatprep.subr.mxu0 0.0
    %1587 = vmatpush1.msra.mxu0 0.0
    %1588 = vmatprep.subr.mxu0 0.0
    %1589 = vmatpush1.msra.mxu0 0.0
    %1590 = vmatprep.subr.mxu0 0.0
    %1591 = vmatpush1.msra.mxu0 0.0
    %1592 = vmatprep.subr.mxu0 0.0
    %1593 = vmatpush1.msra.mxu0 0.0
    %1594 = vmatprep.subr.mxu0 0.0
    %1595 = vmatpush1.msra.mxu0 0.0
    %1596 = vmatprep.subr.mxu0 0.0
    %1597 = vmatpush1.msra.mxu0 0.0
    %1598 = vmatprep.subr.mxu0 0.0
    %1599 = vmatpush1.msra.mxu0 0.0
    %1600 = vmatprep.subr.mxu0 0.0
    %1601 = vmatpush1.msra.mxu0 0.0
    %1602 = vmatprep.subr.mxu0 0.0
    %1603 = vmatpush1.msra.mxu0 0.0
    %1604 = vmatprep.mubr.f32.mxu0 0.0
    %1605 = vmatmul.mubr.f32.gmra.mrb[0].mxu0 %v1408
    %v1606 = vpop.f32.mrb[0].mxu0
    %v1607 = vadd.f32 0.0, %v1606
    %v1608 = vpop.f32.mrb[0].mxu0
    %1609 = vmatprep.mubr.f32.mxu0 0.0
    %1610 = vmatmul.mubr.f32.gmra.mrb[0].mxu0 %v1411
    %v1611 = vpop.f32.mrb[0].mxu0
    %v1612 = vadd.f32 0.0, %v1611
    %v1613 = vpop.f32.mrb[0].mxu0
    %1614 = vmatprep.mubr.f32.mxu0 0.0
    %1615 = vmatmul.mubr.f32.gmra.mrb[0].mxu0 %v1414
    %v1616 = vpop.f32.mrb[0].mxu0
    %v1617 = vadd.f32 0.0, %v1616
    %v1618 = vpop.f32.mrb[0].mxu0
    %1619 = vmatprep.mubr.f32.mxu0 0.0
    %1620 = vmatmul.mubr.f32.gmra.mrb[0].mxu0 %v1417
    %v1621 = vpop.f32.mrb[0].mxu0
    %v1622 = vadd.f32 0.0, %v1621
    %v1623 = vpop.f32.mrb[0].mxu0
    %1624 = vmatprep.mubr.f32.mxu0 0.0
    %1625 = vmatmul.mubr.f32.gmra.mrb[0].mxu0 %v1420
    %v1626 = vpop.f32.mrb[0].mxu0
    %v1627 = vadd.f32 0.0, %v1626
    %v1628 = vpop.f32.mrb[0].mxu0
    %1629 = vmatprep.mubr.f32.mxu0 0.0
    %1630 = vmatmul.mubr.f32.gmra.mrb[0].mxu0 %v1423
    %v1631 = vpop.f32.mrb[0].mxu0
    %v1632 = vadd.f32 0.0, %v1631
    %v1633 = vpop.f32.mrb[0].mxu0
    %1634 = vmatprep.mubr.f32.mxu0 0.0
    %1635 = vmatmul.mubr.f32.gmra.mrb[0].mxu0 %v1426
    %v1636 = vpop.f32.mrb[0].mxu0
    %v1637 = vadd.f32 0.0, %v1636
    %v1638 = vpop.f32.mrb[0].mxu0
    %1639 = vmatprep.mubr.f32.mxu0 0.0
    %1640 = vmatmul.mubr.f32.gmra.mrb[0].mxu0 %v1429
    %v1641 = vpop.f32.mrb[0].mxu0
    %v1642 = vadd.f32 0.0, %v1641
    %v1643 = vpop.f32.mrb[0].mxu0
    %1644 = vdwg.mxu0
    %vm1645 = vcmask 523264
    %v1647 = vsel %vm1645, %v1371, 0
    %v1650 = vsel %vm1645, %v1372, 0
    %v1653 = vsel %vm1645, %v1373, 0
    %v1656 = vsel %vm1645, %v1374, 0
    %v1659 = vsel %vm1645, %v1375, 0
    %v1662 = vsel %vm1645, %v1376, 0
    %v1665 = vsel %vm1645, %v1377, 0
    %v1668 = vsel %vm1645, %v1378, 0
    %1670 = vmatprep.subr.mxu0 0.0
    %1671 = vmatpush1.msra.mxu0 %v1607
    %1672 = vmatprep.subr.mxu0 0.0
    %1673 = vmatpush1.msra.mxu0 %v1612
    %1674 = vmatprep.subr.mxu0 0.0
    %1675 = vmatpush1.msra.mxu0 %v1617
    %1676 = vmatprep.subr.mxu0 0.0
    %1677 = vmatpush1.msra.mxu0 %v1622
    %1678 = vmatprep.subr.mxu0 0.0
    %1679 = vmatpush1.msra.mxu0 %v1627
    %1680 = vmatprep.subr.mxu0 0.0
    %1681 = vmatpush1.msra.mxu0 %v1632
    %1682 = vmatprep.subr.mxu0 0.0
    %1683 = vmatpush1.msra.mxu0 %v1637
    %1684 = vmatprep.subr.mxu0 0.0
    %1685 = vmatpush1.msra.mxu0 %v1642
    %1686 = vmatprep.subr.mxu0 0.0
    %1687 = vmatpush1.msra.mxu0 0.0
    %1688 = vmatprep.subr.mxu0 0.0
    %1689 = vmatpush1.msra.mxu0 0.0
    %1690 = vmatprep.subr.mxu0 0.0
    %1691 = vmatpush1.msra.mxu0 0.0
    %1692 = vmatprep.subr.mxu0 0.0
    %1693 = vmatpush1.msra.mxu0 0.0
    %1694 = vmatprep.subr.mxu0 0.0
    %1695 = vmatpush1.msra.mxu0 0.0
    %1696 = vmatprep.subr.mxu0 0.0
    %1697 = vmatpush1.msra.mxu0 0.0
    %1698 = vmatprep.subr.mxu0 0.0
    %1699 = vmatpush1.msra.mxu0 0.0
    %1700 = vmatprep.subr.mxu0 0.0
    %1701 = vmatpush1.msra.mxu0 0.0
    %1702 = vmatprep.subr.mxu0 0.0
    %1703 = vmatpush1.msra.mxu0 0.0
    %1704 = vmatprep.subr.mxu0 0.0
    %1705 = vmatpush1.msra.mxu0 0.0
    %1706 = vmatprep.subr.mxu0 0.0
    %1707 = vmatpush1.msra.mxu0 0.0
    %1708 = vmatprep.subr.mxu0 0.0
    %1709 = vmatpush1.msra.mxu0 0.0
    %1710 = vmatprep.subr.mxu0 0.0
    %1711 = vmatpush1.msra.mxu0 0.0
    %1712 = vmatprep.subr.mxu0 0.0
    %1713 = vmatpush1.msra.mxu0 0.0
    %1714 = vmatprep.subr.mxu0 0.0
    %1715 = vmatpush1.msra.mxu0 0.0
    %1716 = vmatprep.subr.mxu0 0.0
    %1717 = vmatpush1.msra.mxu0 0.0
    %1718 = vmatprep.subr.mxu0 0.0
    %1719 = vmatpush1.msra.mxu0 0.0
    %1720 = vmatprep.subr.mxu0 0.0
    %1721 = vmatpush1.msra.mxu0 0.0
    %1722 = vmatprep.subr.mxu0 0.0
    %1723 = vmatpush1.msra.mxu0 0.0
    %1724 = vmatprep.subr.mxu0 0.0
    %1725 = vmatpush1.msra.mxu0 0.0
    %1726 = vmatprep.subr.mxu0 0.0
    %1727 = vmatpush1.msra.mxu0 0.0
    %1728 = vmatprep.subr.mxu0 0.0
    %1729 = vmatpush1.msra.mxu0 0.0
    %1730 = vmatprep.subr.mxu0 0.0
    %1731 = vmatpush1.msra.mxu0 0.0
    %1732 = vmatprep.subr.mxu0 0.0
    %1733 = vmatpush1.msra.mxu0 0.0
    %1734 = vmatprep.mubr.f32.mxu0 0.0
    %1735 = vmatmul.mubr.f32.gmra.mrb[0].mxu0 %v1647
    %v1736 = vpop.f32.mrb[0].mxu0
    %v1737 = vadd.f32 0.0, %v1736
    %v1738 = vpop.f32.mrb[0].mxu0
    %1739 = vmatprep.mubr.f32.mxu0 0.0
    %1740 = vmatmul.mubr.f32.gmra.mrb[0].mxu0 %v1650
    %v1741 = vpop.f32.mrb[0].mxu0
    %v1742 = vadd.f32 0.0, %v1741
    %v1743 = vpop.f32.mrb[0].mxu0
    %1744 = vmatprep.mubr.f32.mxu0 0.0
    %1745 = vmatmul.mubr.f32.gmra.mrb[0].mxu0 %v1653
    %v1746 = vpop.f32.mrb[0].mxu0
    %v1747 = vadd.f32 0.0, %v1746
    %v1748 = vpop.f32.mrb[0].mxu0
    %1749 = vmatprep.mubr.f32.mxu0 0.0
    %1750 = vmatmul.mubr.f32.gmra.mrb[0].mxu0 %v1656
    %v1751 = vpop.f32.mrb[0].mxu0
    %v1752 = vadd.f32 0.0, %v1751
    %v1753 = vpop.f32.mrb[0].mxu0
    %1754 = vmatprep.mubr.f32.mxu0 0.0
    %1755 = vmatmul.mubr.f32.gmra.mrb[0].mxu0 %v1659
    %v1756 = vpop.f32.mrb[0].mxu0
    %v1757 = vadd.f32 0.0, %v1756
    %v1758 = vpop.f32.mrb[0].mxu0
    %1759 = vmatprep.mubr.f32.mxu0 0.0
    %1760 = vmatmul.mubr.f32.gmra.mrb[0].mxu0 %v1662
    %v1761 = vpop.f32.mrb[0].mxu0
    %v1762 = vadd.f32 0.0, %v1761
    %v1763 = vpop.f32.mrb[0].mxu0
    %1764 = vmatprep.mubr.f32.mxu0 0.0
    %1765 = vmatmul.mubr.f32.gmra.mrb[0].mxu0 %v1665
    %v1766 = vpop.f32.mrb[0].mxu0
    %v1767 = vadd.f32 0.0, %v1766
    %v1768 = vpop.f32.mrb[0].mxu0
    %1769 = vmatprep.mubr.f32.mxu0 0.0
    %1770 = vmatmul.mubr.f32.gmra.mrb[0].mxu0 %v1668
    %v1771 = vpop.f32.mrb[0].mxu0
    %v1772 = vadd.f32 0.0, %v1771
    %v1773 = vpop.f32.mrb[0].mxu0
    %1774 = vdwg.mxu0
    %v1776 = vsel %vm1645, %v1363, 0
    %v1779 = vsel %vm1645, %v1364, 0
    %v1782 = vsel %vm1645, %v1365, 0
    %v1785 = vsel %vm1645, %v1366, 0
    %v1788 = vsel %vm1645, %v1367, 0
    %v1791 = vsel %vm1645, %v1368, 0
    %v1794 = vsel %vm1645, %v1369, 0
    %v1797 = vsel %vm1645, %v1370, 0
    %1799 = vmatprep.subr.mxu0 0.0
    %1800 = vmatpush1.msra.mxu0 %v1498
    %1801 = vmatprep.subr.mxu0 0.0
    %1802 = vmatpush1.msra.mxu0 %v1503
    %1803 = vmatprep.subr.mxu0 0.0
    %1804 = vmatpush1.msra.mxu0 %v1508
    %1805 = vmatprep.subr.mxu0 0.0
    %1806 = vmatpush1.msra.mxu0 %v1513
    %1807 = vmatprep.subr.mxu0 0.0
    %1808 = vmatpush1.msra.mxu0 %v1518
    %1809 = vmatprep.subr.mxu0 0.0
    %1810 = vmatpush1.msra.mxu0 %v1523
    %1811 = vmatprep.subr.mxu0 0.0
    %1812 = vmatpush1.msra.mxu0 %v1528
    %1813 = vmatprep.subr.mxu0 0.0
    %1814 = vmatpush1.msra.mxu0 %v1533
    %1815 = vmatprep.subr.mxu0 0.0
    %1816 = vmatpush1.msra.mxu0 0.0
    %1817 = vmatprep.subr.mxu0 0.0
    %1818 = vmatpush1.msra.mxu0 0.0
    %1819 = vmatprep.subr.mxu0 0.0
    %1820 = vmatpush1.msra.mxu0 0.0
    %1821 = vmatprep.subr.mxu0 0.0
    %1822 = vmatpush1.msra.mxu0 0.0
    %1823 = vmatprep.subr.mxu0 0.0
    %1824 = vmatpush1.msra.mxu0 0.0
    %1825 = vmatprep.subr.mxu0 0.0
    %1826 = vmatpush1.msra.mxu0 0.0
    %1827 = vmatprep.subr.mxu0 0.0
    %1828 = vmatpush1.msra.mxu0 0.0
    %1829 = vmatprep.subr.mxu0 0.0
    %1830 = vmatpush1.msra.mxu0 0.0
    %1831 = vmatprep.subr.mxu0 0.0
    %1832 = vmatpush1.msra.mxu0 0.0
    %1833 = vmatprep.subr.mxu0 0.0
    %1834 = vmatpush1.msra.mxu0 0.0
    %1835 = vmatprep.subr.mxu0 0.0
    %1836 = vmatpush1.msra.mxu0 0.0
    %1837 = vmatprep.subr.mxu0 0.0
    %1838 = vmatpush1.msra.mxu0 0.0
    %1839 = vmatprep.subr.mxu0 0.0
    %1840 = vmatpush1.msra.mxu0 0.0
    %1841 = vmatprep.subr.mxu0 0.0
    %1842 = vmatpush1.msra.mxu0 0.0
    %1843 = vmatprep.subr.mxu0 0.0
    %1844 = vmatpush1.msra.mxu0 0.0
    %1845 = vmatprep.subr.mxu0 0.0
    %1846 = vmatpush1.msra.mxu0 0.0
    %1847 = vmatprep.subr.mxu0 0.0
    %1848 = vmatpush1.msra.mxu0 0.0
    %1849 = vmatprep.subr.mxu0 0.0
    %1850 = vmatpush1.msra.mxu0 0.0
    %1851 = vmatprep.subr.mxu0 0.0
    %1852 = vmatpush1.msra.mxu0 0.0
    %1853 = vmatprep.subr.mxu0 0.0
    %1854 = vmatpush1.msra.mxu0 0.0
    %1855 = vmatprep.subr.mxu0 0.0
    %1856 = vmatpush1.msra.mxu0 0.0
    %1857 = vmatprep.subr.mxu0 0.0
    %1858 = vmatpush1.msra.mxu0 0.0
    %1859 = vmatprep.subr.mxu0 0.0
    %1860 = vmatpush1.msra.mxu0 0.0
    %1861 = vmatprep.subr.mxu0 0.0
    %1862 = vmatpush1.msra.mxu0 0.0
    %1863 = vmatprep.mubr.f32.mxu0 0.0
    %1864 = vmatmul.mubr.f32.gmra.mrb[0].mxu0 %v1776
    %v1865 = vpop.f32.mrb[0].mxu0
    %v1866 = vadd.f32 %v1737, %v1865
    %v1867 = vpop.f32.mrb[0].mxu0
    %1868 = vmatprep.mubr.f32.mxu0 0.0
    %1869 = vmatmul.mubr.f32.gmra.mrb[0].mxu0 %v1779
    %v1870 = vpop.f32.mrb[0].mxu0
    %v1871 = vadd.f32 %v1742, %v1870
    %v1872 = vpop.f32.mrb[0].mxu0
    %1873 = vmatprep.mubr.f32.mxu0 0.0
    %1874 = vmatmul.mubr.f32.gmra.mrb[0].mxu0 %v1782
    %v1875 = vpop.f32.mrb[0].mxu0
    %v1876 = vadd.f32 %v1747, %v1875
    %v1877 = vpop.f32.mrb[0].mxu0
    %1878 = vmatprep.mubr.f32.mxu0 0.0
    %1879 = vmatmul.mubr.f32.gmra.mrb[0].mxu0 %v1785
    %v1880 = vpop.f32.mrb[0].mxu0
    %v1881 = vadd.f32 %v1752, %v1880
    %v1882 = vpop.f32.mrb[0].mxu0
    %1883 = vmatprep.mubr.f32.mxu0 0.0
    %1884 = vmatmul.mubr.f32.gmra.mrb[0].mxu0 %v1788
    %v1885 = vpop.f32.mrb[0].mxu0
    %v1886 = vadd.f32 %v1757, %v1885
    %v1887 = vpop.f32.mrb[0].mxu0
    %1888 = vmatprep.mubr.f32.mxu0 0.0
    %1889 = vmatmul.mubr.f32.gmra.mrb[0].mxu0 %v1791
    %v1890 = vpop.f32.mrb[0].mxu0
    %v1891 = vadd.f32 %v1762, %v1890
    %v1892 = vpop.f32.mrb[0].mxu0
    %1893 = vmatprep.mubr.f32.mxu0 0.0
    %1894 = vmatmul.mubr.f32.gmra.mrb[0].mxu0 %v1794
    %v1895 = vpop.f32.mrb[0].mxu0
    %v1896 = vadd.f32 %v1767, %v1895
    %v1897 = vpop.f32.mrb[0].mxu0
    %1898 = vmatprep.mubr.f32.mxu0 0.0
    %1899 = vmatmul.mubr.f32.gmra.mrb[0].mxu0 %v1797
    %v1900 = vpop.f32.mrb[0].mxu0
    %v1901 = vadd.f32 %v1772, %v1900
    %v1902 = vpop.f32.mrb[0].mxu0
    %1903 = vdwg.mxu0
    %v1904 = vld [vmem:[%s10] sm:$0x1]
    %1906 = vset.pattern.permute.xlu0 0
    %1907 = vperm.xlu0 %1906, %v1379
    %v1908 = vpop.permute.xlu0 %1907
    %1911 = vset.pattern.permute.xlu0 0
    %1912 = vperm.xlu0 %1911, %v1380
    %v1913 = vpop.permute.xlu0 %1912
    %1916 = vset.pattern.permute.xlu0 0
    %1917 = vperm.xlu0 %1916, %v1381
    %v1918 = vpop.permute.xlu0 %1917
    %1921 = vset.pattern.permute.xlu0 0
    %1922 = vperm.xlu0 %1921, %v1382
    %v1923 = vpop.permute.xlu0 %1922
    %1926 = vset.pattern.permute.xlu0 0
    %1927 = vperm.xlu0 %1926, %v1383
    %v1928 = vpop.permute.xlu0 %1927
    %1931 = vset.pattern.permute.xlu0 0
    %1932 = vperm.xlu0 %1931, %v1384
    %v1933 = vpop.permute.xlu0 %1932
    %1936 = vset.pattern.permute.xlu0 0
    %1937 = vperm.xlu0 %1936, %v1385
    %v1938 = vpop.permute.xlu0 %1937
    %1941 = vset.pattern.permute.xlu0 0
    %1942 = vperm.xlu0 %1941, %v1386
    %v1943 = vpop.permute.xlu0 %1942
    %v1946 = vlaneseq
    %v1947 = vshrl.u32 %v1946, 7
    %v1948 = vsub.s32 0, %v1947
    %v1949 = vrot.slane %v1904, %v1948
    %v1951 = vmul.f32 %v1908, %v1949
    %v1952 = vmul.f32 %v1913, %v1949
    %v1953 = vmul.f32 %v1918, %v1949
    %v1954 = vmul.f32 %v1923, %v1949
    %v1955 = vmul.f32 %v1928, %v1949
    %v1956 = vmul.f32 %v1933, %v1949
    %v1957 = vmul.f32 %v1938, %v1949
    %v1958 = vmul.f32 %v1943, %v1949
    %v1959 = vadd.f32 %v1866, %v1951
    %v1960 = vadd.f32 %v1871, %v1952
    %v1961 = vadd.f32 %v1876, %v1953
    %v1962 = vadd.f32 %v1881, %v1954
    %v1963 = vadd.f32 %v1886, %v1955
    %v1964 = vadd.f32 %v1891, %v1956
    %v1965 = vadd.f32 %v1896, %v1957
    %v1966 = vadd.f32 %v1901, %v1958
    %v1967 = vld [vmem:[%s12] sm:$0x1]
    %1969 = vset.pattern.permute.xlu0 0
    %1970 = vperm.xlu0 %1969, %v1387
    %v1971 = vpop.permute.xlu0 %1970
    %1974 = vset.pattern.permute.xlu0 0
    %1975 = vperm.xlu0 %1974, %v1388
    %v1976 = vpop.permute.xlu0 %1975
    %1979 = vset.pattern.permute.xlu0 0
    %1980 = vperm.xlu0 %1979, %v1389
    %v1981 = vpop.permute.xlu0 %1980
    %1984 = vset.pattern.permute.xlu0 0
    %1985 = vperm.xlu0 %1984, %v1390
    %v1986 = vpop.permute.xlu0 %1985
    %1989 = vset.pattern.permute.xlu0 0
    %1990 = vperm.xlu0 %1989, %v1391
    %v1991 = vpop.permute.xlu0 %1990
    %1994 = vset.pattern.permute.xlu0 0
    %1995 = vperm.xlu0 %1994, %v1392
    %v1996 = vpop.permute.xlu0 %1995
    %1999 = vset.pattern.permute.xlu0 0
    %2000 = vperm.xlu0 %1999, %v1393
    %v2001 = vpop.permute.xlu0 %2000
    %2004 = vset.pattern.permute.xlu0 0
    %2005 = vperm.xlu0 %2004, %v1394
    %v2006 = vpop.permute.xlu0 %2005
    %v2009 = vlaneseq
    %v2010 = vshrl.u32 %v2009, 7
    %v2011 = vsub.s32 0, %v2010
    %v2012 = vrot.slane %v1967, %v2011
    %v2014 = vmul.f32 %v1971, %v2012
    %v2015 = vmul.f32 %v1976, %v2012
    %v2016 = vmul.f32 %v1981, %v2012
    %v2017 = vmul.f32 %v1986, %v2012
    %v2018 = vmul.f32 %v1991, %v2012
    %v2019 = vmul.f32 %v1996, %v2012
    %v2020 = vmul.f32 %v2001, %v2012
    %v2021 = vmul.f32 %v2006, %v2012
    %v2022 = vadd.f32 %v1959, %v2014
    %v2023 = vadd.f32 %v1960, %v2015
    %v2024 = vadd.f32 %v1961, %v2016
    %v2025 = vadd.f32 %v1962, %v2017
    %v2026 = vadd.f32 %v1963, %v2018
    %v2027 = vadd.f32 %v1964, %v2019
    %v2028 = vadd.f32 %v1965, %v2020
    %v2029 = vadd.f32 %v1966, %v2021
    %vm2030 = vcmp.gt.f32.partialorder %v2022, 0.0
    %vm2031 = vcmp.gt.f32.partialorder %v2023, 0.0
    %vm2032 = vcmp.gt.f32.partialorder %v2024, 0.0
    %vm2033 = vcmp.gt.f32.partialorder %v2025, 0.0
    %vm2034 = vcmp.gt.f32.partialorder %v2026, 0.0
    %vm2035 = vcmp.gt.f32.partialorder %v2027, 0.0
    %vm2036 = vcmp.gt.f32.partialorder %v2028, 0.0
    %vm2037 = vcmp.gt.f32.partialorder %v2029, 0.0
    %v2038 = vmul.f32 %v2022, 0.01
    %v2039 = vmul.f32 %v2023, 0.01
    %v2040 = vmul.f32 %v2024, 0.01
    %v2041 = vmul.f32 %v2025, 0.01
    %v2042 = vmul.f32 %v2026, 0.01
    %v2043 = vmul.f32 %v2027, 0.01
    %v2044 = vmul.f32 %v2028, 0.01
    %v2045 = vmul.f32 %v2029, 0.01
    %v2046 = vsel %vm2030, %v2022, %v2038
    %v2047 = vsel %vm2031, %v2023, %v2039
    %v2048 = vsel %vm2032, %v2024, %v2040
    %v2049 = vsel %vm2033, %v2025, %v2041
    %v2050 = vsel %vm2034, %v2026, %v2042
    %v2051 = vsel %vm2035, %v2027, %v2043
    %v2052 = vsel %vm2036, %v2028, %v2044
    %v2053 = vsel %vm2037, %v2029, %v2045
    %2054 = vst.msk [vmem:[#allocation2] sm:$0xff] %vm237, %v2046
    %2055 = vst.msk [vmem:[#allocation2 + $0x8] sm:$0xff] %vm237, %v2047
    %2056 = vst.msk [vmem:[#allocation2 + $0x10] sm:$0xff] %vm237, %v2048
    %2057 = vst.msk [vmem:[#allocation2 + $0x18] sm:$0xff] %vm237, %v2049
    %2058 = vst.msk [vmem:[#allocation2 + $0x20] sm:$0xff] %vm237, %v2050
    %2059 = vst.msk [vmem:[#allocation2 + $0x28] sm:$0xff] %vm237, %v2051
    %2060 = vst.msk [vmem:[#allocation2 + $0x30] sm:$0xff] %vm237, %v2052
    %2061 = vst.msk [vmem:[#allocation2 + $0x38] sm:$0xff] %vm237, %v2053
    %v2062 = vld [vmem:[#allocation2] sm:$0xff]
    %v2063 = vld [vmem:[#allocation2 + $0x8] sm:$0xff]
    %v2064 = vld [vmem:[#allocation2 + $0x10] sm:$0xff]
    %v2065 = vld [vmem:[#allocation2 + $0x18] sm:$0xff]
    %v2066 = vld [vmem:[#allocation2 + $0x20] sm:$0xff]
    %v2067 = vld [vmem:[#allocation2 + $0x28] sm:$0xff]
    %v2068 = vld [vmem:[#allocation2 + $0x30] sm:$0xff]
    %v2069 = vld [vmem:[#allocation2 + $0x38] sm:$0xff]
    %s2070 = scalar_lea.vmem [#allocation11], 32
    %v2071 = vld [vmem:[%s2070] sm:$0xff]
    %v2072 = vld [vmem:[%s2070 + $0x8] sm:$0xff]
    %v2073 = vld [vmem:[%s2070 + $0x10] sm:$0xff]
    %v2074 = vld [vmem:[%s2070 + $0x18] sm:$0xff]
    %v2076 = vsel %vm237, %v2062, 0
    %v2079 = vsel %vm237, %v2063, 0
    %v2082 = vsel %vm237, %v2064, 0
    %v2085 = vsel %vm237, %v2065, 0
    %v2088 = vsel %vm237, %v2066, 0
    %v2091 = vsel %vm237, %v2067, 0
    %v2094 = vsel %vm237, %v2068, 0
    %v2097 = vsel %vm237, %v2069, 0
    %2099 = vmatprep.subr.mxu0 0.0
    %2100 = vmatpush1.msra.mxu0 %v2071
    %2101 = vmatprep.subr.mxu0 0.0
    %2102 = vmatpush1.msra.mxu0 %v2072
    %2103 = vmatprep.subr.mxu0 0.0
    %2104 = vmatpush1.msra.mxu0 %v2073
    %2105 = vmatprep.subr.mxu0 0.0
    %2106 = vmatpush1.msra.mxu0 %v2074
    %2107 = vmatprep.subr.mxu0 0.0
    %2108 = vmatpush1.msra.mxu0 0.0
    %2109 = vmatprep.subr.mxu0 0.0
    %2110 = vmatpush1.msra.mxu0 0.0
    %2111 = vmatprep.subr.mxu0 0.0
    %2112 = vmatpush1.msra.mxu0 0.0
    %2113 = vmatprep.subr.mxu0 0.0
    %2114 = vmatpush1.msra.mxu0 0.0
    %2115 = vmatprep.subr.mxu0 0.0
    %2116 = vmatpush1.msra.mxu0 0.0
    %2117 = vmatprep.subr.mxu0 0.0
    %2118 = vmatpush1.msra.mxu0 0.0
    %2119 = vmatprep.subr.mxu0 0.0
    %2120 = vmatpush1.msra.mxu0 0.0
    %2121 = vmatprep.subr.mxu0 0.0
    %2122 = vmatpush1.msra.mxu0 0.0
    %2123 = vmatprep.subr.mxu0 0.0
    %2124 = vmatpush1.msra.mxu0 0.0
    %2125 = vmatprep.subr.mxu0 0.0
    %2126 = vmatpush1.msra.mxu0 0.0
    %2127 = vmatprep.subr.mxu0 0.0
    %2128 = vmatpush1.msra.mxu0 0.0
    %2129 = vmatprep.subr.mxu0 0.0
    %2130 = vmatpush1.msra.mxu0 0.0
    %2131 = vmatprep.subr.mxu0 0.0
    %2132 = vmatpush1.msra.mxu0 0.0
    %2133 = vmatprep.subr.mxu0 0.0
    %2134 = vmatpush1.msra.mxu0 0.0
    %2135 = vmatprep.subr.mxu0 0.0
    %2136 = vmatpush1.msra.mxu0 0.0
    %2137 = vmatprep.subr.mxu0 0.0
    %2138 = vmatpush1.msra.mxu0 0.0
    %2139 = vmatprep.subr.mxu0 0.0
    %2140 = vmatpush1.msra.mxu0 0.0
    %2141 = vmatprep.subr.mxu0 0.0
    %2142 = vmatpush1.msra.mxu0 0.0
    %2143 = vmatprep.subr.mxu0 0.0
    %2144 = vmatpush1.msra.mxu0 0.0
    %2145 = vmatprep.subr.mxu0 0.0
    %2146 = vmatpush1.msra.mxu0 0.0
    %2147 = vmatprep.subr.mxu0 0.0
    %2148 = vmatpush1.msra.mxu0 0.0
    %2149 = vmatprep.subr.mxu0 0.0
    %2150 = vmatpush1.msra.mxu0 0.0
    %2151 = vmatprep.subr.mxu0 0.0
    %2152 = vmatpush1.msra.mxu0 0.0
    %2153 = vmatprep.subr.mxu0 0.0
    %2154 = vmatpush1.msra.mxu0 0.0
    %2155 = vmatprep.subr.mxu0 0.0
    %2156 = vmatpush1.msra.mxu0 0.0
    %2157 = vmatprep.subr.mxu0 0.0
    %2158 = vmatpush1.msra.mxu0 0.0
    %2159 = vmatprep.subr.mxu0 0.0
    %2160 = vmatpush1.msra.mxu0 0.0
    %2161 = vmatprep.subr.mxu0 0.0
    %2162 = vmatpush1.msra.mxu0 0.0
    %2163 = vmatprep.mubr.f32.mxu0 0.0
    %2164 = vmatmul.mubr.f32.gmra.mrb[0].mxu0 %v2076
    %v2165 = vpop.f32.mrb[0].mxu0
    %v2166 = vadd.f32 0.0, %v2165
    %v2167 = vpop.f32.mrb[0].mxu0
    %2168 = vmatprep.mubr.f32.mxu0 0.0
    %2169 = vmatmul.mubr.f32.gmra.mrb[0].mxu0 %v2079
    %v2170 = vpop.f32.mrb[0].mxu0
    %v2171 = vadd.f32 0.0, %v2170
    %v2172 = vpop.f32.mrb[0].mxu0
    %2173 = vmatprep.mubr.f32.mxu0 0.0
    %2174 = vmatmul.mubr.f32.gmra.mrb[0].mxu0 %v2082
    %v2175 = vpop.f32.mrb[0].mxu0
    %v2176 = vadd.f32 0.0, %v2175
    %v2177 = vpop.f32.mrb[0].mxu0
    %2178 = vmatprep.mubr.f32.mxu0 0.0
    %2179 = vmatmul.mubr.f32.gmra.mrb[0].mxu0 %v2085
    %v2180 = vpop.f32.mrb[0].mxu0
    %v2181 = vadd.f32 0.0, %v2180
    %v2182 = vpop.f32.mrb[0].mxu0
    %2183 = vmatprep.mubr.f32.mxu0 0.0
    %2184 = vmatmul.mubr.f32.gmra.mrb[0].mxu0 %v2088
    %v2185 = vpop.f32.mrb[0].mxu0
    %v2186 = vadd.f32 0.0, %v2185
    %v2187 = vpop.f32.mrb[0].mxu0
    %2188 = vmatprep.mubr.f32.mxu0 0.0
    %2189 = vmatmul.mubr.f32.gmra.mrb[0].mxu0 %v2091
    %v2190 = vpop.f32.mrb[0].mxu0
    %v2191 = vadd.f32 0.0, %v2190
    %v2192 = vpop.f32.mrb[0].mxu0
    %2193 = vmatprep.mubr.f32.mxu0 0.0
    %2194 = vmatmul.mubr.f32.gmra.mrb[0].mxu0 %v2094
    %v2195 = vpop.f32.mrb[0].mxu0
    %v2196 = vadd.f32 0.0, %v2195
    %v2197 = vpop.f32.mrb[0].mxu0
    %2198 = vmatprep.mubr.f32.mxu0 0.0
    %2199 = vmatmul.mubr.f32.gmra.mrb[0].mxu0 %v2097
    %v2200 = vpop.f32.mrb[0].mxu0
    %v2201 = vadd.f32 0.0, %v2200
    %v2202 = vpop.f32.mrb[0].mxu0
    %2203 = vdwg.mxu0
    %s2204 = scalar_lea.vmem [#allocation12], 32
    %v2205 = vld [vmem:[%s2204] sm:$0xff]
    %v2206 = vld [vmem:[%s2204 + $0x8] sm:$0xff]
    %v2207 = vld [vmem:[%s2204 + $0x10] sm:$0xff]
    %v2208 = vld [vmem:[%s2204 + $0x18] sm:$0xff]
    %2209 = vmatprep.subr.mxu0 0.0
    %2210 = vmatpush1.msra.mxu0 %v2205
    %2211 = vmatprep.subr.mxu0 0.0
    %2212 = vmatpush1.msra.mxu0 %v2206
    %2213 = vmatprep.subr.mxu0 0.0
    %2214 = vmatpush1.msra.mxu0 %v2207
    %2215 = vmatprep.subr.mxu0 0.0
    %2216 = vmatpush1.msra.mxu0 %v2208
    %2217 = vmatprep.subr.mxu0 0.0
    %2218 = vmatpush1.msra.mxu0 0.0
    %2219 = vmatprep.subr.mxu0 0.0
    %2220 = vmatpush1.msra.mxu0 0.0
    %2221 = vmatprep.subr.mxu0 0.0
    %2222 = vmatpush1.msra.mxu0 0.0
    %2223 = vmatprep.subr.mxu0 0.0
    %2224 = vmatpush1.msra.mxu0 0.0
    %2225 = vmatprep.subr.mxu0 0.0
    %2226 = vmatpush1.msra.mxu0 0.0
    %2227 = vmatprep.subr.mxu0 0.0
    %2228 = vmatpush1.msra.mxu0 0.0
    %2229 = vmatprep.subr.mxu0 0.0
    %2230 = vmatpush1.msra.mxu0 0.0
    %2231 = vmatprep.subr.mxu0 0.0
    %2232 = vmatpush1.msra.mxu0 0.0
    %2233 = vmatprep.subr.mxu0 0.0
    %2234 = vmatpush1.msra.mxu0 0.0
    %2235 = vmatprep.subr.mxu0 0.0
    %2236 = vmatpush1.msra.mxu0 0.0
    %2237 = vmatprep.subr.mxu0 0.0
    %2238 = vmatpush1.msra.mxu0 0.0
    %2239 = vmatprep.subr.mxu0 0.0
    %2240 = vmatpush1.msra.mxu0 0.0
    %2241 = vmatprep.subr.mxu0 0.0
    %2242 = vmatpush1.msra.mxu0 0.0
    %2243 = vmatprep.subr.mxu0 0.0
    %2244 = vmatpush1.msra.mxu0 0.0
    %2245 = vmatprep.subr.mxu0 0.0
    %2246 = vmatpush1.msra.mxu0 0.0
    %2247 = vmatprep.subr.mxu0 0.0
    %2248 = vmatpush1.msra.mxu0 0.0
    %2249 = vmatprep.subr.mxu0 0.0
    %2250 = vmatpush1.msra.mxu0 0.0
    %2251 = vmatprep.subr.mxu0 0.0
    %2252 = vmatpush1.msra.mxu0 0.0
    %2253 = vmatprep.subr.mxu0 0.0
    %2254 = vmatpush1.msra.mxu0 0.0
    %2255 = vmatprep.subr.mxu0 0.0
    %2256 = vmatpush1.msra.mxu0 0.0
    %2257 = vmatprep.subr.mxu0 0.0
    %2258 = vmatpush1.msra.mxu0 0.0
    %2259 = vmatprep.subr.mxu0 0.0
    %2260 = vmatpush1.msra.mxu0 0.0
    %2261 = vmatprep.subr.mxu0 0.0
    %2262 = vmatpush1.msra.mxu0 0.0
    %2263 = vmatprep.subr.mxu0 0.0
    %2264 = vmatpush1.msra.mxu0 0.0
    %2265 = vmatprep.subr.mxu0 0.0
    %2266 = vmatpush1.msra.mxu0 0.0
    %2267 = vmatprep.subr.mxu0 0.0
    %2268 = vmatpush1.msra.mxu0 0.0
    %2269 = vmatprep.subr.mxu0 0.0
    %2270 = vmatpush1.msra.mxu0 0.0
    %2271 = vmatprep.subr.mxu0 0.0
    %2272 = vmatpush1.msra.mxu0 0.0
    %2273 = vmatprep.mubr.f32.mxu0 0.0
    %2274 = vmatmul.mubr.f32.gmra.mrb[0].mxu0 %v2076
    %v2275 = vpop.f32.mrb[0].mxu0
    %v2276 = vadd.f32 0.0, %v2275
    %v2277 = vpop.f32.mrb[0].mxu0
    %2278 = vmatprep.mubr.f32.mxu0 0.0
    %2279 = vmatmul.mubr.f32.gmra.mrb[0].mxu0 %v2079
    %v2280 = vpop.f32.mrb[0].mxu0
    %v2281 = vadd.f32 0.0, %v2280
    %v2282 = vpop.f32.mrb[0].mxu0
    %2283 = vmatprep.mubr.f32.mxu0 0.0
    %2284 = vmatmul.mubr.f32.gmra.mrb[0].mxu0 %v2082
    %v2285 = vpop.f32.mrb[0].mxu0
    %v2286 = vadd.f32 0.0, %v2285
    %v2287 = vpop.f32.mrb[0].mxu0
    %2288 = vmatprep.mubr.f32.mxu0 0.0
    %2289 = vmatmul.mubr.f32.gmra.mrb[0].mxu0 %v2085
    %v2290 = vpop.f32.mrb[0].mxu0
    %v2291 = vadd.f32 0.0, %v2290
    %v2292 = vpop.f32.mrb[0].mxu0
    %2293 = vmatprep.mubr.f32.mxu0 0.0
    %2294 = vmatmul.mubr.f32.gmra.mrb[0].mxu0 %v2088
    %v2295 = vpop.f32.mrb[0].mxu0
    %v2296 = vadd.f32 0.0, %v2295
    %v2297 = vpop.f32.mrb[0].mxu0
    %2298 = vmatprep.mubr.f32.mxu0 0.0
    %2299 = vmatmul.mubr.f32.gmra.mrb[0].mxu0 %v2091
    %v2300 = vpop.f32.mrb[0].mxu0
    %v2301 = vadd.f32 0.0, %v2300
    %v2302 = vpop.f32.mrb[0].mxu0
    %2303 = vmatprep.mubr.f32.mxu0 0.0
    %2304 = vmatmul.mubr.f32.gmra.mrb[0].mxu0 %v2094
    %v2305 = vpop.f32.mrb[0].mxu0
    %v2306 = vadd.f32 0.0, %v2305
    %v2307 = vpop.f32.mrb[0].mxu0
    %2308 = vmatprep.mubr.f32.mxu0 0.0
    %2309 = vmatmul.mubr.f32.gmra.mrb[0].mxu0 %v2097
    %v2310 = vpop.f32.mrb[0].mxu0
    %v2311 = vadd.f32 0.0, %v2310
    %v2312 = vpop.f32.mrb[0].mxu0
    %2313 = vdwg.mxu0
    %2314 = vmatprep.subr.mxu0 0.0
    %2315 = vmatpush1.msra.mxu0 %v2276
    %2316 = vmatprep.subr.mxu0 0.0
    %2317 = vmatpush1.msra.mxu0 %v2281
    %2318 = vmatprep.subr.mxu0 0.0
    %2319 = vmatpush1.msra.mxu0 %v2286
    %2320 = vmatprep.subr.mxu0 0.0
    %2321 = vmatpush1.msra.mxu0 %v2291
    %2322 = vmatprep.subr.mxu0 0.0
    %2323 = vmatpush1.msra.mxu0 %v2296
    %2324 = vmatprep.subr.mxu0 0.0
    %2325 = vmatpush1.msra.mxu0 %v2301
    %2326 = vmatprep.subr.mxu0 0.0
    %2327 = vmatpush1.msra.mxu0 %v2306
    %2328 = vmatprep.subr.mxu0 0.0
    %2329 = vmatpush1.msra.mxu0 %v2311
    %2330 = vmatprep.subr.mxu0 0.0
    %2331 = vmatpush1.msra.mxu0 0.0
    %2332 = vmatprep.subr.mxu0 0.0
    %2333 = vmatpush1.msra.mxu0 0.0
    %2334 = vmatprep.subr.mxu0 0.0
    %2335 = vmatpush1.msra.mxu0 0.0
    %2336 = vmatprep.subr.mxu0 0.0
    %2337 = vmatpush1.msra.mxu0 0.0
    %2338 = vmatprep.subr.mxu0 0.0
    %2339 = vmatpush1.msra.mxu0 0.0
    %2340 = vmatprep.subr.mxu0 0.0
    %2341 = vmatpush1.msra.mxu0 0.0
    %2342 = vmatprep.subr.mxu0 0.0
    %2343 = vmatpush1.msra.mxu0 0.0
    %2344 = vmatprep.subr.mxu0 0.0
    %2345 = vmatpush1.msra.mxu0 0.0
    %2346 = vmatprep.subr.mxu0 0.0
    %2347 = vmatpush1.msra.mxu0 0.0
    %2348 = vmatprep.subr.mxu0 0.0
    %2349 = vmatpush1.msra.mxu0 0.0
    %2350 = vmatprep.subr.mxu0 0.0
    %2351 = vmatpush1.msra.mxu0 0.0
    %2352 = vmatprep.subr.mxu0 0.0
    %2353 = vmatpush1.msra.mxu0 0.0
    %2354 = vmatprep.subr.mxu0 0.0
    %2355 = vmatpush1.msra.mxu0 0.0
    %2356 = vmatprep.subr.mxu0 0.0
    %2357 = vmatpush1.msra.mxu0 0.0
    %2358 = vmatprep.subr.mxu0 0.0
    %2359 = vmatpush1.msra.mxu0 0.0
    %2360 = vmatprep.subr.mxu0 0.0
    %2361 = vmatpush1.msra.mxu0 0.0
    %2362 = vmatprep.subr.mxu0 0.0
    %2363 = vmatpush1.msra.mxu0 0.0
    %2364 = vmatprep.subr.mxu0 0.0
    %2365 = vmatpush1.msra.mxu0 0.0
    %2366 = vmatprep.subr.mxu0 0.0
    %2367 = vmatpush1.msra.mxu0 0.0
    %2368 = vmatprep.subr.mxu0 0.0
    %2369 = vmatpush1.msra.mxu0 0.0
    %2370 = vmatprep.subr.mxu0 0.0
    %2371 = vmatpush1.msra.mxu0 0.0
    %2372 = vmatprep.subr.mxu0 0.0
    %2373 = vmatpush1.msra.mxu0 0.0
    %2374 = vmatprep.subr.mxu0 0.0
    %2375 = vmatpush1.msra.mxu0 0.0
    %2376 = vmatprep.subr.mxu0 0.0
    %2377 = vmatpush1.msra.mxu0 0.0
    %2378 = vmatprep.mubr.f32.mxu0 0.0
    %2379 = vmatmul.mubr.f32.gmra.mrb[0].mxu0 %v1647
    %v2380 = vpop.f32.mrb[0].mxu0
    %v2381 = vadd.f32 0.0, %v2380
    %v2382 = vpop.f32.mrb[0].mxu0
    %2383 = vmatprep.mubr.f32.mxu0 0.0
    %2384 = vmatmul.mubr.f32.gmra.mrb[0].mxu0 %v1650
    %v2385 = vpop.f32.mrb[0].mxu0
    %v2386 = vadd.f32 0.0, %v2385
    %v2387 = vpop.f32.mrb[0].mxu0
    %2388 = vmatprep.mubr.f32.mxu0 0.0
    %2389 = vmatmul.mubr.f32.gmra.mrb[0].mxu0 %v1653
    %v2390 = vpop.f32.mrb[0].mxu0
    %v2391 = vadd.f32 0.0, %v2390
    %v2392 = vpop.f32.mrb[0].mxu0
    %2393 = vmatprep.mubr.f32.mxu0 0.0
    %2394 = vmatmul.mubr.f32.gmra.mrb[0].mxu0 %v1656
    %v2395 = vpop.f32.mrb[0].mxu0
    %v2396 = vadd.f32 0.0, %v2395
    %v2397 = vpop.f32.mrb[0].mxu0
    %2398 = vmatprep.mubr.f32.mxu0 0.0
    %2399 = vmatmul.mubr.f32.gmra.mrb[0].mxu0 %v1659
    %v2400 = vpop.f32.mrb[0].mxu0
    %v2401 = vadd.f32 0.0, %v2400
    %v2402 = vpop.f32.mrb[0].mxu0
    %2403 = vmatprep.mubr.f32.mxu0 0.0
    %2404 = vmatmul.mubr.f32.gmra.mrb[0].mxu0 %v1662
    %v2405 = vpop.f32.mrb[0].mxu0
    %v2406 = vadd.f32 0.0, %v2405
    %v2407 = vpop.f32.mrb[0].mxu0
    %2408 = vmatprep.mubr.f32.mxu0 0.0
    %2409 = vmatmul.mubr.f32.gmra.mrb[0].mxu0 %v1665
    %v2410 = vpop.f32.mrb[0].mxu0
    %v2411 = vadd.f32 0.0, %v2410
    %v2412 = vpop.f32.mrb[0].mxu0
    %2413 = vmatprep.mubr.f32.mxu0 0.0
    %2414 = vmatmul.mubr.f32.gmra.mrb[0].mxu0 %v1668
    %v2415 = vpop.f32.mrb[0].mxu0
    %v2416 = vadd.f32 0.0, %v2415
    %v2417 = vpop.f32.mrb[0].mxu0
    %2418 = vdwg.mxu0
    %2419 = vmatprep.subr.mxu0 0.0
    %2420 = vmatpush1.msra.mxu0 %v2166
    %2421 = vmatprep.subr.mxu0 0.0
    %2422 = vmatpush1.msra.mxu0 %v2171
    %2423 = vmatprep.subr.mxu0 0.0
    %2424 = vmatpush1.msra.mxu0 %v2176
    %2425 = vmatprep.subr.mxu0 0.0
    %2426 = vmatpush1.msra.mxu0 %v2181
    %2427 = vmatprep.subr.mxu0 0.0
    %2428 = vmatpush1.msra.mxu0 %v2186
    %2429 = vmatprep.subr.mxu0 0.0
    %2430 = vmatpush1.msra.mxu0 %v2191
    %2431 = vmatprep.subr.mxu0 0.0
    %2432 = vmatpush1.msra.mxu0 %v2196
    %2433 = vmatprep.subr.mxu0 0.0
    %2434 = vmatpush1.msra.mxu0 %v2201
    %2435 = vmatprep.subr.mxu0 0.0
    %2436 = vmatpush1.msra.mxu0 0.0
    %2437 = vmatprep.subr.mxu0 0.0
    %2438 = vmatpush1.msra.mxu0 0.0
    %2439 = vmatprep.subr.mxu0 0.0
    %2440 = vmatpush1.msra.mxu0 0.0
    %2441 = vmatprep.subr.mxu0 0.0
    %2442 = vmatpush1.msra.mxu0 0.0
    %2443 = vmatprep.subr.mxu0 0.0
    %2444 = vmatpush1.msra.mxu0 0.0
    %2445 = vmatprep.subr.mxu0 0.0
    %2446 = vmatpush1.msra.mxu0 0.0
    %2447 = vmatprep.subr.mxu0 0.0
    %2448 = vmatpush1.msra.mxu0 0.0
    %2449 = vmatprep.subr.mxu0 0.0
    %2450 = vmatpush1.msra.mxu0 0.0
    %2451 = vmatprep.subr.mxu0 0.0
    %2452 = vmatpush1.msra.mxu0 0.0
    %2453 = vmatprep.subr.mxu0 0.0
    %2454 = vmatpush1.msra.mxu0 0.0
    %2455 = vmatprep.subr.mxu0 0.0
    %2456 = vmatpush1.msra.mxu0 0.0
    %2457 = vmatprep.subr.mxu0 0.0
    %2458 = vmatpush1.msra.mxu0 0.0
    %2459 = vmatprep.subr.mxu0 0.0
    %2460 = vmatpush1.msra.mxu0 0.0
    %2461 = vmatprep.subr.mxu0 0.0
    %2462 = vmatpush1.msra.mxu0 0.0
    %2463 = vmatprep.subr.mxu0 0.0
    %2464 = vmatpush1.msra.mxu0 0.0
    %2465 = vmatprep.subr.mxu0 0.0
    %2466 = vmatpush1.msra.mxu0 0.0
    %2467 = vmatprep.subr.mxu0 0.0
    %2468 = vmatpush1.msra.mxu0 0.0
    %2469 = vmatprep.subr.mxu0 0.0
    %2470 = vmatpush1.msra.mxu0 0.0
    %2471 = vmatprep.subr.mxu0 0.0
    %2472 = vmatpush1.msra.mxu0 0.0
    %2473 = vmatprep.subr.mxu0 0.0
    %2474 = vmatpush1.msra.mxu0 0.0
    %2475 = vmatprep.subr.mxu0 0.0
    %2476 = vmatpush1.msra.mxu0 0.0
    %2477 = vmatprep.subr.mxu0 0.0
    %2478 = vmatpush1.msra.mxu0 0.0
    %2479 = vmatprep.subr.mxu0 0.0
    %2480 = vmatpush1.msra.mxu0 0.0
    %2481 = vmatprep.subr.mxu0 0.0
    %2482 = vmatpush1.msra.mxu0 0.0
    %2483 = vmatprep.mubr.f32.mxu0 0.0
    %2484 = vmatmul.mubr.f32.gmra.mrb[0].mxu0 %v1776
    %v2485 = vpop.f32.mrb[0].mxu0
    %v2486 = vadd.f32 %v2381, %v2485
    %v2487 = vpop.f32.mrb[0].mxu0
    %2488 = vmatprep.mubr.f32.mxu0 0.0
    %2489 = vmatmul.mubr.f32.gmra.mrb[0].mxu0 %v1779
    %v2490 = vpop.f32.mrb[0].mxu0
    %v2491 = vadd.f32 %v2386, %v2490
    %v2492 = vpop.f32.mrb[0].mxu0
    %2493 = vmatprep.mubr.f32.mxu0 0.0
    %2494 = vmatmul.mubr.f32.gmra.mrb[0].mxu0 %v1782
    %v2495 = vpop.f32.mrb[0].mxu0
    %v2496 = vadd.f32 %v2391, %v2495
    %v2497 = vpop.f32.mrb[0].mxu0
    %2498 = vmatprep.mubr.f32.mxu0 0.0
    %2499 = vmatmul.mubr.f32.gmra.mrb[0].mxu0 %v1785
    %v2500 = vpop.f32.mrb[0].mxu0
    %v2501 = vadd.f32 %v2396, %v2500
    %v2502 = vpop.f32.mrb[0].mxu0
    %2503 = vmatprep.mubr.f32.mxu0 0.0
    %2504 = vmatmul.mubr.f32.gmra.mrb[0].mxu0 %v1788
    %v2505 = vpop.f32.mrb[0].mxu0
    %v2506 = vadd.f32 %v2401, %v2505
    %v2507 = vpop.f32.mrb[0].mxu0
    %2508 = vmatprep.mubr.f32.mxu0 0.0
    %2509 = vmatmul.mubr.f32.gmra.mrb[0].mxu0 %v1791
    %v2510 = vpop.f32.mrb[0].mxu0
    %v2511 = vadd.f32 %v2406, %v2510
    %v2512 = vpop.f32.mrb[0].mxu0
    %2513 = vmatprep.mubr.f32.mxu0 0.0
    %2514 = vmatmul.mubr.f32.gmra.mrb[0].mxu0 %v1794
    %v2515 = vpop.f32.mrb[0].mxu0
    %v2516 = vadd.f32 %v2411, %v2515
    %v2517 = vpop.f32.mrb[0].mxu0
    %2518 = vmatprep.mubr.f32.mxu0 0.0
    %2519 = vmatmul.mubr.f32.gmra.mrb[0].mxu0 %v1797
    %v2520 = vpop.f32.mrb[0].mxu0
    %v2521 = vadd.f32 %v2416, %v2520
    %v2522 = vpop.f32.mrb[0].mxu0
    %2523 = vdwg.mxu0
    %s2524 = scalar_lea.vmem %s10, 1
    %v2525 = vld [vmem:[%s2524] sm:$0x1]
    %v2527 = vlaneseq
    %v2528 = vshrl.u32 %v2527, 7
    %v2529 = vsub.s32 0, %v2528
    %v2530 = vrot.slane %v2525, %v2529
    %v2532 = vmul.f32 %v1908, %v2530
    %v2533 = vmul.f32 %v1913, %v2530
    %v2534 = vmul.f32 %v1918, %v2530
    %v2535 = vmul.f32 %v1923, %v2530
    %v2536 = vmul.f32 %v1928, %v2530
    %v2537 = vmul.f32 %v1933, %v2530
    %v2538 = vmul.f32 %v1938, %v2530
    %v2539 = vmul.f32 %v1943, %v2530
    %v2540 = vadd.f32 %v2486, %v2532
    %v2541 = vadd.f32 %v2491, %v2533
    %v2542 = vadd.f32 %v2496, %v2534
    %v2543 = vadd.f32 %v2501, %v2535
    %v2544 = vadd.f32 %v2506, %v2536
    %v2545 = vadd.f32 %v2511, %v2537
    %v2546 = vadd.f32 %v2516, %v2538
    %v2547 = vadd.f32 %v2521, %v2539
    %s2548 = scalar_lea.vmem %s12, 1
    %v2549 = vld [vmem:[%s2548] sm:$0x1]
    %v2551 = vlaneseq
    %v2552 = vshrl.u32 %v2551, 7
    %v2553 = vsub.s32 0, %v2552
    %v2554 = vrot.slane %v2549, %v2553
    %v2556 = vmul.f32 %v1971, %v2554
    %v2557 = vmul.f32 %v1976, %v2554
    %v2558 = vmul.f32 %v1981, %v2554
    %v2559 = vmul.f32 %v1986, %v2554
    %v2560 = vmul.f32 %v1991, %v2554
    %v2561 = vmul.f32 %v1996, %v2554
    %v2562 = vmul.f32 %v2001, %v2554
    %v2563 = vmul.f32 %v2006, %v2554
    %v2564 = vadd.f32 %v2540, %v2556
    %v2565 = vadd.f32 %v2541, %v2557
    %v2566 = vadd.f32 %v2542, %v2558
    %v2567 = vadd.f32 %v2543, %v2559
    %v2568 = vadd.f32 %v2544, %v2560
    %v2569 = vadd.f32 %v2545, %v2561
    %v2570 = vadd.f32 %v2546, %v2562
    %v2571 = vadd.f32 %v2547, %v2563
    %vm2572 = vcmp.gt.f32.partialorder %v2564, 0.0
    %vm2573 = vcmp.gt.f32.partialorder %v2565, 0.0
    %vm2574 = vcmp.gt.f32.partialorder %v2566, 0.0
    %vm2575 = vcmp.gt.f32.partialorder %v2567, 0.0
    %vm2576 = vcmp.gt.f32.partialorder %v2568, 0.0
    %vm2577 = vcmp.gt.f32.partialorder %v2569, 0.0
    %vm2578 = vcmp.gt.f32.partialorder %v2570, 0.0
    %vm2579 = vcmp.gt.f32.partialorder %v2571, 0.0
    %v2580 = vmul.f32 %v2564, 0.01
    %v2581 = vmul.f32 %v2565, 0.01
    %v2582 = vmul.f32 %v2566, 0.01
    %v2583 = vmul.f32 %v2567, 0.01
    %v2584 = vmul.f32 %v2568, 0.01
    %v2585 = vmul.f32 %v2569, 0.01
    %v2586 = vmul.f32 %v2570, 0.01
    %v2587 = vmul.f32 %v2571, 0.01
    %v2588 = vsel %vm2572, %v2564, %v2580
    %v2589 = vsel %vm2573, %v2565, %v2581
    %v2590 = vsel %vm2574, %v2566, %v2582
    %v2591 = vsel %vm2575, %v2567, %v2583
    %v2592 = vsel %vm2576, %v2568, %v2584
    %v2593 = vsel %vm2577, %v2569, %v2585
    %v2594 = vsel %vm2578, %v2570, %v2586
    %v2595 = vsel %vm2579, %v2571, %v2587
    %2596 = vst.msk [vmem:[#allocation2] sm:$0xff] %vm237, %v2588
    %2597 = vst.msk [vmem:[#allocation2 + $0x8] sm:$0xff] %vm237, %v2589
    %2598 = vst.msk [vmem:[#allocation2 + $0x10] sm:$0xff] %vm237, %v2590
    %2599 = vst.msk [vmem:[#allocation2 + $0x18] sm:$0xff] %vm237, %v2591
    %2600 = vst.msk [vmem:[#allocation2 + $0x20] sm:$0xff] %vm237, %v2592
    %2601 = vst.msk [vmem:[#allocation2 + $0x28] sm:$0xff] %vm237, %v2593
    %2602 = vst.msk [vmem:[#allocation2 + $0x30] sm:$0xff] %vm237, %v2594
    %2603 = vst.msk [vmem:[#allocation2 + $0x38] sm:$0xff] %vm237, %v2595
    %v2604 = vld [vmem:[#allocation2] sm:$0xff]
    %v2605 = vld [vmem:[#allocation2 + $0x8] sm:$0xff]
    %v2606 = vld [vmem:[#allocation2 + $0x10] sm:$0xff]
    %v2607 = vld [vmem:[#allocation2 + $0x18] sm:$0xff]
    %v2608 = vld [vmem:[#allocation2 + $0x20] sm:$0xff]
    %v2609 = vld [vmem:[#allocation2 + $0x28] sm:$0xff]
    %v2610 = vld [vmem:[#allocation2 + $0x30] sm:$0xff]
    %v2611 = vld [vmem:[#allocation2 + $0x38] sm:$0xff]
    %v2612 = vld [vmem:[%s13] sm:$0xff]
    %v2613 = vld [vmem:[%s13 + $0x8] sm:$0xff]
    %v2614 = vld [vmem:[%s13 + $0x10] sm:$0xff]
    %v2615 = vld [vmem:[%s13 + $0x18] sm:$0xff]
    %v2617 = vsel %vm237, %v2604, 0
    %v2620 = vsel %vm237, %v2605, 0
    %v2623 = vsel %vm237, %v2606, 0
    %v2626 = vsel %vm237, %v2607, 0
    %v2629 = vsel %vm237, %v2608, 0
    %v2632 = vsel %vm237, %v2609, 0
    %v2635 = vsel %vm237, %v2610, 0
    %v2638 = vsel %vm237, %v2611, 0
    %2640 = vmatprep.subr.mxu0 0.0
    %2641 = vmatpush1.msra.mxu0 %v2612
    %2642 = vmatprep.subr.mxu0 0.0
    %2643 = vmatpush1.msra.mxu0 %v2613
    %2644 = vmatprep.subr.mxu0 0.0
    %2645 = vmatpush1.msra.mxu0 %v2614
    %2646 = vmatprep.subr.mxu0 0.0
    %2647 = vmatpush1.msra.mxu0 %v2615
    %2648 = vmatprep.subr.mxu0 0.0
    %2649 = vmatpush1.msra.mxu0 0.0
    %2650 = vmatprep.subr.mxu0 0.0
    %2651 = vmatpush1.msra.mxu0 0.0
    %2652 = vmatprep.subr.mxu0 0.0
    %2653 = vmatpush1.msra.mxu0 0.0
    %2654 = vmatprep.subr.mxu0 0.0
    %2655 = vmatpush1.msra.mxu0 0.0
    %2656 = vmatprep.subr.mxu0 0.0
    %2657 = vmatpush1.msra.mxu0 0.0
    %2658 = vmatprep.subr.mxu0 0.0
    %2659 = vmatpush1.msra.mxu0 0.0
    %2660 = vmatprep.subr.mxu0 0.0
    %2661 = vmatpush1.msra.mxu0 0.0
    %2662 = vmatprep.subr.mxu0 0.0
    %2663 = vmatpush1.msra.mxu0 0.0
    %2664 = vmatprep.subr.mxu0 0.0
    %2665 = vmatpush1.msra.mxu0 0.0
    %2666 = vmatprep.subr.mxu0 0.0
    %2667 = vmatpush1.msra.mxu0 0.0
    %2668 = vmatprep.subr.mxu0 0.0
    %2669 = vmatpush1.msra.mxu0 0.0
    %2670 = vmatprep.subr.mxu0 0.0
    %2671 = vmatpush1.msra.mxu0 0.0
    %2672 = vmatprep.subr.mxu0 0.0
    %2673 = vmatpush1.msra.mxu0 0.0
    %2674 = vmatprep.subr.mxu0 0.0
    %2675 = vmatpush1.msra.mxu0 0.0
    %2676 = vmatprep.subr.mxu0 0.0
    %2677 = vmatpush1.msra.mxu0 0.0
    %2678 = vmatprep.subr.mxu0 0.0
    %2679 = vmatpush1.msra.mxu0 0.0
    %2680 = vmatprep.subr.mxu0 0.0
    %2681 = vmatpush1.msra.mxu0 0.0
    %2682 = vmatprep.subr.mxu0 0.0
    %2683 = vmatpush1.msra.mxu0 0.0
    %2684 = vmatprep.subr.mxu0 0.0
    %2685 = vmatpush1.msra.mxu0 0.0
    %2686 = vmatprep.subr.mxu0 0.0
    %2687 = vmatpush1.msra.mxu0 0.0
    %2688 = vmatprep.subr.mxu0 0.0
    %2689 = vmatpush1.msra.mxu0 0.0
    %2690 = vmatprep.subr.mxu0 0.0
    %2691 = vmatpush1.msra.mxu0 0.0
    %2692 = vmatprep.subr.mxu0 0.0
    %2693 = vmatpush1.msra.mxu0 0.0
    %2694 = vmatprep.subr.mxu0 0.0
    %2695 = vmatpush1.msra.mxu0 0.0
    %2696 = vmatprep.subr.mxu0 0.0
    %2697 = vmatpush1.msra.mxu0 0.0
    %2698 = vmatprep.subr.mxu0 0.0
    %2699 = vmatpush1.msra.mxu0 0.0
    %2700 = vmatprep.subr.mxu0 0.0
    %2701 = vmatpush1.msra.mxu0 0.0
    %2702 = vmatprep.subr.mxu0 0.0
    %2703 = vmatpush1.msra.mxu0 0.0
    %2704 = vmatprep.mubr.f32.mxu0 0.0
    %2705 = vmatmul.mubr.f32.gmra.mrb[0].mxu0 %v2617
    %v2706 = vpop.f32.mrb[0].mxu0
    %v2707 = vadd.f32 0.0, %v2706
    %v2708 = vpop.f32.mrb[0].mxu0
    %2709 = vmatprep.mubr.f32.mxu0 0.0
    %2710 = vmatmul.mubr.f32.gmra.mrb[0].mxu0 %v2620
    %v2711 = vpop.f32.mrb[0].mxu0
    %v2712 = vadd.f32 0.0, %v2711
    %v2713 = vpop.f32.mrb[0].mxu0
    %2714 = vmatprep.mubr.f32.mxu0 0.0
    %2715 = vmatmul.mubr.f32.gmra.mrb[0].mxu0 %v2623
    %v2716 = vpop.f32.mrb[0].mxu0
    %v2717 = vadd.f32 0.0, %v2716
    %v2718 = vpop.f32.mrb[0].mxu0
    %2719 = vmatprep.mubr.f32.mxu0 0.0
    %2720 = vmatmul.mubr.f32.gmra.mrb[0].mxu0 %v2626
    %v2721 = vpop.f32.mrb[0].mxu0
    %v2722 = vadd.f32 0.0, %v2721
    %v2723 = vpop.f32.mrb[0].mxu0
    %2724 = vmatprep.mubr.f32.mxu0 0.0
    %2725 = vmatmul.mubr.f32.gmra.mrb[0].mxu0 %v2629
    %v2726 = vpop.f32.mrb[0].mxu0
    %v2727 = vadd.f32 0.0, %v2726
    %v2728 = vpop.f32.mrb[0].mxu0
    %2729 = vmatprep.mubr.f32.mxu0 0.0
    %2730 = vmatmul.mubr.f32.gmra.mrb[0].mxu0 %v2632
    %v2731 = vpop.f32.mrb[0].mxu0
    %v2732 = vadd.f32 0.0, %v2731
    %v2733 = vpop.f32.mrb[0].mxu0
    %2734 = vmatprep.mubr.f32.mxu0 0.0
    %2735 = vmatmul.mubr.f32.gmra.mrb[0].mxu0 %v2635
    %v2736 = vpop.f32.mrb[0].mxu0
    %v2737 = vadd.f32 0.0, %v2736
    %v2738 = vpop.f32.mrb[0].mxu0
    %2739 = vmatprep.mubr.f32.mxu0 0.0
    %2740 = vmatmul.mubr.f32.gmra.mrb[0].mxu0 %v2638
    %v2741 = vpop.f32.mrb[0].mxu0
    %v2742 = vadd.f32 0.0, %v2741
    %v2743 = vpop.f32.mrb[0].mxu0
    %2744 = vdwg.mxu0
    %v2745 = vld [vmem:[%s15] sm:$0xff]
    %v2746 = vld [vmem:[%s15 + $0x8] sm:$0xff]
    %v2747 = vld [vmem:[%s15 + $0x10] sm:$0xff]
    %v2748 = vld [vmem:[%s15 + $0x18] sm:$0xff]
    %2749 = vmatprep.subr.mxu0 0.0
    %2750 = vmatpush1.msra.mxu0 %v2745
    %2751 = vmatprep.subr.mxu0 0.0
    %2752 = vmatpush1.msra.mxu0 %v2746
    %2753 = vmatprep.subr.mxu0 0.0
    %2754 = vmatpush1.msra.mxu0 %v2747
    %2755 = vmatprep.subr.mxu0 0.0
    %2756 = vmatpush1.msra.mxu0 %v2748
    %2757 = vmatprep.subr.mxu0 0.0
    %2758 = vmatpush1.msra.mxu0 0.0
    %2759 = vmatprep.subr.mxu0 0.0
    %2760 = vmatpush1.msra.mxu0 0.0
    %2761 = vmatprep.subr.mxu0 0.0
    %2762 = vmatpush1.msra.mxu0 0.0
    %2763 = vmatprep.subr.mxu0 0.0
    %2764 = vmatpush1.msra.mxu0 0.0
    %2765 = vmatprep.subr.mxu0 0.0
    %2766 = vmatpush1.msra.mxu0 0.0
    %2767 = vmatprep.subr.mxu0 0.0
    %2768 = vmatpush1.msra.mxu0 0.0
    %2769 = vmatprep.subr.mxu0 0.0
    %2770 = vmatpush1.msra.mxu0 0.0
    %2771 = vmatprep.subr.mxu0 0.0
    %2772 = vmatpush1.msra.mxu0 0.0
    %2773 = vmatprep.subr.mxu0 0.0
    %2774 = vmatpush1.msra.mxu0 0.0
    %2775 = vmatprep.subr.mxu0 0.0
    %2776 = vmatpush1.msra.mxu0 0.0
    %2777 = vmatprep.subr.mxu0 0.0
    %2778 = vmatpush1.msra.mxu0 0.0
    %2779 = vmatprep.subr.mxu0 0.0
    %2780 = vmatpush1.msra.mxu0 0.0
    %2781 = vmatprep.subr.mxu0 0.0
    %2782 = vmatpush1.msra.mxu0 0.0
    %2783 = vmatprep.subr.mxu0 0.0
    %2784 = vmatpush1.msra.mxu0 0.0
    %2785 = vmatprep.subr.mxu0 0.0
    %2786 = vmatpush1.msra.mxu0 0.0
    %2787 = vmatprep.subr.mxu0 0.0
    %2788 = vmatpush1.msra.mxu0 0.0
    %2789 = vmatprep.subr.mxu0 0.0
    %2790 = vmatpush1.msra.mxu0 0.0
    %2791 = vmatprep.subr.mxu0 0.0
    %2792 = vmatpush1.msra.mxu0 0.0
    %2793 = vmatprep.subr.mxu0 0.0
    %2794 = vmatpush1.msra.mxu0 0.0
    %2795 = vmatprep.subr.mxu0 0.0
    %2796 = vmatpush1.msra.mxu0 0.0
    %2797 = vmatprep.subr.mxu0 0.0
    %2798 = vmatpush1.msra.mxu0 0.0
    %2799 = vmatprep.subr.mxu0 0.0
    %2800 = vmatpush1.msra.mxu0 0.0
    %2801 = vmatprep.subr.mxu0 0.0
    %2802 = vmatpush1.msra.mxu0 0.0
    %2803 = vmatprep.subr.mxu0 0.0
    %2804 = vmatpush1.msra.mxu0 0.0
    %2805 = vmatprep.subr.mxu0 0.0
    %2806 = vmatpush1.msra.mxu0 0.0
    %2807 = vmatprep.subr.mxu0 0.0
    %2808 = vmatpush1.msra.mxu0 0.0
    %2809 = vmatprep.subr.mxu0 0.0
    %2810 = vmatpush1.msra.mxu0 0.0
    %2811 = vmatprep.subr.mxu0 0.0
    %2812 = vmatpush1.msra.mxu0 0.0
    %2813 = vmatprep.mubr.f32.mxu0 0.0
    %2814 = vmatmul.mubr.f32.gmra.mrb[0].mxu0 %v2617
    %v2815 = vpop.f32.mrb[0].mxu0
    %v2816 = vadd.f32 0.0, %v2815
    %v2817 = vpop.f32.mrb[0].mxu0
    %2818 = vmatprep.mubr.f32.mxu0 0.0
    %2819 = vmatmul.mubr.f32.gmra.mrb[0].mxu0 %v2620
    %v2820 = vpop.f32.mrb[0].mxu0
    %v2821 = vadd.f32 0.0, %v2820
    %v2822 = vpop.f32.mrb[0].mxu0
    %2823 = vmatprep.mubr.f32.mxu0 0.0
    %2824 = vmatmul.mubr.f32.gmra.mrb[0].mxu0 %v2623
    %v2825 = vpop.f32.mrb[0].mxu0
    %v2826 = vadd.f32 0.0, %v2825
    %v2827 = vpop.f32.mrb[0].mxu0
    %2828 = vmatprep.mubr.f32.mxu0 0.0
    %2829 = vmatmul.mubr.f32.gmra.mrb[0].mxu0 %v2626
    %v2830 = vpop.f32.mrb[0].mxu0
    %v2831 = vadd.f32 0.0, %v2830
    %v2832 = vpop.f32.mrb[0].mxu0
    %2833 = vmatprep.mubr.f32.mxu0 0.0
    %2834 = vmatmul.mubr.f32.gmra.mrb[0].mxu0 %v2629
    %v2835 = vpop.f32.mrb[0].mxu0
    %v2836 = vadd.f32 0.0, %v2835
    %v2837 = vpop.f32.mrb[0].mxu0
    %2838 = vmatprep.mubr.f32.mxu0 0.0
    %2839 = vmatmul.mubr.f32.gmra.mrb[0].mxu0 %v2632
    %v2840 = vpop.f32.mrb[0].mxu0
    %v2841 = vadd.f32 0.0, %v2840
    %v2842 = vpop.f32.mrb[0].mxu0
    %2843 = vmatprep.mubr.f32.mxu0 0.0
    %2844 = vmatmul.mubr.f32.gmra.mrb[0].mxu0 %v2635
    %v2845 = vpop.f32.mrb[0].mxu0
    %v2846 = vadd.f32 0.0, %v2845
    %v2847 = vpop.f32.mrb[0].mxu0
    %2848 = vmatprep.mubr.f32.mxu0 0.0
    %2849 = vmatmul.mubr.f32.gmra.mrb[0].mxu0 %v2638
    %v2850 = vpop.f32.mrb[0].mxu0
    %v2851 = vadd.f32 0.0, %v2850
    %v2852 = vpop.f32.mrb[0].mxu0
    %2853 = vdwg.mxu0
    %2854 = vmatprep.subr.mxu0 0.0
    %2855 = vmatpush1.msra.mxu0 %v2816
    %2856 = vmatprep.subr.mxu0 0.0
    %2857 = vmatpush1.msra.mxu0 %v2821
    %2858 = vmatprep.subr.mxu0 0.0
    %2859 = vmatpush1.msra.mxu0 %v2826
    %2860 = vmatprep.subr.mxu0 0.0
    %2861 = vmatpush1.msra.mxu0 %v2831
    %2862 = vmatprep.subr.mxu0 0.0
    %2863 = vmatpush1.msra.mxu0 %v2836
    %2864 = vmatprep.subr.mxu0 0.0
    %2865 = vmatpush1.msra.mxu0 %v2841
    %2866 = vmatprep.subr.mxu0 0.0
    %2867 = vmatpush1.msra.mxu0 %v2846
    %2868 = vmatprep.subr.mxu0 0.0
    %2869 = vmatpush1.msra.mxu0 %v2851
    %2870 = vmatprep.subr.mxu0 0.0
    %2871 = vmatpush1.msra.mxu0 0.0
    %2872 = vmatprep.subr.mxu0 0.0
    %2873 = vmatpush1.msra.mxu0 0.0
    %2874 = vmatprep.subr.mxu0 0.0
    %2875 = vmatpush1.msra.mxu0 0.0
    %2876 = vmatprep.subr.mxu0 0.0
    %2877 = vmatpush1.msra.mxu0 0.0
    %2878 = vmatprep.subr.mxu0 0.0
    %2879 = vmatpush1.msra.mxu0 0.0
    %2880 = vmatprep.subr.mxu0 0.0
    %2881 = vmatpush1.msra.mxu0 0.0
    %2882 = vmatprep.subr.mxu0 0.0
    %2883 = vmatpush1.msra.mxu0 0.0
    %2884 = vmatprep.subr.mxu0 0.0
    %2885 = vmatpush1.msra.mxu0 0.0
    %2886 = vmatprep.subr.mxu0 0.0
    %2887 = vmatpush1.msra.mxu0 0.0
    %2888 = vmatprep.subr.mxu0 0.0
    %2889 = vmatpush1.msra.mxu0 0.0
    %2890 = vmatprep.subr.mxu0 0.0
    %2891 = vmatpush1.msra.mxu0 0.0
    %2892 = vmatprep.subr.mxu0 0.0
    %2893 = vmatpush1.msra.mxu0 0.0
    %2894 = vmatprep.subr.mxu0 0.0
    %2895 = vmatpush1.msra.mxu0 0.0
    %2896 = vmatprep.subr.mxu0 0.0
    %2897 = vmatpush1.msra.mxu0 0.0
    %2898 = vmatprep.subr.mxu0 0.0
    %2899 = vmatpush1.msra.mxu0 0.0
    %2900 = vmatprep.subr.mxu0 0.0
    %2901 = vmatpush1.msra.mxu0 0.0
    %2902 = vmatprep.subr.mxu0 0.0
    %2903 = vmatpush1.msra.mxu0 0.0
    %2904 = vmatprep.subr.mxu0 0.0
    %2905 = vmatpush1.msra.mxu0 0.0
    %2906 = vmatprep.subr.mxu0 0.0
    %2907 = vmatpush1.msra.mxu0 0.0
    %2908 = vmatprep.subr.mxu0 0.0
    %2909 = vmatpush1.msra.mxu0 0.0
    %2910 = vmatprep.subr.mxu0 0.0
    %2911 = vmatpush1.msra.mxu0 0.0
    %2912 = vmatprep.subr.mxu0 0.0
    %2913 = vmatpush1.msra.mxu0 0.0
    %2914 = vmatprep.subr.mxu0 0.0
    %2915 = vmatpush1.msra.mxu0 0.0
    %2916 = vmatprep.subr.mxu0 0.0
    %2917 = vmatpush1.msra.mxu0 0.0
    %2918 = vmatprep.mubr.f32.mxu0 0.0
    %2919 = vmatmul.mubr.f32.gmra.mrb[0].mxu0 %v1647
    %v2920 = vpop.f32.mrb[0].mxu0
    %v2921 = vpop.f32.mrb[0].mxu0
    %2922 = vmatprep.mubr.f32.mxu0 0.0
    %2923 = vmatmul.mubr.f32.gmra.mrb[0].mxu0 %v1650
    %v2924 = vpop.f32.mrb[0].mxu0
    %v2925 = vpop.f32.mrb[0].mxu0
    %2926 = vmatprep.mubr.f32.mxu0 0.0
    %2927 = vmatmul.mubr.f32.gmra.mrb[0].mxu0 %v1653
    %v2928 = vpop.f32.mrb[0].mxu0
    %v2929 = vpop.f32.mrb[0].mxu0
    %2930 = vmatprep.mubr.f32.mxu0 0.0
    %2931 = vmatmul.mubr.f32.gmra.mrb[0].mxu0 %v1656
    %v2932 = vpop.f32.mrb[0].mxu0
    %v2933 = vpop.f32.mrb[0].mxu0
    %2934 = vmatprep.mubr.f32.mxu0 0.0
    %2935 = vmatmul.mubr.f32.gmra.mrb[0].mxu0 %v1659
    %v2936 = vpop.f32.mrb[0].mxu0
    %v2937 = vpop.f32.mrb[0].mxu0
    %2938 = vmatprep.mubr.f32.mxu0 0.0
    %2939 = vmatmul.mubr.f32.gmra.mrb[0].mxu0 %v1662
    %v2940 = vpop.f32.mrb[0].mxu0
    %v2941 = vpop.f32.mrb[0].mxu0
    %2942 = vmatprep.mubr.f32.mxu0 0.0
    %2943 = vmatmul.mubr.f32.gmra.mrb[0].mxu0 %v1665
    %v2944 = vpop.f32.mrb[0].mxu0
    %v2945 = vadd.f32 0.0, %v2944
    %v2946 = vpop.f32.mrb[0].mxu0
    %2947 = vmatprep.mubr.f32.mxu0 0.0
    %2948 = vmatmul.mubr.f32.gmra.mrb[0].mxu0 %v1668
    %v2949 = vpop.f32.mrb[0].mxu0
    %v2950 = vpop.f32.mrb[0].mxu0
    %2951 = vdwg.mxu0
    %2952 = vmatprep.subr.mxu0 0.0
    %2953 = vmatpush1.msra.mxu0 %v2707
    %2954 = vmatprep.subr.mxu0 0.0
    %2955 = vmatpush1.msra.mxu0 %v2712
    %2956 = vmatprep.subr.mxu0 0.0
    %2957 = vmatpush1.msra.mxu0 %v2717
    %2958 = vmatprep.subr.mxu0 0.0
    %2959 = vmatpush1.msra.mxu0 %v2722
    %2960 = vmatprep.subr.mxu0 0.0
    %2961 = vmatpush1.msra.mxu0 %v2727
    %2962 = vmatprep.subr.mxu0 0.0
    %2963 = vmatpush1.msra.mxu0 %v2732
    %2964 = vmatprep.subr.mxu0 0.0
    %2965 = vmatpush1.msra.mxu0 %v2737
    %2966 = vmatprep.subr.mxu0 0.0
    %2967 = vmatpush1.msra.mxu0 %v2742
    %2968 = vmatprep.subr.mxu0 0.0
    %2969 = vmatpush1.msra.mxu0 0.0
    %2970 = vmatprep.subr.mxu0 0.0
    %2971 = vmatpush1.msra.mxu0 0.0
    %2972 = vmatprep.subr.mxu0 0.0
    %2973 = vmatpush1.msra.mxu0 0.0
    %2974 = vmatprep.subr.mxu0 0.0
    %2975 = vmatpush1.msra.mxu0 0.0
    %2976 = vmatprep.subr.mxu0 0.0
    %2977 = vmatpush1.msra.mxu0 0.0
    %2978 = vmatprep.subr.mxu0 0.0
    %2979 = vmatpush1.msra.mxu0 0.0
    %2980 = vmatprep.subr.mxu0 0.0
    %2981 = vmatpush1.msra.mxu0 0.0
    %2982 = vmatprep.subr.mxu0 0.0
    %2983 = vmatpush1.msra.mxu0 0.0
    %2984 = vmatprep.subr.mxu0 0.0
    %2985 = vmatpush1.msra.mxu0 0.0
    %2986 = vmatprep.subr.mxu0 0.0
    %2987 = vmatpush1.msra.mxu0 0.0
    %2988 = vmatprep.subr.mxu0 0.0
    %2989 = vmatpush1.msra.mxu0 0.0
    %2990 = vmatprep.subr.mxu0 0.0
    %2991 = vmatpush1.msra.mxu0 0.0
    %2992 = vmatprep.subr.mxu0 0.0
    %2993 = vmatpush1.msra.mxu0 0.0
    %2994 = vmatprep.subr.mxu0 0.0
    %2995 = vmatpush1.msra.mxu0 0.0
    %2996 = vmatprep.subr.mxu0 0.0
    %2997 = vmatpush1.msra.mxu0 0.0
    %2998 = vmatprep.subr.mxu0 0.0
    %2999 = vmatpush1.msra.mxu0 0.0
    %3000 = vmatprep.subr.mxu0 0.0
    %3001 = vmatpush1.msra.mxu0 0.0
    %3002 = vmatprep.subr.mxu0 0.0
    %3003 = vmatpush1.msra.mxu0 0.0
    %3004 = vmatprep.subr.mxu0 0.0
    %3005 = vmatpush1.msra.mxu0 0.0
    %3006 = vmatprep.subr.mxu0 0.0
    %3007 = vmatpush1.msra.mxu0 0.0
    %3008 = vmatprep.subr.mxu0 0.0
    %3009 = vmatpush1.msra.mxu0 0.0
    %3010 = vmatprep.subr.mxu0 0.0
    %3011 = vmatpush1.msra.mxu0 0.0
    %3012 = vmatprep.subr.mxu0 0.0
    %3013 = vmatpush1.msra.mxu0 0.0
    %3014 = vmatprep.subr.mxu0 0.0
    %3015 = vmatpush1.msra.mxu0 0.0
    %3016 = vmatprep.mubr.f32.mxu0 0.0
    %3017 = vmatmul.mubr.f32.gmra.mrb[0].mxu0 %v1776
    %v3018 = vpop.f32.mrb[0].mxu0
    %v3019 = vpop.f32.mrb[0].mxu0
    %3020 = vmatprep.mubr.f32.mxu0 0.0
    %3021 = vmatmul.mubr.f32.gmra.mrb[0].mxu0 %v1779
    %v3022 = vpop.f32.mrb[0].mxu0
    %v3023 = vpop.f32.mrb[0].mxu0
    %3024 = vmatprep.mubr.f32.mxu0 0.0
    %3025 = vmatmul.mubr.f32.gmra.mrb[0].mxu0 %v1782
    %v3026 = vpop.f32.mrb[0].mxu0
    %v3027 = vpop.f32.mrb[0].mxu0
    %3028 = vmatprep.mubr.f32.mxu0 0.0
    %3029 = vmatmul.mubr.f32.gmra.mrb[0].mxu0 %v1785
    %v3030 = vpop.f32.mrb[0].mxu0
    %v3031 = vpop.f32.mrb[0].mxu0
    %3032 = vmatprep.mubr.f32.mxu0 0.0
    %3033 = vmatmul.mubr.f32.gmra.mrb[0].mxu0 %v1788
    %v3034 = vpop.f32.mrb[0].mxu0
    %v3035 = vpop.f32.mrb[0].mxu0
    %3036 = vmatprep.mubr.f32.mxu0 0.0
    %3037 = vmatmul.mubr.f32.gmra.mrb[0].mxu0 %v1791
    %v3038 = vpop.f32.mrb[0].mxu0
    %v3039 = vpop.f32.mrb[0].mxu0
    %3040 = vmatprep.mubr.f32.mxu0 0.0
    %3041 = vmatmul.mubr.f32.gmra.mrb[0].mxu0 %v1794
    %v3042 = vpop.f32.mrb[0].mxu0
    %v3043 = vadd.f32 %v2945, %v3042
    %v3044 = vpop.f32.mrb[0].mxu0
    %3045 = vmatprep.mubr.f32.mxu0 0.0
    %3046 = vmatmul.mubr.f32.gmra.mrb[0].mxu0 %v1797
    %v3047 = vpop.f32.mrb[0].mxu0
    %v3048 = vpop.f32.mrb[0].mxu0
    %3049 = vdwg.mxu0
    %v3050 = vld [vmem:[%s14] sm:$0x1]
    %v3052 = vlaneseq
    %v3053 = vshrl.u32 %v3052, 7
    %v3054 = vsub.s32 0, %v3053
    %v3055 = vrot.slane %v3050, %v3054
    %v3057 = vmul.f32 %v1938, %v3055
    %v3058 = vadd.f32 %v3043, %v3057
    %v3059 = vld [vmem:[%s16] sm:$0x1]
    %v3061 = vlaneseq
    %v3062 = vshrl.u32 %v3061, 7
    %v3063 = vsub.s32 0, %v3062
    %v3064 = vrot.slane %v3059, %v3063
    %v3066 = vmul.f32 %v2001, %v3064
    %v3067 = vadd.f32 %v3058, %v3066
    %vm3068 = vcmask 64512
    %3069 = vst.msk [vmem:[#allocation14] sm:$0xff] %vm3068, %v3067
    // Predicated region
    $region94: #{sage_forward_fused.1} parent=1 // pred_check
      _
    $region95: #{sage_forward_fused.1} parent=1 // pred_check_branch
      %3071 = sbr.rel (0) target = $region97
    $region96: #{sage_forward_fused.1} parent=1 // pred_region
      %s3073 = ssub.s32 128, 128
      %3074 = vsyncadd [#allocation5], %s3073
      %s3076 = sshll.u32 [#allocation14], 4
      %s3077 = int_to_ptr.vmem [resolvable:$true] %s3076
      %3079 = dma.vmem_to_hbm [thread:$0]  %s3077, 128, %s17, [#allocation5]
    $region97: #{sage_forward_fused.1} parent=1 // pred_fallthru
      _
    // Predicated region
    $region98: #{sage_forward_fused.1} parent=1 // pred_check
      _
    $region99: #{sage_forward_fused.1} parent=1 // pred_check_branch
      %3081 = sbr.rel (0) target = $region101
    $region100: #{sage_forward_fused.1} parent=1 // pred_region
      %3082 = dma.done [#allocation5], 128
    $region101: #{sage_forward_fused.1} parent=1 // pred_fallthru
      _
    %3083 = vsyncpa [#allocation4], 1
    %3084 = vsyncpa [#allocation7], 1
    %3085 = vsyncpa [#allocation10], 1
    %3086 = vsyncpa [#allocation13], 1
    %3087 = vsyncpa [#allocation5], 1

</llo_original>
